<compile_context>
chip_gen: v7x
topology: tpu7x:2x2x1
jax: 0.10.0
libtpu: 0.0.40
codegen_flags: <defaults>
</compile_context>

<pallas_src>
import jax
import jax.numpy as jnp
from jax.experimental import pallas as pl
from jax.experimental.pallas import tpu as pltpu

# ---------------- configuration (Seq2SeqAttrs / model_kwargs) ----------------
BATCH = 2
NUM_NODES = 8            # num_nodes
RNN_UNITS = 16           # rnn_units (hidden per node)
OUTPUT_DIM = 1           # output_dim
MAX_DIFFUSION_STEP = 2   # max_diffusion_step
NUM_RNN_LAYERS = 2       # num_rnn_layers
# TODO(synk): only the single-support 'random_walk' filter is modeled;
#             'dual_random_walk' would add a second support to the diffusion loop.
NUM_MATRICES = MAX_DIFFUSION_STEP + 1   # one support -> K*1 + 1 diffusion matrices


# --------------------------- fused decoder kernel ----------------------------
def make_fused_decoder_kernel(*, num_layers, num_units, output_dim, max_step, in_dims):
    U = num_units
    M = max_step + 1

    def kernel(*refs):
        n_in = 3 + 9 * num_layers + 2
        in_refs, out_refs = refs[:n_in], refs[n_in:]
        x_ref, h_ref, s_ref = in_refs[:3]
        layer_refs = [in_refs[3 + 9 * l: 3 + 9 * (l + 1)] for l in range(num_layers)]
        pw_ref, pb_ref = in_refs[-2:]
        out_ref, hnew_ref = out_refs

        S = s_ref[...]                                    # block-diag support (B*N, B*N)

        def cheb_stack(z):
            """[T_0(S) z, ..., T_K(S) z] via the shared DCRNN recursion."""
            zs = [z]
            if max_step >= 1:
                z0 = z
                z1 = jnp.dot(S, z, preferred_element_type=jnp.float32)
                zs.append(z1)
                for _ in range(2, max_step + 1):
                    z2 = 2.0 * jnp.dot(S, z1, preferred_element_type=jnp.float32) - z0
                    zs.append(z2)
                    z0, z1 = z1, z2
            return zs

        def cheb_apply(z, k):
            """T_k(S) @ z (used only on the already weight-mixed in_dim==1 path)."""
            if k == 0:
                return z
            t0 = z
            t1 = jnp.dot(S, z, preferred_element_type=jnp.float32)
            for _ in range(2, k + 1):
                t2 = 2.0 * jnp.dot(S, t1, preferred_element_type=jnp.float32) - t0
                t0, t1 = t1, t2
            return t1

        def x_contrib(x, xk_list, wx_ref, in_dim):
            # sum_k  T_k(S) x @ Wx_k      (input part of one gate's gconv pre-activation)
            if in_dim == 1:
                # (T_k(S) x) @ W == T_k(S)(x * W): feature-mix first (broadcast) so no
                # dot ever has a size-1 contraction/minor dim.
                acc = x * wx_ref[0]                       # (B*N,1)*(1,U) -> (B*N,U)
                for k in range(1, M):
                    acc = acc + cheb_apply(x * wx_ref[k], k)
                return acc
            acc = jnp.dot(xk_list[0], wx_ref[0], preferred_element_type=jnp.float32)
            for k in range(1, M):
                acc = acc + jnp.dot(xk_list[k], wx_ref[k],
                                    preferred_element_type=jnp.float32)
            return acc

        def h_contrib(hk_list, wh_ref):
            # sum_k  T_k(S) h @ Wh_k      (state part of one gate's gconv pre-activation)
            acc = jnp.dot(hk_list[0], wh_ref[0], preferred_element_type=jnp.float32)
            for k in range(1, M):
                acc = acc + jnp.dot(hk_list[k], wh_ref[k],
                                    preferred_element_type=jnp.float32)
            return acc

        x = x_ref[...]                                    # (B*N, in_dims[0])
        for l in range(num_layers):
            in_dim = in_dims[l]
            (wx_r, wx_u, wx_c, wh_r, wh_u, wh_c, b_r, b_u, b_c) = layer_refs[l]
            h = h_ref[l]                                  # (B*N, U)

            xk = None if in_dim == 1 else cheb_stack(x)   # shared by r, u and c gates
            hk = cheb_stack(h)                            # shared by r and u gates

            r = jax.nn.sigmoid(x_contrib(x, xk, wx_r, in_dim)
                               + h_contrib(hk, wh_r) + b_r[...])
            u = jax.nn.sigmoid(x_contrib(x, xk, wx_u, in_dim)
                               + h_contrib(hk, wh_u) + b_u[...])
            rhk = cheb_stack(r * h)
            c = jnp.tanh(x_contrib(x, xk, wx_c, in_dim)
                         + h_contrib(rhk, wh_c) + b_c[...])

            h_new = u * h + (1.0 - u) * c
            hnew_ref[l] = h_new
            x = h_new                                     # next layer's input

        # output projection (torch nn.Linear weight layout: (output_dim, U))
        pw = pw_ref[...]
        if output_dim == 1:
            y = jnp.sum(x * pw, axis=-1, keepdims=True)   # avoid size-1 minor-dim dot
        else:
            y = jax.lax.dot_general(x, pw, (((1,), (1,)), ((), ())),
                                    preferred_element_type=jnp.float32)
        out_ref[...] = y + pb_ref[...]

    return kernel


# ----------------------------- decoder forward -------------------------------
@jax.jit
def decoder_forward(inputs, hidden_state, prep):
    """inputs: (B, N*output_dim); hidden_state: (L, B, N*rnn_units)."""
    B = inputs.shape[0]
    BN = B * NUM_NODES
    L = NUM_RNN_LAYERS

    # contiguous (free) reshapes to the in-kernel (B*N, feat) row layout
    x = inputs.reshape(BN, OUTPUT_DIM)
    h = hidden_state.reshape(L, BN, RNN_UNITS)

    args = [x, h, prep["s_blk"]]
    for l in range(L):
        p = prep["layers"][l]
        args += [p["wx_r"], p["wx_u"], p["wx_c"],
                 p["wh_r"], p["wh_u"], p["wh_c"],
                 p["b_r"], p["b_u"], p["b_c"]]
    args += [prep["proj_w"], prep["proj_b"]]

    in_dims = tuple(OUTPUT_DIM if l == 0 else RNN_UNITS for l in range(L))
    kernel = make_fused_decoder_kernel(
        num_layers=L, num_units=RNN_UNITS, output_dim=OUTPUT_DIM,
        max_step=MAX_DIFFUSION_STEP, in_dims=in_dims)

    # Single launch, no grid: every operand lives whole in VMEM (total footprint ~50 KB).
    out, h_new = pl.pallas_call(
        kernel,
        out_shape=(jax.ShapeDtypeStruct((BN, OUTPUT_DIM), jnp.float32),
                   jax.ShapeDtypeStruct((L, BN, RNN_UNITS), jnp.float32)),
    )(*args)

    # layout-preserving reshapes back to the module's interface shapes
    return (out.reshape(B, NUM_NODES * OUTPUT_DIM),
            h_new.reshape(L, B, NUM_NODES * RNN_UNITS))


# --------------------------- params / support setup --------------------------
def init_params(key):
    """Raw parameters in the original torch layouts (used by the reference)."""
    params = {"layers": []}
    for l in range(NUM_RNN_LAYERS):
        in_dim = OUTPUT_DIM if l == 0 else RNN_UNITS
        isz = in_dim + RNN_UNITS
        key, k1, k2 = jax.random.split(key, 3)
        params["layers"].append(dict(
            # torch gconv layout: (input_size * num_matrices, out),
            # row index = feature*num_matrices + diffusion_step
            w_ru=jax.random.normal(k1, (isz * NUM_MATRICES, 2 * RNN_UNITS),
                                   jnp.float32) * 0.1,
            w_c=jax.random.normal(k2, (isz * NUM_MATRICES, RNN_UNITS),
                                  jnp.float32) * 0.1,
            b_ru=jnp.full((1, 2 * RNN_UNITS), 1.0, jnp.float32),   # bias_start=1.0
            b_c=jnp.zeros((1, RNN_UNITS), jnp.float32)))           # bias_start=0.0
    key, kp = jax.random.split(key)
    params["proj_w"] = jax.random.normal(kp, (OUTPUT_DIM, RNN_UNITS), jnp.float32) * 0.1
    params["proj_b"] = jnp.zeros((1, OUTPUT_DIM), jnp.float32)
    return params


def prepare_decoder_params(params, support, batch):
    """One-time glue preprocessing: block-diagonal support + per-gate weight slabs."""
    U, M = RNN_UNITS, NUM_MATRICES
    prep = {"s_blk": jnp.kron(jnp.eye(batch, dtype=jnp.float32), support),
            "layers": []}
    for l in range(NUM_RNN_LAYERS):
        p = params["layers"][l]
        in_dim = OUTPUT_DIM if l == 0 else RNN_UNITS
        isz = in_dim + U

        def split_xh(w, out_sz):
            # torch row index = feature*M + k  ->  (M, feature, out), then x/h row split
            wk = w.reshape(isz, M, out_sz).transpose(1, 0, 2)      # (M, isz, out)
            return wk[:, :in_dim, :], wk[:, in_dim:, :]

        wx_ru, wh_ru = split_xh(p["w_ru"], 2 * U)
        wx_c, wh_c = split_xh(p["w_c"], U)
        prep["layers"].append(dict(
            wx_r=wx_ru[..., :U], wx_u=wx_ru[..., U:], wx_c=wx_c,
            wh_r=wh_ru[..., :U], wh_u=wh_ru[..., U:], wh_c=wh_c,
            b_r=p["b_ru"][:, :U], b_u=p["b_ru"][:, U:], b_c=p["b_c"]))
    prep["proj_w"] = params["proj_w"]
    prep["proj_b"] = params["proj_b"]
    return prep


def random_walk_support(key):
    adj = jax.random.uniform(key, (NUM_NODES, NUM_NODES), jnp.float32)
    adj = adj + jnp.eye(NUM_NODES, dtype=jnp.float32)
    d = adj.sum(axis=1)
    rw = adj / d[:, None]          # D^-1 A
    return rw.T                    # calculate_random_walk_matrix(adj).T


# ----------------------------- pure-JAX reference ----------------------------
def reference_forward(inputs, hidden_state, params, support):
    B = inputs.shape[0]
    N, U, od, K, M = NUM_NODES, RNN_UNITS, OUTPUT_DIM, MAX_DIFFUSION_STEP, NUM_MATRICES

    def gconv(inp, state, w, bias):
        cat = jnp.concatenate([inp, state], axis=2)          # (B, N, isz)
        isz = cat.shape[2]
        x0 = cat.transpose(1, 2, 0).reshape(N, isz * B)
        xs = [x0]
        x1 = support @ x0
        xs.append(x1)
        for _ in range(2, K + 1):
            x2 = 2.0 * (support @ x1) - x0
            xs.append(x2)
            x1, x0 = x2, x1
        x = jnp.stack(xs, axis=0)                            # (M, N, isz*B)
        x = x.reshape(M, N, isz, B).transpose(3, 1, 2, 0).reshape(B * N, isz * M)
        return (x @ w + bias.reshape(-1)).reshape(B, N, -1)

    output = inputs.reshape(B, N, od)
    new_hidden = []
    for l in range(NUM_RNN_LAYERS):
        p = params["layers"][l]
        h = hidden_state[l].reshape(B, N, U)
        ru = jax.nn.sigmoid(gconv(output, h, p["w_ru"], p["b_ru"]))
        r, u = ru[..., :U], ru[..., U:]
        c = jnp.tanh(gconv(output, r * h, p["w_c"], p["b_c"]))
        h_new = u * h + (1.0 - u) * c
        new_hidden.append(h_new.reshape(B, N * U))
        output = h_new
    proj = jnp.einsum('bnu,ou->bno', output, params["proj_w"]) + params["proj_b"].reshape(-1)
    return proj.reshape(B, N * od), jnp.stack(new_hidden, axis=0)


# ------------------------------------ main ------------------------------------
if __name__ == "__main__":
    key = jax.random.PRNGKey(0)
    key, k_adj, k_in, k_h, k_par = jax.random.split(key, 5)

    support = random_walk_support(k_adj)
    params = init_params(k_par)
    prep = prepare_decoder_params(params, support, BATCH)

    inputs = jax.random.normal(k_in, (BATCH, NUM_NODES * OUTPUT_DIM), jnp.float32)
    hidden = jax.random.normal(
        k_h, (NUM_RNN_LAYERS, BATCH, NUM_NODES * RNN_UNITS), jnp.float32) * 0.1

    out, new_hidden = jax.block_until_ready(decoder_forward(inputs, hidden, prep))

    assert out.shape == (BATCH, NUM_NODES * OUTPUT_DIM)
    assert new_hidden.shape == (NUM_RNN_LAYERS, BATCH, NUM_NODES * RNN_UNITS)

    ref_out, ref_hidden = reference_forward(inputs, hidden, params, support)
    ok = (jnp.allclose(out, ref_out, atol=1e-4, rtol=1e-4)
          and jnp.allclose(new_hidden, ref_hidden, atol=1e-4, rtol=1e-4))
    if not ok:
        raise SystemExit("Pallas result does not match pure-JAX reference")
    print("KERNEL_OK")
</pallas_src>

<mosaic_0001>
module attributes {stable_mosaic.version = 11 : i64} {
  func.func @kernel(%arg0: memref<16x1xf32, #tpu.memory_space<vmem>>, %arg1: memref<2x16x16xf32, #tpu.memory_space<vmem>>, %arg2: memref<16x16xf32, #tpu.memory_space<vmem>>, %arg3: memref<3x1x16xf32, #tpu.memory_space<vmem>>, %arg4: memref<3x1x16xf32, #tpu.memory_space<vmem>>, %arg5: memref<3x1x16xf32, #tpu.memory_space<vmem>>, %arg6: memref<3x16x16xf32, #tpu.memory_space<vmem>>, %arg7: memref<3x16x16xf32, #tpu.memory_space<vmem>>, %arg8: memref<3x16x16xf32, #tpu.memory_space<vmem>>, %arg9: memref<1x16xf32, #tpu.memory_space<vmem>>, %arg10: memref<1x16xf32, #tpu.memory_space<vmem>>, %arg11: memref<1x16xf32, #tpu.memory_space<vmem>>, %arg12: memref<3x16x16xf32, #tpu.memory_space<vmem>>, %arg13: memref<3x16x16xf32, #tpu.memory_space<vmem>>, %arg14: memref<3x16x16xf32, #tpu.memory_space<vmem>>, %arg15: memref<3x16x16xf32, #tpu.memory_space<vmem>>, %arg16: memref<3x16x16xf32, #tpu.memory_space<vmem>>, %arg17: memref<3x16x16xf32, #tpu.memory_space<vmem>>, %arg18: memref<1x16xf32, #tpu.memory_space<vmem>>, %arg19: memref<1x16xf32, #tpu.memory_space<vmem>>, %arg20: memref<1x16xf32, #tpu.memory_space<vmem>>, %arg21: memref<1x16xf32, #tpu.memory_space<vmem>>, %arg22: memref<1x1xf32, #tpu.memory_space<vmem>>, %arg23: memref<16x1xf32, #tpu.memory_space<vmem>>, %arg24: memref<2x16x16xf32, #tpu.memory_space<vmem>>) attributes {dimension_semantics = [], scalar_prefetch = 0 : i64, scratch_operands = 0 : i64, tpu.core_type = #tpu.core_type<tc>} {
    %c0 = arith.constant 0 : index
    %c0_0 = arith.constant 0 : index
    %0 = vector.load %arg2[%c0, %c0_0] : memref<16x16xf32, #tpu.memory_space<vmem>>, vector<16x16xf32>
    %c0_1 = arith.constant 0 : index
    %c0_2 = arith.constant 0 : index
    %1 = vector.load %arg0[%c0_1, %c0_2] : memref<16x1xf32, #tpu.memory_space<vmem>>, vector<16x1xf32>
    %c0_3 = arith.constant 0 : index
    %c0_4 = arith.constant 0 : index
    %c0_5 = arith.constant 0 : index
    %2 = vector.load %arg1[%c0_3, %c0_4, %c0_5] : memref<2x16x16xf32, #tpu.memory_space<vmem>>, vector<1x16x16xf32>
    %3 = vector.shape_cast %2 : vector<1x16x16xf32> to vector<16x16xf32>
    %cst = arith.constant dense<0.000000e+00> : vector<16x16xf32>
    %4 = tpu.matmul %0, %3, %cst {dimension_numbers = #tpu.dot_dimension_numbers<[1], [0], [0], [1], [0, 0, 1, 1], [], []>} : vector<16x16xf32>, vector<16x16xf32>, vector<16x16xf32> -> vector<16x16xf32>
    %cst_6 = arith.constant dense<0.000000e+00> : vector<16x16xf32>
    %5 = tpu.matmul %0, %4, %cst_6 {dimension_numbers = #tpu.dot_dimension_numbers<[1], [0], [0], [1], [0, 0, 1, 1], [], []>} : vector<16x16xf32>, vector<16x16xf32>, vector<16x16xf32> -> vector<16x16xf32>
    %cst_7 = arith.constant 2.000000e+00 : f32
    %6 = vector.broadcast %cst_7 : f32 to vector<16x16xf32>
    %7 = arith.mulf %6, %5 : vector<16x16xf32>
    %8 = arith.subf %7, %3 : vector<16x16xf32>
    %c0_8 = arith.constant 0 : index
    %c0_9 = arith.constant 0 : index
    %c0_10 = arith.constant 0 : index
    %9 = vector.load %arg3[%c0_8, %c0_9, %c0_10] : memref<3x1x16xf32, #tpu.memory_space<vmem>>, vector<1x1x16xf32>
    %10 = vector.shape_cast %9 : vector<1x1x16xf32> to vector<1x16xf32>
    %11 = vector.broadcast %1 : vector<16x1xf32> to vector<16x16xf32>
    %12 = vector.broadcast %10 : vector<1x16xf32> to vector<16x16xf32>
    %13 = arith.mulf %11, %12 : vector<16x16xf32>
    %c1 = arith.constant 1 : index
    %c0_11 = arith.constant 0 : index
    %c0_12 = arith.constant 0 : index
    %14 = vector.load %arg3[%c1, %c0_11, %c0_12] : memref<3x1x16xf32, #tpu.memory_space<vmem>>, vector<1x1x16xf32>
    %15 = vector.shape_cast %14 : vector<1x1x16xf32> to vector<1x16xf32>
    %16 = vector.broadcast %1 : vector<16x1xf32> to vector<16x16xf32>
    %17 = vector.broadcast %15 : vector<1x16xf32> to vector<16x16xf32>
    %18 = arith.mulf %16, %17 : vector<16x16xf32>
    %cst_13 = arith.constant dense<0.000000e+00> : vector<16x16xf32>
    %19 = tpu.matmul %0, %18, %cst_13 {dimension_numbers = #tpu.dot_dimension_numbers<[1], [0], [0], [1], [0, 0, 1, 1], [], []>} : vector<16x16xf32>, vector<16x16xf32>, vector<16x16xf32> -> vector<16x16xf32>
    %20 = arith.addf %13, %19 : vector<16x16xf32>
    %c2 = arith.constant 2 : index
    %c0_14 = arith.constant 0 : index
    %c0_15 = arith.constant 0 : index
    %21 = vector.load %arg3[%c2, %c0_14, %c0_15] : memref<3x1x16xf32, #tpu.memory_space<vmem>>, vector<1x1x16xf32>
    %22 = vector.shape_cast %21 : vector<1x1x16xf32> to vector<1x16xf32>
    %23 = vector.broadcast %1 : vector<16x1xf32> to vector<16x16xf32>
    %24 = vector.broadcast %22 : vector<1x16xf32> to vector<16x16xf32>
    %25 = arith.mulf %23, %24 : vector<16x16xf32>
    %cst_16 = arith.constant dense<0.000000e+00> : vector<16x16xf32>
    %26 = tpu.matmul %0, %25, %cst_16 {dimension_numbers = #tpu.dot_dimension_numbers<[1], [0], [0], [1], [0, 0, 1, 1], [], []>} : vector<16x16xf32>, vector<16x16xf32>, vector<16x16xf32> -> vector<16x16xf32>
    %cst_17 = arith.constant dense<0.000000e+00> : vector<16x16xf32>
    %27 = tpu.matmul %0, %26, %cst_17 {dimension_numbers = #tpu.dot_dimension_numbers<[1], [0], [0], [1], [0, 0, 1, 1], [], []>} : vector<16x16xf32>, vector<16x16xf32>, vector<16x16xf32> -> vector<16x16xf32>
    %cst_18 = arith.constant 2.000000e+00 : f32
    %28 = vector.broadcast %cst_18 : f32 to vector<16x16xf32>
    %29 = arith.mulf %28, %27 : vector<16x16xf32>
    %30 = arith.subf %29, %25 : vector<16x16xf32>
    %31 = arith.addf %20, %30 : vector<16x16xf32>
    %c0_19 = arith.constant 0 : index
    %c0_20 = arith.constant 0 : index
    %c0_21 = arith.constant 0 : index
    %32 = vector.load %arg6[%c0_19, %c0_20, %c0_21] : memref<3x16x16xf32, #tpu.memory_space<vmem>>, vector<1x16x16xf32>
    %33 = vector.shape_cast %32 : vector<1x16x16xf32> to vector<16x16xf32>
    %cst_22 = arith.constant dense<0.000000e+00> : vector<16x16xf32>
    %34 = tpu.matmul %3, %33, %cst_22 {dimension_numbers = #tpu.dot_dimension_numbers<[1], [0], [0], [1], [0, 0, 1, 1], [], []>} : vector<16x16xf32>, vector<16x16xf32>, vector<16x16xf32> -> vector<16x16xf32>
    %c1_23 = arith.constant 1 : index
    %c0_24 = arith.constant 0 : index
    %c0_25 = arith.constant 0 : index
    %35 = vector.load %arg6[%c1_23, %c0_24, %c0_25] : memref<3x16x16xf32, #tpu.memory_space<vmem>>, vector<1x16x16xf32>
    %36 = vector.shape_cast %35 : vector<1x16x16xf32> to vector<16x16xf32>
    %cst_26 = arith.constant dense<0.000000e+00> : vector<16x16xf32>
    %37 = tpu.matmul %4, %36, %cst_26 {dimension_numbers = #tpu.dot_dimension_numbers<[1], [0], [0], [1], [0, 0, 1, 1], [], []>} : vector<16x16xf32>, vector<16x16xf32>, vector<16x16xf32> -> vector<16x16xf32>
    %38 = arith.addf %34, %37 : vector<16x16xf32>
    %c2_27 = arith.constant 2 : index
    %c0_28 = arith.constant 0 : index
    %c0_29 = arith.constant 0 : index
    %39 = vector.load %arg6[%c2_27, %c0_28, %c0_29] : memref<3x16x16xf32, #tpu.memory_space<vmem>>, vector<1x16x16xf32>
    %40 = vector.shape_cast %39 : vector<1x16x16xf32> to vector<16x16xf32>
    %cst_30 = arith.constant dense<0.000000e+00> : vector<16x16xf32>
    %41 = tpu.matmul %8, %40, %cst_30 {dimension_numbers = #tpu.dot_dimension_numbers<[1], [0], [0], [1], [0, 0, 1, 1], [], []>} : vector<16x16xf32>, vector<16x16xf32>, vector<16x16xf32> -> vector<16x16xf32>
    %42 = arith.addf %38, %41 : vector<16x16xf32>
    %43 = arith.addf %31, %42 : vector<16x16xf32>
    %c0_31 = arith.constant 0 : index
    %c0_32 = arith.constant 0 : index
    %44 = vector.load %arg9[%c0_31, %c0_32] : memref<1x16xf32, #tpu.memory_space<vmem>>, vector<1x16xf32>
    %45 = vector.broadcast %44 : vector<1x16xf32> to vector<16x16xf32>
    %46 = arith.addf %43, %45 : vector<16x16xf32>
    %47 = arith.negf %46 : vector<16x16xf32>
    %48 = math.exp %47 : vector<16x16xf32>
    %cst_33 = arith.constant 1.000000e+00 : f32
    %49 = vector.broadcast %cst_33 : f32 to vector<16x16xf32>
    %50 = arith.addf %49, %48 : vector<16x16xf32>
    %51 = arith.divf %49, %50 : vector<16x16xf32>
    %c0_34 = arith.constant 0 : index
    %c0_35 = arith.constant 0 : index
    %c0_36 = arith.constant 0 : index
    %52 = vector.load %arg4[%c0_34, %c0_35, %c0_36] : memref<3x1x16xf32, #tpu.memory_space<vmem>>, vector<1x1x16xf32>
    %53 = vector.shape_cast %52 : vector<1x1x16xf32> to vector<1x16xf32>
    %54 = vector.broadcast %1 : vector<16x1xf32> to vector<16x16xf32>
    %55 = vector.broadcast %53 : vector<1x16xf32> to vector<16x16xf32>
    %56 = arith.mulf %54, %55 : vector<16x16xf32>
    %c1_37 = arith.constant 1 : index
    %c0_38 = arith.constant 0 : index
    %c0_39 = arith.constant 0 : index
    %57 = vector.load %arg4[%c1_37, %c0_38, %c0_39] : memref<3x1x16xf32, #tpu.memory_space<vmem>>, vector<1x1x16xf32>
    %58 = vector.shape_cast %57 : vector<1x1x16xf32> to vector<1x16xf32>
    %59 = vector.broadcast %1 : vector<16x1xf32> to vector<16x16xf32>
    %60 = vector.broadcast %58 : vector<1x16xf32> to vector<16x16xf32>
    %61 = arith.mulf %59, %60 : vector<16x16xf32>
    %cst_40 = arith.constant dense<0.000000e+00> : vector<16x16xf32>
    %62 = tpu.matmul %0, %61, %cst_40 {dimension_numbers = #tpu.dot_dimension_numbers<[1], [0], [0], [1], [0, 0, 1, 1], [], []>} : vector<16x16xf32>, vector<16x16xf32>, vector<16x16xf32> -> vector<16x16xf32>
    %63 = arith.addf %56, %62 : vector<16x16xf32>
    %c2_41 = arith.constant 2 : index
    %c0_42 = arith.constant 0 : index
    %c0_43 = arith.constant 0 : index
    %64 = vector.load %arg4[%c2_41, %c0_42, %c0_43] : memref<3x1x16xf32, #tpu.memory_space<vmem>>, vector<1x1x16xf32>
    %65 = vector.shape_cast %64 : vector<1x1x16xf32> to vector<1x16xf32>
    %66 = vector.broadcast %1 : vector<16x1xf32> to vector<16x16xf32>
    %67 = vector.broadcast %65 : vector<1x16xf32> to vector<16x16xf32>
    %68 = arith.mulf %66, %67 : vector<16x16xf32>
    %cst_44 = arith.constant dense<0.000000e+00> : vector<16x16xf32>
    %69 = tpu.matmul %0, %68, %cst_44 {dimension_numbers = #tpu.dot_dimension_numbers<[1], [0], [0], [1], [0, 0, 1, 1], [], []>} : vector<16x16xf32>, vector<16x16xf32>, vector<16x16xf32> -> vector<16x16xf32>
    %cst_45 = arith.constant dense<0.000000e+00> : vector<16x16xf32>
    %70 = tpu.matmul %0, %69, %cst_45 {dimension_numbers = #tpu.dot_dimension_numbers<[1], [0], [0], [1], [0, 0, 1, 1], [], []>} : vector<16x16xf32>, vector<16x16xf32>, vector<16x16xf32> -> vector<16x16xf32>
    %cst_46 = arith.constant 2.000000e+00 : f32
    %71 = vector.broadcast %cst_46 : f32 to vector<16x16xf32>
    %72 = arith.mulf %71, %70 : vector<16x16xf32>
    %73 = arith.subf %72, %68 : vector<16x16xf32>
    %74 = arith.addf %63, %73 : vector<16x16xf32>
    %c0_47 = arith.constant 0 : index
    %c0_48 = arith.constant 0 : index
    %c0_49 = arith.constant 0 : index
    %75 = vector.load %arg7[%c0_47, %c0_48, %c0_49] : memref<3x16x16xf32, #tpu.memory_space<vmem>>, vector<1x16x16xf32>
    %76 = vector.shape_cast %75 : vector<1x16x16xf32> to vector<16x16xf32>
    %cst_50 = arith.constant dense<0.000000e+00> : vector<16x16xf32>
    %77 = tpu.matmul %3, %76, %cst_50 {dimension_numbers = #tpu.dot_dimension_numbers<[1], [0], [0], [1], [0, 0, 1, 1], [], []>} : vector<16x16xf32>, vector<16x16xf32>, vector<16x16xf32> -> vector<16x16xf32>
    %c1_51 = arith.constant 1 : index
    %c0_52 = arith.constant 0 : index
    %c0_53 = arith.constant 0 : index
    %78 = vector.load %arg7[%c1_51, %c0_52, %c0_53] : memref<3x16x16xf32, #tpu.memory_space<vmem>>, vector<1x16x16xf32>
    %79 = vector.shape_cast %78 : vector<1x16x16xf32> to vector<16x16xf32>
    %cst_54 = arith.constant dense<0.000000e+00> : vector<16x16xf32>
    %80 = tpu.matmul %4, %79, %cst_54 {dimension_numbers = #tpu.dot_dimension_numbers<[1], [0], [0], [1], [0, 0, 1, 1], [], []>} : vector<16x16xf32>, vector<16x16xf32>, vector<16x16xf32> -> vector<16x16xf32>
    %81 = arith.addf %77, %80 : vector<16x16xf32>
    %c2_55 = arith.constant 2 : index
    %c0_56 = arith.constant 0 : index
    %c0_57 = arith.constant 0 : index
    %82 = vector.load %arg7[%c2_55, %c0_56, %c0_57] : memref<3x16x16xf32, #tpu.memory_space<vmem>>, vector<1x16x16xf32>
    %83 = vector.shape_cast %82 : vector<1x16x16xf32> to vector<16x16xf32>
    %cst_58 = arith.constant dense<0.000000e+00> : vector<16x16xf32>
    %84 = tpu.matmul %8, %83, %cst_58 {dimension_numbers = #tpu.dot_dimension_numbers<[1], [0], [0], [1], [0, 0, 1, 1], [], []>} : vector<16x16xf32>, vector<16x16xf32>, vector<16x16xf32> -> vector<16x16xf32>
    %85 = arith.addf %81, %84 : vector<16x16xf32>
    %86 = arith.addf %74, %85 : vector<16x16xf32>
    %c0_59 = arith.constant 0 : index
    %c0_60 = arith.constant 0 : index
    %87 = vector.load %arg10[%c0_59, %c0_60] : memref<1x16xf32, #tpu.memory_space<vmem>>, vector<1x16xf32>
    %88 = vector.broadcast %87 : vector<1x16xf32> to vector<16x16xf32>
    %89 = arith.addf %86, %88 : vector<16x16xf32>
    %90 = arith.negf %89 : vector<16x16xf32>
    %91 = math.exp %90 : vector<16x16xf32>
    %cst_61 = arith.constant 1.000000e+00 : f32
    %92 = vector.broadcast %cst_61 : f32 to vector<16x16xf32>
    %93 = arith.addf %92, %91 : vector<16x16xf32>
    %94 = arith.divf %92, %93 : vector<16x16xf32>
    %95 = arith.mulf %51, %3 : vector<16x16xf32>
    %cst_62 = arith.constant dense<0.000000e+00> : vector<16x16xf32>
    %96 = tpu.matmul %0, %95, %cst_62 {dimension_numbers = #tpu.dot_dimension_numbers<[1], [0], [0], [1], [0, 0, 1, 1], [], []>} : vector<16x16xf32>, vector<16x16xf32>, vector<16x16xf32> -> vector<16x16xf32>
    %cst_63 = arith.constant dense<0.000000e+00> : vector<16x16xf32>
    %97 = tpu.matmul %0, %96, %cst_63 {dimension_numbers = #tpu.dot_dimension_numbers<[1], [0], [0], [1], [0, 0, 1, 1], [], []>} : vector<16x16xf32>, vector<16x16xf32>, vector<16x16xf32> -> vector<16x16xf32>
    %cst_64 = arith.constant 2.000000e+00 : f32
    %98 = vector.broadcast %cst_64 : f32 to vector<16x16xf32>
    %99 = arith.mulf %98, %97 : vector<16x16xf32>
    %100 = arith.subf %99, %95 : vector<16x16xf32>
    %c0_65 = arith.constant 0 : index
    %c0_66 = arith.constant 0 : index
    %c0_67 = arith.constant 0 : index
    %101 = vector.load %arg5[%c0_65, %c0_66, %c0_67] : memref<3x1x16xf32, #tpu.memory_space<vmem>>, vector<1x1x16xf32>
    %102 = vector.shape_cast %101 : vector<1x1x16xf32> to vector<1x16xf32>
    %103 = vector.broadcast %1 : vector<16x1xf32> to vector<16x16xf32>
    %104 = vector.broadcast %102 : vector<1x16xf32> to vector<16x16xf32>
    %105 = arith.mulf %103, %104 : vector<16x16xf32>
    %c1_68 = arith.constant 1 : index
    %c0_69 = arith.constant 0 : index
    %c0_70 = arith.constant 0 : index
    %106 = vector.load %arg5[%c1_68, %c0_69, %c0_70] : memref<3x1x16xf32, #tpu.memory_space<vmem>>, vector<1x1x16xf32>
    %107 = vector.shape_cast %106 : vector<1x1x16xf32> to vector<1x16xf32>
    %108 = vector.broadcast %1 : vector<16x1xf32> to vector<16x16xf32>
    %109 = vector.broadcast %107 : vector<1x16xf32> to vector<16x16xf32>
    %110 = arith.mulf %108, %109 : vector<16x16xf32>
    %cst_71 = arith.constant dense<0.000000e+00> : vector<16x16xf32>
    %111 = tpu.matmul %0, %110, %cst_71 {dimension_numbers = #tpu.dot_dimension_numbers<[1], [0], [0], [1], [0, 0, 1, 1], [], []>} : vector<16x16xf32>, vector<16x16xf32>, vector<16x16xf32> -> vector<16x16xf32>
    %112 = arith.addf %105, %111 : vector<16x16xf32>
    %c2_72 = arith.constant 2 : index
    %c0_73 = arith.constant 0 : index
    %c0_74 = arith.constant 0 : index
    %113 = vector.load %arg5[%c2_72, %c0_73, %c0_74] : memref<3x1x16xf32, #tpu.memory_space<vmem>>, vector<1x1x16xf32>
    %114 = vector.shape_cast %113 : vector<1x1x16xf32> to vector<1x16xf32>
    %115 = vector.broadcast %1 : vector<16x1xf32> to vector<16x16xf32>
    %116 = vector.broadcast %114 : vector<1x16xf32> to vector<16x16xf32>
    %117 = arith.mulf %115, %116 : vector<16x16xf32>
    %cst_75 = arith.constant dense<0.000000e+00> : vector<16x16xf32>
    %118 = tpu.matmul %0, %117, %cst_75 {dimension_numbers = #tpu.dot_dimension_numbers<[1], [0], [0], [1], [0, 0, 1, 1], [], []>} : vector<16x16xf32>, vector<16x16xf32>, vector<16x16xf32> -> vector<16x16xf32>
    %cst_76 = arith.constant dense<0.000000e+00> : vector<16x16xf32>
    %119 = tpu.matmul %0, %118, %cst_76 {dimension_numbers = #tpu.dot_dimension_numbers<[1], [0], [0], [1], [0, 0, 1, 1], [], []>} : vector<16x16xf32>, vector<16x16xf32>, vector<16x16xf32> -> vector<16x16xf32>
    %cst_77 = arith.constant 2.000000e+00 : f32
    %120 = vector.broadcast %cst_77 : f32 to vector<16x16xf32>
    %121 = arith.mulf %120, %119 : vector<16x16xf32>
    %122 = arith.subf %121, %117 : vector<16x16xf32>
    %123 = arith.addf %112, %122 : vector<16x16xf32>
    %c0_78 = arith.constant 0 : index
    %c0_79 = arith.constant 0 : index
    %c0_80 = arith.constant 0 : index
    %124 = vector.load %arg8[%c0_78, %c0_79, %c0_80] : memref<3x16x16xf32, #tpu.memory_space<vmem>>, vector<1x16x16xf32>
    %125 = vector.shape_cast %124 : vector<1x16x16xf32> to vector<16x16xf32>
    %cst_81 = arith.constant dense<0.000000e+00> : vector<16x16xf32>
    %126 = tpu.matmul %95, %125, %cst_81 {dimension_numbers = #tpu.dot_dimension_numbers<[1], [0], [0], [1], [0, 0, 1, 1], [], []>} : vector<16x16xf32>, vector<16x16xf32>, vector<16x16xf32> -> vector<16x16xf32>
    %c1_82 = arith.constant 1 : index
    %c0_83 = arith.constant 0 : index
    %c0_84 = arith.constant 0 : index
    %127 = vector.load %arg8[%c1_82, %c0_83, %c0_84] : memref<3x16x16xf32, #tpu.memory_space<vmem>>, vector<1x16x16xf32>
    %128 = vector.shape_cast %127 : vector<1x16x16xf32> to vector<16x16xf32>
    %cst_85 = arith.constant dense<0.000000e+00> : vector<16x16xf32>
    %129 = tpu.matmul %96, %128, %cst_85 {dimension_numbers = #tpu.dot_dimension_numbers<[1], [0], [0], [1], [0, 0, 1, 1], [], []>} : vector<16x16xf32>, vector<16x16xf32>, vector<16x16xf32> -> vector<16x16xf32>
    %130 = arith.addf %126, %129 : vector<16x16xf32>
    %c2_86 = arith.constant 2 : index
    %c0_87 = arith.constant 0 : index
    %c0_88 = arith.constant 0 : index
    %131 = vector.load %arg8[%c2_86, %c0_87, %c0_88] : memref<3x16x16xf32, #tpu.memory_space<vmem>>, vector<1x16x16xf32>
    %132 = vector.shape_cast %131 : vector<1x16x16xf32> to vector<16x16xf32>
    %cst_89 = arith.constant dense<0.000000e+00> : vector<16x16xf32>
    %133 = tpu.matmul %100, %132, %cst_89 {dimension_numbers = #tpu.dot_dimension_numbers<[1], [0], [0], [1], [0, 0, 1, 1], [], []>} : vector<16x16xf32>, vector<16x16xf32>, vector<16x16xf32> -> vector<16x16xf32>
    %134 = arith.addf %130, %133 : vector<16x16xf32>
    %135 = arith.addf %123, %134 : vector<16x16xf32>
    %c0_90 = arith.constant 0 : index
    %c0_91 = arith.constant 0 : index
    %136 = vector.load %arg11[%c0_90, %c0_91] : memref<1x16xf32, #tpu.memory_space<vmem>>, vector<1x16xf32>
    %137 = vector.broadcast %136 : vector<1x16xf32> to vector<16x16xf32>
    %138 = arith.addf %135, %137 : vector<16x16xf32>
    %139 = math.tanh %138 : vector<16x16xf32>
    %140 = arith.mulf %94, %3 : vector<16x16xf32>
    %cst_92 = arith.constant 1.000000e+00 : f32
    %141 = vector.broadcast %cst_92 : f32 to vector<16x16xf32>
    %142 = arith.subf %141, %94 : vector<16x16xf32>
    %143 = arith.mulf %142, %139 : vector<16x16xf32>
    %144 = arith.addf %140, %143 : vector<16x16xf32>
    %c0_93 = arith.constant 0 : index
    %c0_94 = arith.constant 0 : index
    %c0_95 = arith.constant 0 : index
    %145 = vector.load %arg24[%c0_93, %c0_94, %c0_95] : memref<2x16x16xf32, #tpu.memory_space<vmem>>, vector<1x16x16xf32>
    %146 = vector.shape_cast %145 : vector<1x16x16xf32> to vector<16x16xf32>
    %147 = vector.shape_cast %144 : vector<16x16xf32> to vector<1x16x16xf32>
    tpu.vector_store %arg24[%c0_93, %c0_94, %c0_95], %147 {strides = array<i32>} : memref<2x16x16xf32, #tpu.memory_space<vmem>>, vector<1x16x16xf32>,
    %c1_96 = arith.constant 1 : index
    %c0_97 = arith.constant 0 : index
    %c0_98 = arith.constant 0 : index
    %148 = vector.load %arg1[%c1_96, %c0_97, %c0_98] : memref<2x16x16xf32, #tpu.memory_space<vmem>>, vector<1x16x16xf32>
    %149 = vector.shape_cast %148 : vector<1x16x16xf32> to vector<16x16xf32>
    %cst_99 = arith.constant dense<0.000000e+00> : vector<16x16xf32>
    %150 = tpu.matmul %0, %144, %cst_99 {dimension_numbers = #tpu.dot_dimension_numbers<[1], [0], [0], [1], [0, 0, 1, 1], [], []>} : vector<16x16xf32>, vector<16x16xf32>, vector<16x16xf32> -> vector<16x16xf32>
    %cst_100 = arith.constant dense<0.000000e+00> : vector<16x16xf32>
    %151 = tpu.matmul %0, %150, %cst_100 {dimension_numbers = #tpu.dot_dimension_numbers<[1], [0], [0], [1], [0, 0, 1, 1], [], []>} : vector<16x16xf32>, vector<16x16xf32>, vector<16x16xf32> -> vector<16x16xf32>
    %cst_101 = arith.constant 2.000000e+00 : f32
    %152 = vector.broadcast %cst_101 : f32 to vector<16x16xf32>
    %153 = arith.mulf %152, %151 : vector<16x16xf32>
    %154 = arith.subf %153, %144 : vector<16x16xf32>
    %cst_102 = arith.constant dense<0.000000e+00> : vector<16x16xf32>
    %155 = tpu.matmul %0, %149, %cst_102 {dimension_numbers = #tpu.dot_dimension_numbers<[1], [0], [0], [1], [0, 0, 1, 1], [], []>} : vector<16x16xf32>, vector<16x16xf32>, vector<16x16xf32> -> vector<16x16xf32>
    %cst_103 = arith.constant dense<0.000000e+00> : vector<16x16xf32>
    %156 = tpu.matmul %0, %155, %cst_103 {dimension_numbers = #tpu.dot_dimension_numbers<[1], [0], [0], [1], [0, 0, 1, 1], [], []>} : vector<16x16xf32>, vector<16x16xf32>, vector<16x16xf32> -> vector<16x16xf32>
    %cst_104 = arith.constant 2.000000e+00 : f32
    %157 = vector.broadcast %cst_104 : f32 to vector<16x16xf32>
    %158 = arith.mulf %157, %156 : vector<16x16xf32>
    %159 = arith.subf %158, %149 : vector<16x16xf32>
    %c0_105 = arith.constant 0 : index
    %c0_106 = arith.constant 0 : index
    %c0_107 = arith.constant 0 : index
    %160 = vector.load %arg12[%c0_105, %c0_106, %c0_107] : memref<3x16x16xf32, #tpu.memory_space<vmem>>, vector<1x16x16xf32>
    %161 = vector.shape_cast %160 : vector<1x16x16xf32> to vector<16x16xf32>
    %cst_108 = arith.constant dense<0.000000e+00> : vector<16x16xf32>
    %162 = tpu.matmul %144, %161, %cst_108 {dimension_numbers = #tpu.dot_dimension_numbers<[1], [0], [0], [1], [0, 0, 1, 1], [], []>} : vector<16x16xf32>, vector<16x16xf32>, vector<16x16xf32> -> vector<16x16xf32>
    %c1_109 = arith.constant 1 : index
    %c0_110 = arith.constant 0 : index
    %c0_111 = arith.constant 0 : index
    %163 = vector.load %arg12[%c1_109, %c0_110, %c0_111] : memref<3x16x16xf32, #tpu.memory_space<vmem>>, vector<1x16x16xf32>
    %164 = vector.shape_cast %163 : vector<1x16x16xf32> to vector<16x16xf32>
    %cst_112 = arith.constant dense<0.000000e+00> : vector<16x16xf32>
    %165 = tpu.matmul %150, %164, %cst_112 {dimension_numbers = #tpu.dot_dimension_numbers<[1], [0], [0], [1], [0, 0, 1, 1], [], []>} : vector<16x16xf32>, vector<16x16xf32>, vector<16x16xf32> -> vector<16x16xf32>
    %166 = arith.addf %162, %165 : vector<16x16xf32>
    %c2_113 = arith.constant 2 : index
    %c0_114 = arith.constant 0 : index
    %c0_115 = arith.constant 0 : index
    %167 = vector.load %arg12[%c2_113, %c0_114, %c0_115] : memref<3x16x16xf32, #tpu.memory_space<vmem>>, vector<1x16x16xf32>
    %168 = vector.shape_cast %167 : vector<1x16x16xf32> to vector<16x16xf32>
    %cst_116 = arith.constant dense<0.000000e+00> : vector<16x16xf32>
    %169 = tpu.matmul %154, %168, %cst_116 {dimension_numbers = #tpu.dot_dimension_numbers<[1], [0], [0], [1], [0, 0, 1, 1], [], []>} : vector<16x16xf32>, vector<16x16xf32>, vector<16x16xf32> -> vector<16x16xf32>
    %170 = arith.addf %166, %169 : vector<16x16xf32>
    %c0_117 = arith.constant 0 : index
    %c0_118 = arith.constant 0 : index
    %c0_119 = arith.constant 0 : index
    %171 = vector.load %arg15[%c0_117, %c0_118, %c0_119] : memref<3x16x16xf32, #tpu.memory_space<vmem>>, vector<1x16x16xf32>
    %172 = vector.shape_cast %171 : vector<1x16x16xf32> to vector<16x16xf32>
    %cst_120 = arith.constant dense<0.000000e+00> : vector<16x16xf32>
    %173 = tpu.matmul %149, %172, %cst_120 {dimension_numbers = #tpu.dot_dimension_numbers<[1], [0], [0], [1], [0, 0, 1, 1], [], []>} : vector<16x16xf32>, vector<16x16xf32>, vector<16x16xf32> -> vector<16x16xf32>
    %c1_121 = arith.constant 1 : index
    %c0_122 = arith.constant 0 : index
    %c0_123 = arith.constant 0 : index
    %174 = vector.load %arg15[%c1_121, %c0_122, %c0_123] : memref<3x16x16xf32, #tpu.memory_space<vmem>>, vector<1x16x16xf32>
    %175 = vector.shape_cast %174 : vector<1x16x16xf32> to vector<16x16xf32>
    %cst_124 = arith.constant dense<0.000000e+00> : vector<16x16xf32>
    %176 = tpu.matmul %155, %175, %cst_124 {dimension_numbers = #tpu.dot_dimension_numbers<[1], [0], [0], [1], [0, 0, 1, 1], [], []>} : vector<16x16xf32>, vector<16x16xf32>, vector<16x16xf32> -> vector<16x16xf32>
    %177 = arith.addf %173, %176 : vector<16x16xf32>
    %c2_125 = arith.constant 2 : index
    %c0_126 = arith.constant 0 : index
    %c0_127 = arith.constant 0 : index
    %178 = vector.load %arg15[%c2_125, %c0_126, %c0_127] : memref<3x16x16xf32, #tpu.memory_space<vmem>>, vector<1x16x16xf32>
    %179 = vector.shape_cast %178 : vector<1x16x16xf32> to vector<16x16xf32>
    %cst_128 = arith.constant dense<0.000000e+00> : vector<16x16xf32>
    %180 = tpu.matmul %159, %179, %cst_128 {dimension_numbers = #tpu.dot_dimension_numbers<[1], [0], [0], [1], [0, 0, 1, 1], [], []>} : vector<16x16xf32>, vector<16x16xf32>, vector<16x16xf32> -> vector<16x16xf32>
    %181 = arith.addf %177, %180 : vector<16x16xf32>
    %182 = arith.addf %170, %181 : vector<16x16xf32>
    %c0_129 = arith.constant 0 : index
    %c0_130 = arith.constant 0 : index
    %183 = vector.load %arg18[%c0_129, %c0_130] : memref<1x16xf32, #tpu.memory_space<vmem>>, vector<1x16xf32>
    %184 = vector.broadcast %183 : vector<1x16xf32> to vector<16x16xf32>
    %185 = arith.addf %182, %184 : vector<16x16xf32>
    %186 = arith.negf %185 : vector<16x16xf32>
    %187 = math.exp %186 : vector<16x16xf32>
    %cst_131 = arith.constant 1.000000e+00 : f32
    %188 = vector.broadcast %cst_131 : f32 to vector<16x16xf32>
    %189 = arith.addf %188, %187 : vector<16x16xf32>
    %190 = arith.divf %188, %189 : vector<16x16xf32>
    %c0_132 = arith.constant 0 : index
    %c0_133 = arith.constant 0 : index
    %c0_134 = arith.constant 0 : index
    %191 = vector.load %arg13[%c0_132, %c0_133, %c0_134] : memref<3x16x16xf32, #tpu.memory_space<vmem>>, vector<1x16x16xf32>
    %192 = vector.shape_cast %191 : vector<1x16x16xf32> to vector<16x16xf32>
    %cst_135 = arith.constant dense<0.000000e+00> : vector<16x16xf32>
    %193 = tpu.matmul %144, %192, %cst_135 {dimension_numbers = #tpu.dot_dimension_numbers<[1], [0], [0], [1], [0, 0, 1, 1], [], []>} : vector<16x16xf32>, vector<16x16xf32>, vector<16x16xf32> -> vector<16x16xf32>
    %c1_136 = arith.constant 1 : index
    %c0_137 = arith.constant 0 : index
    %c0_138 = arith.constant 0 : index
    %194 = vector.load %arg13[%c1_136, %c0_137, %c0_138] : memref<3x16x16xf32, #tpu.memory_space<vmem>>, vector<1x16x16xf32>
    %195 = vector.shape_cast %194 : vector<1x16x16xf32> to vector<16x16xf32>
    %cst_139 = arith.constant dense<0.000000e+00> : vector<16x16xf32>
    %196 = tpu.matmul %150, %195, %cst_139 {dimension_numbers = #tpu.dot_dimension_numbers<[1], [0], [0], [1], [0, 0, 1, 1], [], []>} : vector<16x16xf32>, vector<16x16xf32>, vector<16x16xf32> -> vector<16x16xf32>
    %197 = arith.addf %193, %196 : vector<16x16xf32>
    %c2_140 = arith.constant 2 : index
    %c0_141 = arith.constant 0 : index
    %c0_142 = arith.constant 0 : index
    %198 = vector.load %arg13[%c2_140, %c0_141, %c0_142] : memref<3x16x16xf32, #tpu.memory_space<vmem>>, vector<1x16x16xf32>
    %199 = vector.shape_cast %198 : vector<1x16x16xf32> to vector<16x16xf32>
    %cst_143 = arith.constant dense<0.000000e+00> : vector<16x16xf32>
    %200 = tpu.matmul %154, %199, %cst_143 {dimension_numbers = #tpu.dot_dimension_numbers<[1], [0], [0], [1], [0, 0, 1, 1], [], []>} : vector<16x16xf32>, vector<16x16xf32>, vector<16x16xf32> -> vector<16x16xf32>
    %201 = arith.addf %197, %200 : vector<16x16xf32>
    %c0_144 = arith.constant 0 : index
    %c0_145 = arith.constant 0 : index
    %c0_146 = arith.constant 0 : index
    %202 = vector.load %arg16[%c0_144, %c0_145, %c0_146] : memref<3x16x16xf32, #tpu.memory_space<vmem>>, vector<1x16x16xf32>
    %203 = vector.shape_cast %202 : vector<1x16x16xf32> to vector<16x16xf32>
    %cst_147 = arith.constant dense<0.000000e+00> : vector<16x16xf32>
    %204 = tpu.matmul %149, %203, %cst_147 {dimension_numbers = #tpu.dot_dimension_numbers<[1], [0], [0], [1], [0, 0, 1, 1], [], []>} : vector<16x16xf32>, vector<16x16xf32>, vector<16x16xf32> -> vector<16x16xf32>
    %c1_148 = arith.constant 1 : index
    %c0_149 = arith.constant 0 : index
    %c0_150 = arith.constant 0 : index
    %205 = vector.load %arg16[%c1_148, %c0_149, %c0_150] : memref<3x16x16xf32, #tpu.memory_space<vmem>>, vector<1x16x16xf32>
    %206 = vector.shape_cast %205 : vector<1x16x16xf32> to vector<16x16xf32>
    %cst_151 = arith.constant dense<0.000000e+00> : vector<16x16xf32>
    %207 = tpu.matmul %155, %206, %cst_151 {dimension_numbers = #tpu.dot_dimension_numbers<[1], [0], [0], [1], [0, 0, 1, 1], [], []>} : vector<16x16xf32>, vector<16x16xf32>, vector<16x16xf32> -> vector<16x16xf32>
    %208 = arith.addf %204, %207 : vector<16x16xf32>
    %c2_152 = arith.constant 2 : index
    %c0_153 = arith.constant 0 : index
    %c0_154 = arith.constant 0 : index
    %209 = vector.load %arg16[%c2_152, %c0_153, %c0_154] : memref<3x16x16xf32, #tpu.memory_space<vmem>>, vector<1x16x16xf32>
    %210 = vector.shape_cast %209 : vector<1x16x16xf32> to vector<16x16xf32>
    %cst_155 = arith.constant dense<0.000000e+00> : vector<16x16xf32>
    %211 = tpu.matmul %159, %210, %cst_155 {dimension_numbers = #tpu.dot_dimension_numbers<[1], [0], [0], [1], [0, 0, 1, 1], [], []>} : vector<16x16xf32>, vector<16x16xf32>, vector<16x16xf32> -> vector<16x16xf32>
    %212 = arith.addf %208, %211 : vector<16x16xf32>
    %213 = arith.addf %201, %212 : vector<16x16xf32>
    %c0_156 = arith.constant 0 : index
    %c0_157 = arith.constant 0 : index
    %214 = vector.load %arg19[%c0_156, %c0_157] : memref<1x16xf32, #tpu.memory_space<vmem>>, vector<1x16xf32>
    %215 = vector.broadcast %214 : vector<1x16xf32> to vector<16x16xf32>
    %216 = arith.addf %213, %215 : vector<16x16xf32>
    %217 = arith.negf %216 : vector<16x16xf32>
    %218 = math.exp %217 : vector<16x16xf32>
    %cst_158 = arith.constant 1.000000e+00 : f32
    %219 = vector.broadcast %cst_158 : f32 to vector<16x16xf32>
    %220 = arith.addf %219, %218 : vector<16x16xf32>
    %221 = arith.divf %219, %220 : vector<16x16xf32>
    %222 = arith.mulf %190, %149 : vector<16x16xf32>
    %cst_159 = arith.constant dense<0.000000e+00> : vector<16x16xf32>
    %223 = tpu.matmul %0, %222, %cst_159 {dimension_numbers = #tpu.dot_dimension_numbers<[1], [0], [0], [1], [0, 0, 1, 1], [], []>} : vector<16x16xf32>, vector<16x16xf32>, vector<16x16xf32> -> vector<16x16xf32>
    %cst_160 = arith.constant dense<0.000000e+00> : vector<16x16xf32>
    %224 = tpu.matmul %0, %223, %cst_160 {dimension_numbers = #tpu.dot_dimension_numbers<[1], [0], [0], [1], [0, 0, 1, 1], [], []>} : vector<16x16xf32>, vector<16x16xf32>, vector<16x16xf32> -> vector<16x16xf32>
    %cst_161 = arith.constant 2.000000e+00 : f32
    %225 = vector.broadcast %cst_161 : f32 to vector<16x16xf32>
    %226 = arith.mulf %225, %224 : vector<16x16xf32>
    %227 = arith.subf %226, %222 : vector<16x16xf32>
    %c0_162 = arith.constant 0 : index
    %c0_163 = arith.constant 0 : index
    %c0_164 = arith.constant 0 : index
    %228 = vector.load %arg14[%c0_162, %c0_163, %c0_164] : memref<3x16x16xf32, #tpu.memory_space<vmem>>, vector<1x16x16xf32>
    %229 = vector.shape_cast %228 : vector<1x16x16xf32> to vector<16x16xf32>
    %cst_165 = arith.constant dense<0.000000e+00> : vector<16x16xf32>
    %230 = tpu.matmul %144, %229, %cst_165 {dimension_numbers = #tpu.dot_dimension_numbers<[1], [0], [0], [1], [0, 0, 1, 1], [], []>} : vector<16x16xf32>, vector<16x16xf32>, vector<16x16xf32> -> vector<16x16xf32>
    %c1_166 = arith.constant 1 : index
    %c0_167 = arith.constant 0 : index
    %c0_168 = arith.constant 0 : index
    %231 = vector.load %arg14[%c1_166, %c0_167, %c0_168] : memref<3x16x16xf32, #tpu.memory_space<vmem>>, vector<1x16x16xf32>
    %232 = vector.shape_cast %231 : vector<1x16x16xf32> to vector<16x16xf32>
    %cst_169 = arith.constant dense<0.000000e+00> : vector<16x16xf32>
    %233 = tpu.matmul %150, %232, %cst_169 {dimension_numbers = #tpu.dot_dimension_numbers<[1], [0], [0], [1], [0, 0, 1, 1], [], []>} : vector<16x16xf32>, vector<16x16xf32>, vector<16x16xf32> -> vector<16x16xf32>
    %234 = arith.addf %230, %233 : vector<16x16xf32>
    %c2_170 = arith.constant 2 : index
    %c0_171 = arith.constant 0 : index
    %c0_172 = arith.constant 0 : index
    %235 = vector.load %arg14[%c2_170, %c0_171, %c0_172] : memref<3x16x16xf32, #tpu.memory_space<vmem>>, vector<1x16x16xf32>
    %236 = vector.shape_cast %235 : vector<1x16x16xf32> to vector<16x16xf32>
    %cst_173 = arith.constant dense<0.000000e+00> : vector<16x16xf32>
    %237 = tpu.matmul %154, %236, %cst_173 {dimension_numbers = #tpu.dot_dimension_numbers<[1], [0], [0], [1], [0, 0, 1, 1], [], []>} : vector<16x16xf32>, vector<16x16xf32>, vector<16x16xf32> -> vector<16x16xf32>
    %238 = arith.addf %234, %237 : vector<16x16xf32>
    %c0_174 = arith.constant 0 : index
    %c0_175 = arith.constant 0 : index
    %c0_176 = arith.constant 0 : index
    %239 = vector.load %arg17[%c0_174, %c0_175, %c0_176] : memref<3x16x16xf32, #tpu.memory_space<vmem>>, vector<1x16x16xf32>
    %240 = vector.shape_cast %239 : vector<1x16x16xf32> to vector<16x16xf32>
    %cst_177 = arith.constant dense<0.000000e+00> : vector<16x16xf32>
    %241 = tpu.matmul %222, %240, %cst_177 {dimension_numbers = #tpu.dot_dimension_numbers<[1], [0], [0], [1], [0, 0, 1, 1], [], []>} : vector<16x16xf32>, vector<16x16xf32>, vector<16x16xf32> -> vector<16x16xf32>
    %c1_178 = arith.constant 1 : index
    %c0_179 = arith.constant 0 : index
    %c0_180 = arith.constant 0 : index
    %242 = vector.load %arg17[%c1_178, %c0_179, %c0_180] : memref<3x16x16xf32, #tpu.memory_space<vmem>>, vector<1x16x16xf32>
    %243 = vector.shape_cast %242 : vector<1x16x16xf32> to vector<16x16xf32>
    %cst_181 = arith.constant dense<0.000000e+00> : vector<16x16xf32>
    %244 = tpu.matmul %223, %243, %cst_181 {dimension_numbers = #tpu.dot_dimension_numbers<[1], [0], [0], [1], [0, 0, 1, 1], [], []>} : vector<16x16xf32>, vector<16x16xf32>, vector<16x16xf32> -> vector<16x16xf32>
    %245 = arith.addf %241, %244 : vector<16x16xf32>
    %c2_182 = arith.constant 2 : index
    %c0_183 = arith.constant 0 : index
    %c0_184 = arith.constant 0 : index
    %246 = vector.load %arg17[%c2_182, %c0_183, %c0_184] : memref<3x16x16xf32, #tpu.memory_space<vmem>>, vector<1x16x16xf32>
    %247 = vector.shape_cast %246 : vector<1x16x16xf32> to vector<16x16xf32>
    %cst_185 = arith.constant dense<0.000000e+00> : vector<16x16xf32>
    %248 = tpu.matmul %227, %247, %cst_185 {dimension_numbers = #tpu.dot_dimension_numbers<[1], [0], [0], [1], [0, 0, 1, 1], [], []>} : vector<16x16xf32>, vector<16x16xf32>, vector<16x16xf32> -> vector<16x16xf32>
    %249 = arith.addf %245, %248 : vector<16x16xf32>
    %250 = arith.addf %238, %249 : vector<16x16xf32>
    %c0_186 = arith.constant 0 : index
    %c0_187 = arith.constant 0 : index
    %251 = vector.load %arg20[%c0_186, %c0_187] : memref<1x16xf32, #tpu.memory_space<vmem>>, vector<1x16xf32>
    %252 = vector.broadcast %251 : vector<1x16xf32> to vector<16x16xf32>
    %253 = arith.addf %250, %252 : vector<16x16xf32>
    %254 = math.tanh %253 : vector<16x16xf32>
    %255 = arith.mulf %221, %149 : vector<16x16xf32>
    %cst_188 = arith.constant 1.000000e+00 : f32
    %256 = vector.broadcast %cst_188 : f32 to vector<16x16xf32>
    %257 = arith.subf %256, %221 : vector<16x16xf32>
    %258 = arith.mulf %257, %254 : vector<16x16xf32>
    %259 = arith.addf %255, %258 : vector<16x16xf32>
    %c1_189 = arith.constant 1 : index
    %c0_190 = arith.constant 0 : index
    %c0_191 = arith.constant 0 : index
    %260 = vector.load %arg24[%c1_189, %c0_190, %c0_191] : memref<2x16x16xf32, #tpu.memory_space<vmem>>, vector<1x16x16xf32>
    %261 = vector.shape_cast %260 : vector<1x16x16xf32> to vector<16x16xf32>
    %262 = vector.shape_cast %259 : vector<16x16xf32> to vector<1x16x16xf32>
    tpu.vector_store %arg24[%c1_189, %c0_190, %c0_191], %262 {strides = array<i32>} : memref<2x16x16xf32, #tpu.memory_space<vmem>>, vector<1x16x16xf32>,
    %c0_192 = arith.constant 0 : index
    %c0_193 = arith.constant 0 : index
    %263 = vector.load %arg21[%c0_192, %c0_193] : memref<1x16xf32, #tpu.memory_space<vmem>>, vector<1x16xf32>
    %264 = vector.broadcast %263 : vector<1x16xf32> to vector<16x16xf32>
    %265 = arith.mulf %259, %264 : vector<16x16xf32>
    %cst_194 = arith.constant dense<0.000000e+00> : vector<16xf32>
    %266 = vector.multi_reduction <add>, %265, %cst_194 [1] : vector<16x16xf32> to vector<16xf32>
    %267 = vector.shape_cast %266 : vector<16xf32> to vector<16x1xf32>
    %c0_195 = arith.constant 0 : index
    %c0_196 = arith.constant 0 : index
    %268 = vector.load %arg22[%c0_195, %c0_196] : memref<1x1xf32, #tpu.memory_space<vmem>>, vector<1x1xf32>
    %269 = vector.broadcast %268 : vector<1x1xf32> to vector<16x1xf32>
    %270 = arith.addf %267, %269 : vector<16x1xf32>
    %c0_197 = arith.constant 0 : index
    %c0_198 = arith.constant 0 : index
    %271 = vector.load %arg23[%c0_197, %c0_198] : memref<16x1xf32, #tpu.memory_space<vmem>>, vector<16x1xf32>
    tpu.vector_store %arg23[%c0_197, %c0_198], %270 {strides = array<i32>} : memref<16x1xf32, #tpu.memory_space<vmem>>, vector<16x1xf32>,
    return
  }
}

</mosaic_0001>

<llo_original>
// kernel: decoder_forward.1
$region0: #{decoder_forward.1}
  #allocation0 [shape = 'u32[]', space=smem, size = 0x4, offset = 0x4, fixed_abs, tag = 'smem constant byte address 0x4 - core index']
  #allocation1 [shape = 'u32[144,128]{1,0:T(1,128)}', space=vmem, size = 0x12000, scoped, tag = 'internal scratch']
  #allocation2 [shape = 'f32[1,1]{1,0:T(1,128)S(1)}', space=vmem, size = 0x200, scoped, tag = 'scoped memory for decoder_forward.1']
  %s0 = inlined_call_operand.vmem [shape: f32[16,1], index: 0, kind: input, shape index: {}]
  %s1 = inlined_call_operand.vmem [shape: f32[2,16,16], index: 1, kind: input, shape index: {}]
  %s2 = inlined_call_operand.vmem [shape: f32[16,16], index: 2, kind: input, shape index: {}]
  %s3 = inlined_call_operand.hbm [shape: f32[3,1,16], index: 3, kind: input, shape index: {}]
  %s4 = inlined_call_operand.hbm [shape: f32[3,1,16], index: 4, kind: input, shape index: {}]
  %s5 = inlined_call_operand.hbm [shape: f32[3,1,16], index: 5, kind: input, shape index: {}]
  %s6 = inlined_call_operand.vmem [shape: f32[3,16,16], index: 6, kind: input, shape index: {}]
  %s7 = inlined_call_operand.hbm [shape: f32[3,16,16], index: 7, kind: input, shape index: {}]
  %s8 = inlined_call_operand.hbm [shape: f32[3,16,16], index: 8, kind: input, shape index: {}]
  %s9 = inlined_call_operand.vmem [shape: f32[1,16], index: 9, kind: input, shape index: {}]
  %s10 = inlined_call_operand.vmem [shape: f32[1,16], index: 10, kind: input, shape index: {}]
  %s11 = inlined_call_operand.hbm [shape: f32[1,16], index: 11, kind: input, shape index: {}]
  %s12 = inlined_call_operand.vmem [shape: f32[3,16,16], index: 12, kind: input, shape index: {}]
  %s13 = inlined_call_operand.hbm [shape: f32[3,16,16], index: 13, kind: input, shape index: {}]
  %s14 = inlined_call_operand.hbm [shape: f32[3,16,16], index: 14, kind: input, shape index: {}]
  %s15 = inlined_call_operand.hbm [shape: f32[3,16,16], index: 15, kind: input, shape index: {}]
  %s16 = inlined_call_operand.hbm [shape: f32[3,16,16], index: 16, kind: input, shape index: {}]
  %s17 = inlined_call_operand.hbm [shape: f32[3,16,16], index: 17, kind: input, shape index: {}]
  %s18 = inlined_call_operand.hbm [shape: f32[1,16], index: 18, kind: input, shape index: {}]
  %s19 = inlined_call_operand.hbm [shape: f32[1,16], index: 19, kind: input, shape index: {}]
  %s20 = inlined_call_operand.hbm [shape: f32[1,16], index: 20, kind: input, shape index: {}]
  %s21 = inlined_call_operand.vmem [shape: f32[1,16], index: 21, kind: input, shape index: {}]
  %s22 = inlined_call_operand.<no memory space> [shape: f32[1,1], index: 22, kind: input, shape index: {}]
  %s23 = inlined_call_operand.vmem [shape: f32[16,1], index: 23, kind: output, shape index: {0}]
  %s24 = inlined_call_operand.vmem [shape: f32[2,16,16], index: 24, kind: output, shape index: {1}]
  %25 = xla_tuple %s23, %s24
  %s26 = sld [smem:[#allocation0]]
  $region166: #{decoder_forward.1} parent=0
    _
  %s28 = ssub.s32 1, %s26
  %s29 = scalar_select 0, %s28, %s26
  %v30 = vstv %s22
  %31 = vst [vmem:[#allocation2] sm:$0x1] %v30
  $region1: #{decoder_forward.1} parent=0
    #allocation3 [shape = 'u8[1536]{0}', space=vmem, size = 0x800, scoped, tag = 'input window, operand 3, single buffered']
    #allocation4 [shape = 's32[1]{0}', space=sflag, size = 0x4, scoped, tag = 'scoped memory for decoder_forward.1']
    #allocation5 [shape = 'u8[1536]{0}', space=vmem, size = 0x800, scoped, tag = 'input window, operand 4, single buffered']
    #allocation6 [shape = 's32[1]{0}', space=sflag, size = 0x4, scoped, tag = 'scoped memory for decoder_forward.1']
    #allocation7 [shape = 'u8[1536]{0}', space=vmem, size = 0x800, scoped, tag = 'input window, operand 5, single buffered']
    #allocation8 [shape = 'u8[24576]{0}', space=vmem, size = 0x6000, scoped, tag = 'input window, operand 7, single buffered']
    #allocation9 [shape = 's32[1]{0}', space=sflag, size = 0x4, scoped, tag = 'scoped memory for decoder_forward.1']
    #allocation10 [shape = 'u8[24576]{0}', space=vmem, size = 0x6000, scoped, tag = 'input window, operand 8, single buffered']
    #allocation11 [shape = 'u8[512]{0}', space=vmem, size = 0x400, scoped, tag = 'input window, operand 11, single buffered']
    #allocation12 [shape = 's32[1]{0}', space=sflag, size = 0x4, scoped, tag = 'scoped memory for decoder_forward.1']
    #allocation13 [shape = 'u8[24576]{0}', space=vmem, size = 0x6000, scoped, tag = 'input window, operand 13, single buffered']
    #allocation14 [shape = 'u8[24576]{0}', space=vmem, size = 0x6000, scoped, tag = 'input window, operand 14, single buffered']
    #allocation15 [shape = 's32[1]{0}', space=sflag, size = 0x4, scoped, tag = 'scoped memory for decoder_forward.1']
    #allocation16 [shape = 'u8[24576]{0}', space=vmem, size = 0x6000, scoped, tag = 'input window, operand 15, single buffered']
    #allocation17 [shape = 'u8[24576]{0}', space=vmem, size = 0x6000, scoped, tag = 'input window, operand 16, single buffered']
    #allocation18 [shape = 's32[1]{0}', space=sflag, size = 0x4, scoped, tag = 'scoped memory for decoder_forward.1']
    #allocation19 [shape = 'u8[24576]{0}', space=vmem, size = 0x6000, scoped, tag = 'input window, operand 17, single buffered']
    #allocation20 [shape = 'u8[512]{0}', space=vmem, size = 0x400, scoped, tag = 'input window, operand 18, single buffered']
    #allocation21 [shape = 's32[1]{0}', space=sflag, size = 0x4, scoped, tag = 'scoped memory for decoder_forward.1']
    #allocation22 [shape = 'u8[512]{0}', space=vmem, size = 0x400, scoped, tag = 'input window, operand 19, single buffered']
    #allocation23 [shape = 'u8[512]{0}', space=vmem, size = 0x400, scoped, tag = 'input window, operand 20, single buffered']
    #allocation24 [shape = 's32[1]{0}', space=sflag, size = 0x4, scoped, tag = 'scoped memory for decoder_forward.1']
    %32 = vsyncpa [#allocation4], 0
    %33 = vsyncpa [#allocation6], 0
    %34 = vsyncpa [#allocation9], 0
    %35 = vsyncpa [#allocation12], 0
    %36 = vsyncpa [#allocation15], 0
    %37 = vsyncpa [#allocation18], 0
    %38 = vsyncpa [#allocation21], 0
    %39 = vsyncpa [#allocation24], 0
    // Predicated region
    $region2: #{decoder_forward.1} parent=1 // pred_check
      _
    $region3: #{decoder_forward.1} parent=1 // pred_check_branch
      %41 = sbr.rel (0) target = $region5
    $region4: #{decoder_forward.1} parent=1 // pred_region
      _
    $region5: #{decoder_forward.1} parent=1 // pred_fallthru
      _
    // Predicated region
    $region6: #{decoder_forward.1} parent=1 // pred_check
      _
    $region7: #{decoder_forward.1} parent=1 // pred_check_branch
      %43 = sbr.rel (0) target = $region9
    $region8: #{decoder_forward.1} parent=1 // pred_region
      _
    $region9: #{decoder_forward.1} parent=1 // pred_fallthru
      _
    // Predicated region
    $region10: #{decoder_forward.1} parent=1 // pred_check
      _
    $region11: #{decoder_forward.1} parent=1 // pred_check_branch
      %45 = sbr.rel (0) target = $region13
    $region12: #{decoder_forward.1} parent=1 // pred_region
      _
    $region13: #{decoder_forward.1} parent=1 // pred_fallthru
      _
    // Predicated region
    $region14: #{decoder_forward.1} parent=1 // pred_check
      _
    $region15: #{decoder_forward.1} parent=1 // pred_check_branch
      %47 = sbr.rel (0) target = $region17
    $region16: #{decoder_forward.1} parent=1 // pred_region
      %s49 = ssub.s32 48, 48
      %50 = vsyncadd [#allocation4], %s49
      %s51 = sshll.u32 [#allocation3], 4
      %s52 = int_to_ptr.vmem [resolvable:$true] %s51
      %57 = dma.hbm_to_vmem [thread:$0]  %s3, 48, %s52, [#allocation4], 16, 16, 1
    $region17: #{decoder_forward.1} parent=1 // pred_fallthru
      _
    // Predicated region
    $region18: #{decoder_forward.1} parent=1 // pred_check
      _
    $region19: #{decoder_forward.1} parent=1 // pred_check_branch
      %59 = sbr.rel (0) target = $region21
    $region20: #{decoder_forward.1} parent=1 // pred_region
      %s61 = ssub.s32 48, 48
      %62 = vsyncadd [#allocation6], %s61
      %s63 = sshll.u32 [#allocation5], 4
      %s64 = int_to_ptr.vmem [resolvable:$true] %s63
      %69 = dma.hbm_to_vmem [thread:$0]  %s4, 48, %s64, [#allocation6], 16, 16, 1
    $region21: #{decoder_forward.1} parent=1 // pred_fallthru
      _
    // Predicated region
    $region22: #{decoder_forward.1} parent=1 // pred_check
      _
    $region23: #{decoder_forward.1} parent=1 // pred_check_branch
      %71 = sbr.rel (0) target = $region25
    $region24: #{decoder_forward.1} parent=1 // pred_region
      %s73 = ssub.s32 48, 48
      %74 = vsyncadd [#allocation6], %s73
      %s75 = sshll.u32 [#allocation7], 4
      %s76 = int_to_ptr.vmem [resolvable:$true] %s75
      %81 = dma.hbm_to_vmem [thread:$0]  %s5, 48, %s76, [#allocation6], 16, 16, 1
    $region25: #{decoder_forward.1} parent=1 // pred_fallthru
      _
    // Predicated region
    $region26: #{decoder_forward.1} parent=1 // pred_check
      _
    $region27: #{decoder_forward.1} parent=1 // pred_check_branch
      %83 = sbr.rel (0) target = $region29
    $region28: #{decoder_forward.1} parent=1 // pred_region
      _
    $region29: #{decoder_forward.1} parent=1 // pred_fallthru
      _
    // Predicated region
    $region30: #{decoder_forward.1} parent=1 // pred_check
      _
    $region31: #{decoder_forward.1} parent=1 // pred_check_branch
      %85 = sbr.rel (0) target = $region33
    $region32: #{decoder_forward.1} parent=1 // pred_region
      %s87 = ssub.s32 768, 768
      %88 = vsyncadd [#allocation9], %s87
      %s89 = sshll.u32 [#allocation8], 4
      %s90 = int_to_ptr.vmem [resolvable:$true] %s89
      %95 = dma.hbm_to_vmem [thread:$0]  %s7, 768, %s90, [#allocation9], 128, 128, 8
    $region33: #{decoder_forward.1} parent=1 // pred_fallthru
      _
    // Predicated region
    $region34: #{decoder_forward.1} parent=1 // pred_check
      _
    $region35: #{decoder_forward.1} parent=1 // pred_check_branch
      %97 = sbr.rel (0) target = $region37
    $region36: #{decoder_forward.1} parent=1 // pred_region
      %s99 = ssub.s32 768, 768
      %100 = vsyncadd [#allocation9], %s99
      %s101 = sshll.u32 [#allocation10], 4
      %s102 = int_to_ptr.vmem [resolvable:$true] %s101
      %107 = dma.hbm_to_vmem [thread:$0]  %s8, 768, %s102, [#allocation9], 128, 128, 8
    $region37: #{decoder_forward.1} parent=1 // pred_fallthru
      _
    // Predicated region
    $region38: #{decoder_forward.1} parent=1 // pred_check
      _
    $region39: #{decoder_forward.1} parent=1 // pred_check_branch
      %109 = sbr.rel (0) target = $region41
    $region40: #{decoder_forward.1} parent=1 // pred_region
      _
    $region41: #{decoder_forward.1} parent=1 // pred_fallthru
      _
    // Predicated region
    $region42: #{decoder_forward.1} parent=1 // pred_check
      _
    $region43: #{decoder_forward.1} parent=1 // pred_check_branch
      %111 = sbr.rel (0) target = $region45
    $region44: #{decoder_forward.1} parent=1 // pred_region
      _
    $region45: #{decoder_forward.1} parent=1 // pred_fallthru
      _
    // Predicated region
    $region46: #{decoder_forward.1} parent=1 // pred_check
      _
    $region47: #{decoder_forward.1} parent=1 // pred_check_branch
      %113 = sbr.rel (0) target = $region49
    $region48: #{decoder_forward.1} parent=1 // pred_region
      %s115 = ssub.s32 16, 16
      %116 = vsyncadd [#allocation12], %s115
      %s118 = sshll.u32 [#allocation11], 4
      %s119 = int_to_ptr.vmem [resolvable:$true] %s118
      %121 = dma.hbm_to_vmem [thread:$0]  %s11, 16, %s119, [#allocation12]
    $region49: #{decoder_forward.1} parent=1 // pred_fallthru
      _
    // Predicated region
    $region50: #{decoder_forward.1} parent=1 // pred_check
      _
    $region51: #{decoder_forward.1} parent=1 // pred_check_branch
      %123 = sbr.rel (0) target = $region53
    $region52: #{decoder_forward.1} parent=1 // pred_region
      _
    $region53: #{decoder_forward.1} parent=1 // pred_fallthru
      _
    // Predicated region
    $region54: #{decoder_forward.1} parent=1 // pred_check
      _
    $region55: #{decoder_forward.1} parent=1 // pred_check_branch
      %125 = sbr.rel (0) target = $region57
    $region56: #{decoder_forward.1} parent=1 // pred_region
      %s127 = ssub.s32 768, 768
      %128 = vsyncadd [#allocation12], %s127
      %s129 = sshll.u32 [#allocation13], 4
      %s130 = int_to_ptr.vmem [resolvable:$true] %s129
      %135 = dma.hbm_to_vmem [thread:$0]  %s13, 768, %s130, [#allocation12], 128, 128, 8
    $region57: #{decoder_forward.1} parent=1 // pred_fallthru
      _
    // Predicated region
    $region58: #{decoder_forward.1} parent=1 // pred_check
      _
    $region59: #{decoder_forward.1} parent=1 // pred_check_branch
      %137 = sbr.rel (0) target = $region61
    $region60: #{decoder_forward.1} parent=1 // pred_region
      %s139 = ssub.s32 768, 768
      %140 = vsyncadd [#allocation15], %s139
      %s141 = sshll.u32 [#allocation14], 4
      %s142 = int_to_ptr.vmem [resolvable:$true] %s141
      %147 = dma.hbm_to_vmem [thread:$0]  %s14, 768, %s142, [#allocation15], 128, 128, 8
    $region61: #{decoder_forward.1} parent=1 // pred_fallthru
      _
    // Predicated region
    $region62: #{decoder_forward.1} parent=1 // pred_check
      _
    $region63: #{decoder_forward.1} parent=1 // pred_check_branch
      %149 = sbr.rel (0) target = $region65
    $region64: #{decoder_forward.1} parent=1 // pred_region
      %s151 = ssub.s32 768, 768
      %152 = vsyncadd [#allocation15], %s151
      %s153 = sshll.u32 [#allocation16], 4
      %s154 = int_to_ptr.vmem [resolvable:$true] %s153
      %159 = dma.hbm_to_vmem [thread:$0]  %s15, 768, %s154, [#allocation15], 128, 128, 8
    $region65: #{decoder_forward.1} parent=1 // pred_fallthru
      _
    // Predicated region
    $region66: #{decoder_forward.1} parent=1 // pred_check
      _
    $region67: #{decoder_forward.1} parent=1 // pred_check_branch
      %161 = sbr.rel (0) target = $region69
    $region68: #{decoder_forward.1} parent=1 // pred_region
      %s163 = ssub.s32 768, 768
      %164 = vsyncadd [#allocation18], %s163
      %s165 = sshll.u32 [#allocation17], 4
      %s166 = int_to_ptr.vmem [resolvable:$true] %s165
      %171 = dma.hbm_to_vmem [thread:$0]  %s16, 768, %s166, [#allocation18], 128, 128, 8
    $region69: #{decoder_forward.1} parent=1 // pred_fallthru
      _
    // Predicated region
    $region70: #{decoder_forward.1} parent=1 // pred_check
      _
    $region71: #{decoder_forward.1} parent=1 // pred_check_branch
      %173 = sbr.rel (0) target = $region73
    $region72: #{decoder_forward.1} parent=1 // pred_region
      %s175 = ssub.s32 768, 768
      %176 = vsyncadd [#allocation18], %s175
      %s177 = sshll.u32 [#allocation19], 4
      %s178 = int_to_ptr.vmem [resolvable:$true] %s177
      %183 = dma.hbm_to_vmem [thread:$0]  %s17, 768, %s178, [#allocation18], 128, 128, 8
    $region73: #{decoder_forward.1} parent=1 // pred_fallthru
      _
    // Predicated region
    $region74: #{decoder_forward.1} parent=1 // pred_check
      _
    $region75: #{decoder_forward.1} parent=1 // pred_check_branch
      %185 = sbr.rel (0) target = $region77
    $region76: #{decoder_forward.1} parent=1 // pred_region
      %s187 = ssub.s32 16, 16
      %188 = vsyncadd [#allocation21], %s187
      %s190 = sshll.u32 [#allocation20], 4
      %s191 = int_to_ptr.vmem [resolvable:$true] %s190
      %193 = dma.hbm_to_vmem [thread:$0]  %s18, 16, %s191, [#allocation21]
    $region77: #{decoder_forward.1} parent=1 // pred_fallthru
      _
    // Predicated region
    $region78: #{decoder_forward.1} parent=1 // pred_check
      _
    $region79: #{decoder_forward.1} parent=1 // pred_check_branch
      %195 = sbr.rel (0) target = $region81
    $region80: #{decoder_forward.1} parent=1 // pred_region
      %s197 = ssub.s32 16, 16
      %198 = vsyncadd [#allocation21], %s197
      %s200 = sshll.u32 [#allocation22], 4
      %s201 = int_to_ptr.vmem [resolvable:$true] %s200
      %203 = dma.hbm_to_vmem [thread:$0]  %s19, 16, %s201, [#allocation21]
    $region81: #{decoder_forward.1} parent=1 // pred_fallthru
      _
    // Predicated region
    $region82: #{decoder_forward.1} parent=1 // pred_check
      _
    $region83: #{decoder_forward.1} parent=1 // pred_check_branch
      %205 = sbr.rel (0) target = $region85
    $region84: #{decoder_forward.1} parent=1 // pred_region
      %s207 = ssub.s32 16, 16
      %208 = vsyncadd [#allocation24], %s207
      %s210 = sshll.u32 [#allocation23], 4
      %s211 = int_to_ptr.vmem [resolvable:$true] %s210
      %213 = dma.hbm_to_vmem [thread:$0]  %s20, 16, %s211, [#allocation24]
    $region85: #{decoder_forward.1} parent=1 // pred_fallthru
      _
    // Predicated region
    $region86: #{decoder_forward.1} parent=1 // pred_check
      _
    $region87: #{decoder_forward.1} parent=1 // pred_check_branch
      %215 = sbr.rel (0) target = $region89
    $region88: #{decoder_forward.1} parent=1 // pred_region
      _
    $region89: #{decoder_forward.1} parent=1 // pred_fallthru
      _
    // Predicated region
    $region90: #{decoder_forward.1} parent=1 // pred_check
      _
    $region91: #{decoder_forward.1} parent=1 // pred_check_branch
      %217 = sbr.rel (0) target = $region93
    $region92: #{decoder_forward.1} parent=1 // pred_region
      _
    $region93: #{decoder_forward.1} parent=1 // pred_fallthru
      _
    // Predicated region
    $region94: #{decoder_forward.1} parent=1 // pred_check
      _
    $region95: #{decoder_forward.1} parent=1 // pred_check_branch
      %219 = sbr.rel (0) target = $region97
    $region96: #{decoder_forward.1} parent=1 // pred_region
      %220 = dma.done [#allocation4], 48
    $region97: #{decoder_forward.1} parent=1 // pred_fallthru
      _
    // Predicated region
    $region98: #{decoder_forward.1} parent=1 // pred_check
      _
    $region99: #{decoder_forward.1} parent=1 // pred_check_branch
      %222 = sbr.rel (0) target = $region101
    $region100: #{decoder_forward.1} parent=1 // pred_region
      %223 = dma.done [#allocation6], 48
    $region101: #{decoder_forward.1} parent=1 // pred_fallthru
      _
    // Predicated region
    $region102: #{decoder_forward.1} parent=1 // pred_check
      _
    $region103: #{decoder_forward.1} parent=1 // pred_check_branch
      %225 = sbr.rel (0) target = $region105
    $region104: #{decoder_forward.1} parent=1 // pred_region
      %226 = dma.done [#allocation6], 48
    $region105: #{decoder_forward.1} parent=1 // pred_fallthru
      _
    // Predicated region
    $region106: #{decoder_forward.1} parent=1 // pred_check
      _
    $region107: #{decoder_forward.1} parent=1 // pred_check_branch
      %228 = sbr.rel (0) target = $region109
    $region108: #{decoder_forward.1} parent=1 // pred_region
      %229 = dma.done [#allocation9], 768
    $region109: #{decoder_forward.1} parent=1 // pred_fallthru
      _
    // Predicated region
    $region110: #{decoder_forward.1} parent=1 // pred_check
      _
    $region111: #{decoder_forward.1} parent=1 // pred_check_branch
      %231 = sbr.rel (0) target = $region113
    $region112: #{decoder_forward.1} parent=1 // pred_region
      %232 = dma.done [#allocation9], 768
    $region113: #{decoder_forward.1} parent=1 // pred_fallthru
      _
    // Predicated region
    $region114: #{decoder_forward.1} parent=1 // pred_check
      _
    $region115: #{decoder_forward.1} parent=1 // pred_check_branch
      %234 = sbr.rel (0) target = $region117
    $region116: #{decoder_forward.1} parent=1 // pred_region
      %235 = dma.done [#allocation12], 16
    $region117: #{decoder_forward.1} parent=1 // pred_fallthru
      _
    // Predicated region
    $region118: #{decoder_forward.1} parent=1 // pred_check
      _
    $region119: #{decoder_forward.1} parent=1 // pred_check_branch
      %237 = sbr.rel (0) target = $region121
    $region120: #{decoder_forward.1} parent=1 // pred_region
      %238 = dma.done [#allocation12], 768
    $region121: #{decoder_forward.1} parent=1 // pred_fallthru
      _
    // Predicated region
    $region122: #{decoder_forward.1} parent=1 // pred_check
      _
    $region123: #{decoder_forward.1} parent=1 // pred_check_branch
      %240 = sbr.rel (0) target = $region125
    $region124: #{decoder_forward.1} parent=1 // pred_region
      %241 = dma.done [#allocation15], 768
    $region125: #{decoder_forward.1} parent=1 // pred_fallthru
      _
    // Predicated region
    $region126: #{decoder_forward.1} parent=1 // pred_check
      _
    $region127: #{decoder_forward.1} parent=1 // pred_check_branch
      %243 = sbr.rel (0) target = $region129
    $region128: #{decoder_forward.1} parent=1 // pred_region
      %244 = dma.done [#allocation15], 768
    $region129: #{decoder_forward.1} parent=1 // pred_fallthru
      _
    // Predicated region
    $region130: #{decoder_forward.1} parent=1 // pred_check
      _
    $region131: #{decoder_forward.1} parent=1 // pred_check_branch
      %246 = sbr.rel (0) target = $region133
    $region132: #{decoder_forward.1} parent=1 // pred_region
      %247 = dma.done [#allocation18], 768
    $region133: #{decoder_forward.1} parent=1 // pred_fallthru
      _
    // Predicated region
    $region134: #{decoder_forward.1} parent=1 // pred_check
      _
    $region135: #{decoder_forward.1} parent=1 // pred_check_branch
      %249 = sbr.rel (0) target = $region137
    $region136: #{decoder_forward.1} parent=1 // pred_region
      %250 = dma.done [#allocation18], 768
    $region137: #{decoder_forward.1} parent=1 // pred_fallthru
      _
    // Predicated region
    $region138: #{decoder_forward.1} parent=1 // pred_check
      _
    $region139: #{decoder_forward.1} parent=1 // pred_check_branch
      %252 = sbr.rel (0) target = $region141
    $region140: #{decoder_forward.1} parent=1 // pred_region
      %253 = dma.done [#allocation21], 16
    $region141: #{decoder_forward.1} parent=1 // pred_fallthru
      _
    // Predicated region
    $region142: #{decoder_forward.1} parent=1 // pred_check
      _
    $region143: #{decoder_forward.1} parent=1 // pred_check_branch
      %255 = sbr.rel (0) target = $region145
    $region144: #{decoder_forward.1} parent=1 // pred_region
      %256 = dma.done [#allocation21], 16
    $region145: #{decoder_forward.1} parent=1 // pred_fallthru
      _
    // Predicated region
    $region146: #{decoder_forward.1} parent=1 // pred_check
      _
    $region147: #{decoder_forward.1} parent=1 // pred_check_branch
      %258 = sbr.rel (0) target = $region149
    $region148: #{decoder_forward.1} parent=1 // pred_region
      %259 = dma.done [#allocation24], 16
    $region149: #{decoder_forward.1} parent=1 // pred_fallthru
      _
    %v260 = vld [vmem:[%s2] sm:$0xff]
    %v261 = vld [vmem:[%s2 + $0x8] sm:$0xff]
    %v262 = vld [vmem:[%s0] sm:$0xff]
    %v263 = vld [vmem:[%s0 + $0x8] sm:$0xff]
    %v264 = vld [vmem:[%s1] sm:$0xff]
    %v265 = vld [vmem:[%s1 + $0x8] sm:$0xff]
    %vm266 = vcmask 130048
    %v268 = vsel %vm266, %v260, 0
    %v271 = vsel %vm266, %v261, 0
    %273 = vmatprep.subr.mxu0 0.0
    %274 = vmatpush1.msra.mxu0 %v264
    %275 = vmatprep.subr.mxu0 0.0
    %276 = vmatpush1.msra.mxu0 %v265
    %277 = vmatprep.subr.mxu0 0.0
    %278 = vmatpush1.msra.mxu0 0.0
    %279 = vmatprep.subr.mxu0 0.0
    %280 = vmatpush1.msra.mxu0 0.0
    %281 = vmatprep.subr.mxu0 0.0
    %282 = vmatpush1.msra.mxu0 0.0
    %283 = vmatprep.subr.mxu0 0.0
    %284 = vmatpush1.msra.mxu0 0.0
    %285 = vmatprep.subr.mxu0 0.0
    %286 = vmatpush1.msra.mxu0 0.0
    %287 = vmatprep.subr.mxu0 0.0
    %288 = vmatpush1.msra.mxu0 0.0
    %289 = vmatprep.subr.mxu0 0.0
    %290 = vmatpush1.msra.mxu0 0.0
    %291 = vmatprep.subr.mxu0 0.0
    %292 = vmatpush1.msra.mxu0 0.0
    %293 = vmatprep.subr.mxu0 0.0
    %294 = vmatpush1.msra.mxu0 0.0
    %295 = vmatprep.subr.mxu0 0.0
    %296 = vmatpush1.msra.mxu0 0.0
    %297 = vmatprep.subr.mxu0 0.0
    %298 = vmatpush1.msra.mxu0 0.0
    %299 = vmatprep.subr.mxu0 0.0
    %300 = vmatpush1.msra.mxu0 0.0
    %301 = vmatprep.subr.mxu0 0.0
    %302 = vmatpush1.msra.mxu0 0.0
    %303 = vmatprep.subr.mxu0 0.0
    %304 = vmatpush1.msra.mxu0 0.0
    %305 = vmatprep.subr.mxu0 0.0
    %306 = vmatpush1.msra.mxu0 0.0
    %307 = vmatprep.subr.mxu0 0.0
    %308 = vmatpush1.msra.mxu0 0.0
    %309 = vmatprep.subr.mxu0 0.0
    %310 = vmatpush1.msra.mxu0 0.0
    %311 = vmatprep.subr.mxu0 0.0
    %312 = vmatpush1.msra.mxu0 0.0
    %313 = vmatprep.subr.mxu0 0.0
    %314 = vmatpush1.msra.mxu0 0.0
    %315 = vmatprep.subr.mxu0 0.0
    %316 = vmatpush1.msra.mxu0 0.0
    %317 = vmatprep.subr.mxu0 0.0
    %318 = vmatpush1.msra.mxu0 0.0
    %319 = vmatprep.subr.mxu0 0.0
    %320 = vmatpush1.msra.mxu0 0.0
    %321 = vmatprep.subr.mxu0 0.0
    %322 = vmatpush1.msra.mxu0 0.0
    %323 = vmatprep.subr.mxu0 0.0
    %324 = vmatpush1.msra.mxu0 0.0
    %325 = vmatprep.subr.mxu0 0.0
    %326 = vmatpush1.msra.mxu0 0.0
    %327 = vmatprep.subr.mxu0 0.0
    %328 = vmatpush1.msra.mxu0 0.0
    %329 = vmatprep.subr.mxu0 0.0
    %330 = vmatpush1.msra.mxu0 0.0
    %331 = vmatprep.subr.mxu0 0.0
    %332 = vmatpush1.msra.mxu0 0.0
    %333 = vmatprep.subr.mxu0 0.0
    %334 = vmatpush1.msra.mxu0 0.0
    %335 = vmatprep.subr.mxu0 0.0
    %336 = vmatpush1.msra.mxu0 0.0
    %337 = vmatprep.mubr.f32.mxu0 0.0
    %338 = vmatmul.mubr.f32.gmra.mrb[0].mxu0 %v268
    %v339 = vpop.f32.mrb[0].mxu0
    %v340 = vadd.f32 0.0, %v339
    %v341 = vpop.f32.mrb[0].mxu0
    %342 = vmatprep.mubr.f32.mxu0 0.0
    %343 = vmatmul.mubr.f32.gmra.mrb[0].mxu0 %v271
    %v344 = vpop.f32.mrb[0].mxu0
    %v345 = vadd.f32 0.0, %v344
    %v346 = vpop.f32.mrb[0].mxu0
    %347 = vdwg.mxu0
    %348 = vmatprep.subr.mxu0 0.0
    %349 = vmatpush1.msra.mxu0 %v340
    %350 = vmatprep.subr.mxu0 0.0
    %351 = vmatpush1.msra.mxu0 %v345
    %352 = vmatprep.subr.mxu0 0.0
    %353 = vmatpush1.msra.mxu0 0.0
    %354 = vmatprep.subr.mxu0 0.0
    %355 = vmatpush1.msra.mxu0 0.0
    %356 = vmatprep.subr.mxu0 0.0
    %357 = vmatpush1.msra.mxu0 0.0
    %358 = vmatprep.subr.mxu0 0.0
    %359 = vmatpush1.msra.mxu0 0.0
    %360 = vmatprep.subr.mxu0 0.0
    %361 = vmatpush1.msra.mxu0 0.0
    %362 = vmatprep.subr.mxu0 0.0
    %363 = vmatpush1.msra.mxu0 0.0
    %364 = vmatprep.subr.mxu0 0.0
    %365 = vmatpush1.msra.mxu0 0.0
    %366 = vmatprep.subr.mxu0 0.0
    %367 = vmatpush1.msra.mxu0 0.0
    %368 = vmatprep.subr.mxu0 0.0
    %369 = vmatpush1.msra.mxu0 0.0
    %370 = vmatprep.subr.mxu0 0.0
    %371 = vmatpush1.msra.mxu0 0.0
    %372 = vmatprep.subr.mxu0 0.0
    %373 = vmatpush1.msra.mxu0 0.0
    %374 = vmatprep.subr.mxu0 0.0
    %375 = vmatpush1.msra.mxu0 0.0
    %376 = vmatprep.subr.mxu0 0.0
    %377 = vmatpush1.msra.mxu0 0.0
    %378 = vmatprep.subr.mxu0 0.0
    %379 = vmatpush1.msra.mxu0 0.0
    %380 = vmatprep.subr.mxu0 0.0
    %381 = vmatpush1.msra.mxu0 0.0
    %382 = vmatprep.subr.mxu0 0.0
    %383 = vmatpush1.msra.mxu0 0.0
    %384 = vmatprep.subr.mxu0 0.0
    %385 = vmatpush1.msra.mxu0 0.0
    %386 = vmatprep.subr.mxu0 0.0
    %387 = vmatpush1.msra.mxu0 0.0
    %388 = vmatprep.subr.mxu0 0.0
    %389 = vmatpush1.msra.mxu0 0.0
    %390 = vmatprep.subr.mxu0 0.0
    %391 = vmatpush1.msra.mxu0 0.0
    %392 = vmatprep.subr.mxu0 0.0
    %393 = vmatpush1.msra.mxu0 0.0
    %394 = vmatprep.subr.mxu0 0.0
    %395 = vmatpush1.msra.mxu0 0.0
    %396 = vmatprep.subr.mxu0 0.0
    %397 = vmatpush1.msra.mxu0 0.0
    %398 = vmatprep.subr.mxu0 0.0
    %399 = vmatpush1.msra.mxu0 0.0
    %400 = vmatprep.subr.mxu0 0.0
    %401 = vmatpush1.msra.mxu0 0.0
    %402 = vmatprep.subr.mxu0 0.0
    %403 = vmatpush1.msra.mxu0 0.0
    %404 = vmatprep.subr.mxu0 0.0
    %405 = vmatpush1.msra.mxu0 0.0
    %406 = vmatprep.subr.mxu0 0.0
    %407 = vmatpush1.msra.mxu0 0.0
    %408 = vmatprep.subr.mxu0 0.0
    %409 = vmatpush1.msra.mxu0 0.0
    %410 = vmatprep.subr.mxu0 0.0
    %411 = vmatpush1.msra.mxu0 0.0
    %412 = vmatprep.mubr.f32.mxu0 0.0
    %413 = vmatmul.mubr.f32.gmra.mrb[0].mxu0 %v268
    %v414 = vpop.f32.mrb[0].mxu0
    %v415 = vadd.f32 0.0, %v414
    %v416 = vpop.f32.mrb[0].mxu0
    %417 = vmatprep.mubr.f32.mxu0 0.0
    %418 = vmatmul.mubr.f32.gmra.mrb[0].mxu0 %v271
    %v419 = vpop.f32.mrb[0].mxu0
    %v420 = vadd.f32 0.0, %v419
    %v421 = vpop.f32.mrb[0].mxu0
    %422 = vdwg.mxu0
    %v423 = vmul.f32 %v415, 2.0
    %v424 = vmul.f32 %v420, 2.0
    %v425 = vsub.f32 %v423, %v264
    %v426 = vsub.f32 %v424, %v265
    %v427 = vld [vmem:[#allocation3] sm:$0x1]
    %429 = vset.pattern.permute.xlu0 0
    %430 = vperm.xlu0 %429, %v262
    %v431 = vpop.permute.xlu0 %430
    %434 = vset.pattern.permute.xlu0 0
    %435 = vperm.xlu0 %434, %v263
    %v436 = vpop.permute.xlu0 %435
    %v439 = vlaneseq
    %v440 = vshrl.u32 %v439, 7
    %v441 = vsub.s32 0, %v440
    %v442 = vrot.slane %v427, %v441
    %v444 = vmul.f32 %v431, %v442
    %v445 = vmul.f32 %v436, %v442
    %s446 = scalar_lea.vmem [#allocation3], 1
    %v447 = vld [vmem:[%s446] sm:$0x1]
    %v449 = vlaneseq
    %v450 = vshrl.u32 %v449, 7
    %v451 = vsub.s32 0, %v450
    %v452 = vrot.slane %v447, %v451
    %v454 = vmul.f32 %v431, %v452
    %v455 = vmul.f32 %v436, %v452
    %456 = vmatprep.subr.mxu0 0.0
    %457 = vmatpush1.msra.mxu0 %v454
    %458 = vmatprep.subr.mxu0 0.0
    %459 = vmatpush1.msra.mxu0 %v455
    %460 = vmatprep.subr.mxu0 0.0
    %461 = vmatpush1.msra.mxu0 0.0
    %462 = vmatprep.subr.mxu0 0.0
    %463 = vmatpush1.msra.mxu0 0.0
    %464 = vmatprep.subr.mxu0 0.0
    %465 = vmatpush1.msra.mxu0 0.0
    %466 = vmatprep.subr.mxu0 0.0
    %467 = vmatpush1.msra.mxu0 0.0
    %468 = vmatprep.subr.mxu0 0.0
    %469 = vmatpush1.msra.mxu0 0.0
    %470 = vmatprep.subr.mxu0 0.0
    %471 = vmatpush1.msra.mxu0 0.0
    %472 = vmatprep.subr.mxu0 0.0
    %473 = vmatpush1.msra.mxu0 0.0
    %474 = vmatprep.subr.mxu0 0.0
    %475 = vmatpush1.msra.mxu0 0.0
    %476 = vmatprep.subr.mxu0 0.0
    %477 = vmatpush1.msra.mxu0 0.0
    %478 = vmatprep.subr.mxu0 0.0
    %479 = vmatpush1.msra.mxu0 0.0
    %480 = vmatprep.subr.mxu0 0.0
    %481 = vmatpush1.msra.mxu0 0.0
    %482 = vmatprep.subr.mxu0 0.0
    %483 = vmatpush1.msra.mxu0 0.0
    %484 = vmatprep.subr.mxu0 0.0
    %485 = vmatpush1.msra.mxu0 0.0
    %486 = vmatprep.subr.mxu0 0.0
    %487 = vmatpush1.msra.mxu0 0.0
    %488 = vmatprep.subr.mxu0 0.0
    %489 = vmatpush1.msra.mxu0 0.0
    %490 = vmatprep.subr.mxu0 0.0
    %491 = vmatpush1.msra.mxu0 0.0
    %492 = vmatprep.subr.mxu0 0.0
    %493 = vmatpush1.msra.mxu0 0.0
    %494 = vmatprep.subr.mxu0 0.0
    %495 = vmatpush1.msra.mxu0 0.0
    %496 = vmatprep.subr.mxu0 0.0
    %497 = vmatpush1.msra.mxu0 0.0
    %498 = vmatprep.subr.mxu0 0.0
    %499 = vmatpush1.msra.mxu0 0.0
    %500 = vmatprep.subr.mxu0 0.0
    %501 = vmatpush1.msra.mxu0 0.0
    %502 = vmatprep.subr.mxu0 0.0
    %503 = vmatpush1.msra.mxu0 0.0
    %504 = vmatprep.subr.mxu0 0.0
    %505 = vmatpush1.msra.mxu0 0.0
    %506 = vmatprep.subr.mxu0 0.0
    %507 = vmatpush1.msra.mxu0 0.0
    %508 = vmatprep.subr.mxu0 0.0
    %509 = vmatpush1.msra.mxu0 0.0
    %510 = vmatprep.subr.mxu0 0.0
    %511 = vmatpush1.msra.mxu0 0.0
    %512 = vmatprep.subr.mxu0 0.0
    %513 = vmatpush1.msra.mxu0 0.0
    %514 = vmatprep.subr.mxu0 0.0
    %515 = vmatpush1.msra.mxu0 0.0
    %516 = vmatprep.subr.mxu0 0.0
    %517 = vmatpush1.msra.mxu0 0.0
    %518 = vmatprep.subr.mxu0 0.0
    %519 = vmatpush1.msra.mxu0 0.0
    %520 = vmatprep.mubr.f32.mxu0 0.0
    %521 = vmatmul.mubr.f32.gmra.mrb[0].mxu0 %v268
    %v522 = vpop.f32.mrb[0].mxu0
    %v523 = vadd.f32 0.0, %v522
    %v524 = vpop.f32.mrb[0].mxu0
    %525 = vmatprep.mubr.f32.mxu0 0.0
    %526 = vmatmul.mubr.f32.gmra.mrb[0].mxu0 %v271
    %v527 = vpop.f32.mrb[0].mxu0
    %v528 = vadd.f32 0.0, %v527
    %v529 = vpop.f32.mrb[0].mxu0
    %530 = vdwg.mxu0
    %v531 = vadd.f32 %v444, %v523
    %v532 = vadd.f32 %v445, %v528
    %s533 = scalar_lea.vmem [#allocation3], 2
    %v534 = vld [vmem:[%s533] sm:$0x1]
    %v536 = vlaneseq
    %v537 = vshrl.u32 %v536, 7
    %v538 = vsub.s32 0, %v537
    %v539 = vrot.slane %v534, %v538
    %v541 = vmul.f32 %v431, %v539
    %v542 = vmul.f32 %v436, %v539
    %543 = vmatprep.subr.mxu0 0.0
    %544 = vmatpush1.msra.mxu0 %v541
    %545 = vmatprep.subr.mxu0 0.0
    %546 = vmatpush1.msra.mxu0 %v542
    %547 = vmatprep.subr.mxu0 0.0
    %548 = vmatpush1.msra.mxu0 0.0
    %549 = vmatprep.subr.mxu0 0.0
    %550 = vmatpush1.msra.mxu0 0.0
    %551 = vmatprep.subr.mxu0 0.0
    %552 = vmatpush1.msra.mxu0 0.0
    %553 = vmatprep.subr.mxu0 0.0
    %554 = vmatpush1.msra.mxu0 0.0
    %555 = vmatprep.subr.mxu0 0.0
    %556 = vmatpush1.msra.mxu0 0.0
    %557 = vmatprep.subr.mxu0 0.0
    %558 = vmatpush1.msra.mxu0 0.0
    %559 = vmatprep.subr.mxu0 0.0
    %560 = vmatpush1.msra.mxu0 0.0
    %561 = vmatprep.subr.mxu0 0.0
    %562 = vmatpush1.msra.mxu0 0.0
    %563 = vmatprep.subr.mxu0 0.0
    %564 = vmatpush1.msra.mxu0 0.0
    %565 = vmatprep.subr.mxu0 0.0
    %566 = vmatpush1.msra.mxu0 0.0
    %567 = vmatprep.subr.mxu0 0.0
    %568 = vmatpush1.msra.mxu0 0.0
    %569 = vmatprep.subr.mxu0 0.0
    %570 = vmatpush1.msra.mxu0 0.0
    %571 = vmatprep.subr.mxu0 0.0
    %572 = vmatpush1.msra.mxu0 0.0
    %573 = vmatprep.subr.mxu0 0.0
    %574 = vmatpush1.msra.mxu0 0.0
    %575 = vmatprep.subr.mxu0 0.0
    %576 = vmatpush1.msra.mxu0 0.0
    %577 = vmatprep.subr.mxu0 0.0
    %578 = vmatpush1.msra.mxu0 0.0
    %579 = vmatprep.subr.mxu0 0.0
    %580 = vmatpush1.msra.mxu0 0.0
    %581 = vmatprep.subr.mxu0 0.0
    %582 = vmatpush1.msra.mxu0 0.0
    %583 = vmatprep.subr.mxu0 0.0
    %584 = vmatpush1.msra.mxu0 0.0
    %585 = vmatprep.subr.mxu0 0.0
    %586 = vmatpush1.msra.mxu0 0.0
    %587 = vmatprep.subr.mxu0 0.0
    %588 = vmatpush1.msra.mxu0 0.0
    %589 = vmatprep.subr.mxu0 0.0
    %590 = vmatpush1.msra.mxu0 0.0
    %591 = vmatprep.subr.mxu0 0.0
    %592 = vmatpush1.msra.mxu0 0.0
    %593 = vmatprep.subr.mxu0 0.0
    %594 = vmatpush1.msra.mxu0 0.0
    %595 = vmatprep.subr.mxu0 0.0
    %596 = vmatpush1.msra.mxu0 0.0
    %597 = vmatprep.subr.mxu0 0.0
    %598 = vmatpush1.msra.mxu0 0.0
    %599 = vmatprep.subr.mxu0 0.0
    %600 = vmatpush1.msra.mxu0 0.0
    %601 = vmatprep.subr.mxu0 0.0
    %602 = vmatpush1.msra.mxu0 0.0
    %603 = vmatprep.subr.mxu0 0.0
    %604 = vmatpush1.msra.mxu0 0.0
    %605 = vmatprep.subr.mxu0 0.0
    %606 = vmatpush1.msra.mxu0 0.0
    %607 = vmatprep.mubr.f32.mxu0 0.0
    %608 = vmatmul.mubr.f32.gmra.mrb[0].mxu0 %v268
    %v609 = vpop.f32.mrb[0].mxu0
    %v610 = vadd.f32 0.0, %v609
    %v611 = vpop.f32.mrb[0].mxu0
    %612 = vmatprep.mubr.f32.mxu0 0.0
    %613 = vmatmul.mubr.f32.gmra.mrb[0].mxu0 %v271
    %v614 = vpop.f32.mrb[0].mxu0
    %v615 = vadd.f32 0.0, %v614
    %v616 = vpop.f32.mrb[0].mxu0
    %617 = vdwg.mxu0
    %618 = vmatprep.subr.mxu0 0.0
    %619 = vmatpush1.msra.mxu0 %v610
    %620 = vmatprep.subr.mxu0 0.0
    %621 = vmatpush1.msra.mxu0 %v615
    %622 = vmatprep.subr.mxu0 0.0
    %623 = vmatpush1.msra.mxu0 0.0
    %624 = vmatprep.subr.mxu0 0.0
    %625 = vmatpush1.msra.mxu0 0.0
    %626 = vmatprep.subr.mxu0 0.0
    %627 = vmatpush1.msra.mxu0 0.0
    %628 = vmatprep.subr.mxu0 0.0
    %629 = vmatpush1.msra.mxu0 0.0
    %630 = vmatprep.subr.mxu0 0.0
    %631 = vmatpush1.msra.mxu0 0.0
    %632 = vmatprep.subr.mxu0 0.0
    %633 = vmatpush1.msra.mxu0 0.0
    %634 = vmatprep.subr.mxu0 0.0
    %635 = vmatpush1.msra.mxu0 0.0
    %636 = vmatprep.subr.mxu0 0.0
    %637 = vmatpush1.msra.mxu0 0.0
    %638 = vmatprep.subr.mxu0 0.0
    %639 = vmatpush1.msra.mxu0 0.0
    %640 = vmatprep.subr.mxu0 0.0
    %641 = vmatpush1.msra.mxu0 0.0
    %642 = vmatprep.subr.mxu0 0.0
    %643 = vmatpush1.msra.mxu0 0.0
    %644 = vmatprep.subr.mxu0 0.0
    %645 = vmatpush1.msra.mxu0 0.0
    %646 = vmatprep.subr.mxu0 0.0
    %647 = vmatpush1.msra.mxu0 0.0
    %648 = vmatprep.subr.mxu0 0.0
    %649 = vmatpush1.msra.mxu0 0.0
    %650 = vmatprep.subr.mxu0 0.0
    %651 = vmatpush1.msra.mxu0 0.0
    %652 = vmatprep.subr.mxu0 0.0
    %653 = vmatpush1.msra.mxu0 0.0
    %654 = vmatprep.subr.mxu0 0.0
    %655 = vmatpush1.msra.mxu0 0.0
    %656 = vmatprep.subr.mxu0 0.0
    %657 = vmatpush1.msra.mxu0 0.0
    %658 = vmatprep.subr.mxu0 0.0
    %659 = vmatpush1.msra.mxu0 0.0
    %660 = vmatprep.subr.mxu0 0.0
    %661 = vmatpush1.msra.mxu0 0.0
    %662 = vmatprep.subr.mxu0 0.0
    %663 = vmatpush1.msra.mxu0 0.0
    %664 = vmatprep.subr.mxu0 0.0
    %665 = vmatpush1.msra.mxu0 0.0
    %666 = vmatprep.subr.mxu0 0.0
    %667 = vmatpush1.msra.mxu0 0.0
    %668 = vmatprep.subr.mxu0 0.0
    %669 = vmatpush1.msra.mxu0 0.0
    %670 = vmatprep.subr.mxu0 0.0
    %671 = vmatpush1.msra.mxu0 0.0
    %672 = vmatprep.subr.mxu0 0.0
    %673 = vmatpush1.msra.mxu0 0.0
    %674 = vmatprep.subr.mxu0 0.0
    %675 = vmatpush1.msra.mxu0 0.0
    %676 = vmatprep.subr.mxu0 0.0
    %677 = vmatpush1.msra.mxu0 0.0
    %678 = vmatprep.subr.mxu0 0.0
    %679 = vmatpush1.msra.mxu0 0.0
    %680 = vmatprep.subr.mxu0 0.0
    %681 = vmatpush1.msra.mxu0 0.0
    %682 = vmatprep.mubr.f32.mxu0 0.0
    %683 = vmatmul.mubr.f32.gmra.mrb[0].mxu0 %v268
    %v684 = vpop.f32.mrb[0].mxu0
    %v685 = vadd.f32 0.0, %v684
    %v686 = vpop.f32.mrb[0].mxu0
    %687 = vmatprep.mubr.f32.mxu0 0.0
    %688 = vmatmul.mubr.f32.gmra.mrb[0].mxu0 %v271
    %v689 = vpop.f32.mrb[0].mxu0
    %v690 = vadd.f32 0.0, %v689
    %v691 = vpop.f32.mrb[0].mxu0
    %692 = vdwg.mxu0
    %v693 = vmul.f32 %v685, 2.0
    %v694 = vmul.f32 %v690, 2.0
    %v695 = vsub.f32 %v693, %v541
    %v696 = vsub.f32 %v694, %v542
    %v697 = vadd.f32 %v531, %v695
    %v698 = vadd.f32 %v532, %v696
    %v699 = vld [vmem:[%s6] sm:$0xff]
    %v700 = vld [vmem:[%s6 + $0x8] sm:$0xff]
    %s701 = scalar_lea.vmem %s6, 16
    %v702 = vld [vmem:[%s701] sm:$0xff]
    %v703 = vld [vmem:[%s701 + $0x8] sm:$0xff]
    %v705 = vsel %vm266, %v340, 0
    %v708 = vsel %vm266, %v345, 0
    %710 = vmatprep.subr.mxu0 0.0
    %711 = vmatpush1.msra.mxu0 %v702
    %712 = vmatprep.subr.mxu0 0.0
    %713 = vmatpush1.msra.mxu0 %v703
    %714 = vmatprep.subr.mxu0 0.0
    %715 = vmatpush1.msra.mxu0 0.0
    %716 = vmatprep.subr.mxu0 0.0
    %717 = vmatpush1.msra.mxu0 0.0
    %718 = vmatprep.subr.mxu0 0.0
    %719 = vmatpush1.msra.mxu0 0.0
    %720 = vmatprep.subr.mxu0 0.0
    %721 = vmatpush1.msra.mxu0 0.0
    %722 = vmatprep.subr.mxu0 0.0
    %723 = vmatpush1.msra.mxu0 0.0
    %724 = vmatprep.subr.mxu0 0.0
    %725 = vmatpush1.msra.mxu0 0.0
    %726 = vmatprep.subr.mxu0 0.0
    %727 = vmatpush1.msra.mxu0 0.0
    %728 = vmatprep.subr.mxu0 0.0
    %729 = vmatpush1.msra.mxu0 0.0
    %730 = vmatprep.subr.mxu0 0.0
    %731 = vmatpush1.msra.mxu0 0.0
    %732 = vmatprep.subr.mxu0 0.0
    %733 = vmatpush1.msra.mxu0 0.0
    %734 = vmatprep.subr.mxu0 0.0
    %735 = vmatpush1.msra.mxu0 0.0
    %736 = vmatprep.subr.mxu0 0.0
    %737 = vmatpush1.msra.mxu0 0.0
    %738 = vmatprep.subr.mxu0 0.0
    %739 = vmatpush1.msra.mxu0 0.0
    %740 = vmatprep.subr.mxu0 0.0
    %741 = vmatpush1.msra.mxu0 0.0
    %742 = vmatprep.subr.mxu0 0.0
    %743 = vmatpush1.msra.mxu0 0.0
    %744 = vmatprep.subr.mxu0 0.0
    %745 = vmatpush1.msra.mxu0 0.0
    %746 = vmatprep.subr.mxu0 0.0
    %747 = vmatpush1.msra.mxu0 0.0
    %748 = vmatprep.subr.mxu0 0.0
    %749 = vmatpush1.msra.mxu0 0.0
    %750 = vmatprep.subr.mxu0 0.0
    %751 = vmatpush1.msra.mxu0 0.0
    %752 = vmatprep.subr.mxu0 0.0
    %753 = vmatpush1.msra.mxu0 0.0
    %754 = vmatprep.subr.mxu0 0.0
    %755 = vmatpush1.msra.mxu0 0.0
    %756 = vmatprep.subr.mxu0 0.0
    %757 = vmatpush1.msra.mxu0 0.0
    %758 = vmatprep.subr.mxu0 0.0
    %759 = vmatpush1.msra.mxu0 0.0
    %760 = vmatprep.subr.mxu0 0.0
    %761 = vmatpush1.msra.mxu0 0.0
    %762 = vmatprep.subr.mxu0 0.0
    %763 = vmatpush1.msra.mxu0 0.0
    %764 = vmatprep.subr.mxu0 0.0
    %765 = vmatpush1.msra.mxu0 0.0
    %766 = vmatprep.subr.mxu0 0.0
    %767 = vmatpush1.msra.mxu0 0.0
    %768 = vmatprep.subr.mxu0 0.0
    %769 = vmatpush1.msra.mxu0 0.0
    %770 = vmatprep.subr.mxu0 0.0
    %771 = vmatpush1.msra.mxu0 0.0
    %772 = vmatprep.subr.mxu0 0.0
    %773 = vmatpush1.msra.mxu0 0.0
    %774 = vmatprep.mubr.f32.mxu0 0.0
    %775 = vmatmul.mubr.f32.gmra.mrb[0].mxu0 %v705
    %v776 = vpop.f32.mrb[0].mxu0
    %v777 = vadd.f32 0.0, %v776
    %v778 = vpop.f32.mrb[0].mxu0
    %779 = vmatprep.mubr.f32.mxu0 0.0
    %780 = vmatmul.mubr.f32.gmra.mrb[0].mxu0 %v708
    %v781 = vpop.f32.mrb[0].mxu0
    %v782 = vadd.f32 0.0, %v781
    %v783 = vpop.f32.mrb[0].mxu0
    %784 = vdwg.mxu0
    %v786 = vsel %vm266, %v264, 0
    %v789 = vsel %vm266, %v265, 0
    %791 = vmatprep.subr.mxu0 0.0
    %792 = vmatpush1.msra.mxu0 %v699
    %793 = vmatprep.subr.mxu0 0.0
    %794 = vmatpush1.msra.mxu0 %v700
    %795 = vmatprep.subr.mxu0 0.0
    %796 = vmatpush1.msra.mxu0 0.0
    %797 = vmatprep.subr.mxu0 0.0
    %798 = vmatpush1.msra.mxu0 0.0
    %799 = vmatprep.subr.mxu0 0.0
    %800 = vmatpush1.msra.mxu0 0.0
    %801 = vmatprep.subr.mxu0 0.0
    %802 = vmatpush1.msra.mxu0 0.0
    %803 = vmatprep.subr.mxu0 0.0
    %804 = vmatpush1.msra.mxu0 0.0
    %805 = vmatprep.subr.mxu0 0.0
    %806 = vmatpush1.msra.mxu0 0.0
    %807 = vmatprep.subr.mxu0 0.0
    %808 = vmatpush1.msra.mxu0 0.0
    %809 = vmatprep.subr.mxu0 0.0
    %810 = vmatpush1.msra.mxu0 0.0
    %811 = vmatprep.subr.mxu0 0.0
    %812 = vmatpush1.msra.mxu0 0.0
    %813 = vmatprep.subr.mxu0 0.0
    %814 = vmatpush1.msra.mxu0 0.0
    %815 = vmatprep.subr.mxu0 0.0
    %816 = vmatpush1.msra.mxu0 0.0
    %817 = vmatprep.subr.mxu0 0.0
    %818 = vmatpush1.msra.mxu0 0.0
    %819 = vmatprep.subr.mxu0 0.0
    %820 = vmatpush1.msra.mxu0 0.0
    %821 = vmatprep.subr.mxu0 0.0
    %822 = vmatpush1.msra.mxu0 0.0
    %823 = vmatprep.subr.mxu0 0.0
    %824 = vmatpush1.msra.mxu0 0.0
    %825 = vmatprep.subr.mxu0 0.0
    %826 = vmatpush1.msra.mxu0 0.0
    %827 = vmatprep.subr.mxu0 0.0
    %828 = vmatpush1.msra.mxu0 0.0
    %829 = vmatprep.subr.mxu0 0.0
    %830 = vmatpush1.msra.mxu0 0.0
    %831 = vmatprep.subr.mxu0 0.0
    %832 = vmatpush1.msra.mxu0 0.0
    %833 = vmatprep.subr.mxu0 0.0
    %834 = vmatpush1.msra.mxu0 0.0
    %835 = vmatprep.subr.mxu0 0.0
    %836 = vmatpush1.msra.mxu0 0.0
    %837 = vmatprep.subr.mxu0 0.0
    %838 = vmatpush1.msra.mxu0 0.0
    %839 = vmatprep.subr.mxu0 0.0
    %840 = vmatpush1.msra.mxu0 0.0
    %841 = vmatprep.subr.mxu0 0.0
    %842 = vmatpush1.msra.mxu0 0.0
    %843 = vmatprep.subr.mxu0 0.0
    %844 = vmatpush1.msra.mxu0 0.0
    %845 = vmatprep.subr.mxu0 0.0
    %846 = vmatpush1.msra.mxu0 0.0
    %847 = vmatprep.subr.mxu0 0.0
    %848 = vmatpush1.msra.mxu0 0.0
    %849 = vmatprep.subr.mxu0 0.0
    %850 = vmatpush1.msra.mxu0 0.0
    %851 = vmatprep.subr.mxu0 0.0
    %852 = vmatpush1.msra.mxu0 0.0
    %853 = vmatprep.subr.mxu0 0.0
    %854 = vmatpush1.msra.mxu0 0.0
    %855 = vmatprep.mubr.f32.mxu0 0.0
    %856 = vmatmul.mubr.f32.gmra.mrb[0].mxu0 %v786
    %v857 = vpop.f32.mrb[0].mxu0
    %v858 = vadd.f32 %v777, %v857
    %v859 = vpop.f32.mrb[0].mxu0
    %860 = vmatprep.mubr.f32.mxu0 0.0
    %861 = vmatmul.mubr.f32.gmra.mrb[0].mxu0 %v789
    %v862 = vpop.f32.mrb[0].mxu0
    %v863 = vadd.f32 %v782, %v862
    %v864 = vpop.f32.mrb[0].mxu0
    %865 = vdwg.mxu0
    %s866 = scalar_lea.vmem %s6, 32
    %v867 = vld [vmem:[%s866] sm:$0xff]
    %v868 = vld [vmem:[%s866 + $0x8] sm:$0xff]
    %v870 = vsel %vm266, %v425, 0
    %v873 = vsel %vm266, %v426, 0
    %875 = vmatprep.subr.mxu0 0.0
    %876 = vmatpush1.msra.mxu0 %v867
    %877 = vmatprep.subr.mxu0 0.0
    %878 = vmatpush1.msra.mxu0 %v868
    %879 = vmatprep.subr.mxu0 0.0
    %880 = vmatpush1.msra.mxu0 0.0
    %881 = vmatprep.subr.mxu0 0.0
    %882 = vmatpush1.msra.mxu0 0.0
    %883 = vmatprep.subr.mxu0 0.0
    %884 = vmatpush1.msra.mxu0 0.0
    %885 = vmatprep.subr.mxu0 0.0
    %886 = vmatpush1.msra.mxu0 0.0
    %887 = vmatprep.subr.mxu0 0.0
    %888 = vmatpush1.msra.mxu0 0.0
    %889 = vmatprep.subr.mxu0 0.0
    %890 = vmatpush1.msra.mxu0 0.0
    %891 = vmatprep.subr.mxu0 0.0
    %892 = vmatpush1.msra.mxu0 0.0
    %893 = vmatprep.subr.mxu0 0.0
    %894 = vmatpush1.msra.mxu0 0.0
    %895 = vmatprep.subr.mxu0 0.0
    %896 = vmatpush1.msra.mxu0 0.0
    %897 = vmatprep.subr.mxu0 0.0
    %898 = vmatpush1.msra.mxu0 0.0
    %899 = vmatprep.subr.mxu0 0.0
    %900 = vmatpush1.msra.mxu0 0.0
    %901 = vmatprep.subr.mxu0 0.0
    %902 = vmatpush1.msra.mxu0 0.0
    %903 = vmatprep.subr.mxu0 0.0
    %904 = vmatpush1.msra.mxu0 0.0
    %905 = vmatprep.subr.mxu0 0.0
    %906 = vmatpush1.msra.mxu0 0.0
    %907 = vmatprep.subr.mxu0 0.0
    %908 = vmatpush1.msra.mxu0 0.0
    %909 = vmatprep.subr.mxu0 0.0
    %910 = vmatpush1.msra.mxu0 0.0
    %911 = vmatprep.subr.mxu0 0.0
    %912 = vmatpush1.msra.mxu0 0.0
    %913 = vmatprep.subr.mxu0 0.0
    %914 = vmatpush1.msra.mxu0 0.0
    %915 = vmatprep.subr.mxu0 0.0
    %916 = vmatpush1.msra.mxu0 0.0
    %917 = vmatprep.subr.mxu0 0.0
    %918 = vmatpush1.msra.mxu0 0.0
    %919 = vmatprep.subr.mxu0 0.0
    %920 = vmatpush1.msra.mxu0 0.0
    %921 = vmatprep.subr.mxu0 0.0
    %922 = vmatpush1.msra.mxu0 0.0
    %923 = vmatprep.subr.mxu0 0.0
    %924 = vmatpush1.msra.mxu0 0.0
    %925 = vmatprep.subr.mxu0 0.0
    %926 = vmatpush1.msra.mxu0 0.0
    %927 = vmatprep.subr.mxu0 0.0
    %928 = vmatpush1.msra.mxu0 0.0
    %929 = vmatprep.subr.mxu0 0.0
    %930 = vmatpush1.msra.mxu0 0.0
    %931 = vmatprep.subr.mxu0 0.0
    %932 = vmatpush1.msra.mxu0 0.0
    %933 = vmatprep.subr.mxu0 0.0
    %934 = vmatpush1.msra.mxu0 0.0
    %935 = vmatprep.subr.mxu0 0.0
    %936 = vmatpush1.msra.mxu0 0.0
    %937 = vmatprep.subr.mxu0 0.0
    %938 = vmatpush1.msra.mxu0 0.0
    %939 = vmatprep.mubr.f32.mxu0 0.0
    %940 = vmatmul.mubr.f32.gmra.mrb[0].mxu0 %v870
    %v941 = vpop.f32.mrb[0].mxu0
    %v942 = vadd.f32 0.0, %v941
    %v943 = vpop.f32.mrb[0].mxu0
    %944 = vmatprep.mubr.f32.mxu0 0.0
    %945 = vmatmul.mubr.f32.gmra.mrb[0].mxu0 %v873
    %v946 = vpop.f32.mrb[0].mxu0
    %v947 = vadd.f32 0.0, %v946
    %v948 = vpop.f32.mrb[0].mxu0
    %949 = vdwg.mxu0
    %v950 = vadd.f32 %v858, %v942
    %v951 = vadd.f32 %v863, %v947
    %v952 = vadd.f32 %v697, %v950
    %v953 = vadd.f32 %v698, %v951
    %v954 = vld [vmem:[%s9] sm:$0x1]
    %v956 = vlaneseq
    %v957 = vshrl.u32 %v956, 7
    %v958 = vsub.s32 0, %v957
    %v959 = vrot.slane %v954, %v958
    %v961 = vadd.f32 %v952, %v959
    %v962 = vadd.f32 %v953, %v959
    %v963 = vxor.u32 %v961, 2147483648
    %v964 = vxor.u32 %v962, 2147483648
    %v965 = vmul.f32 %v963, 1.442695
    %v966 = vpow.pop %v965
    %v967 = vmul.f32 %v964, 1.442695
    %v968 = vpow.pop %v967
    %v969 = vadd.f32 %v966, 1.0
    %v970 = vadd.f32 %v968, 1.0
    %v971 = vrcp.pop %v969
    %v972 = vmul.f32 1.0, %v971
    %v973 = vrcp.pop %v970
    %v974 = vmul.f32 1.0, %v973
    %v975 = vld [vmem:[#allocation5] sm:$0x1]
    %v977 = vlaneseq
    %v978 = vshrl.u32 %v977, 7
    %v979 = vsub.s32 0, %v978
    %v980 = vrot.slane %v975, %v979
    %v982 = vmul.f32 %v431, %v980
    %v983 = vmul.f32 %v436, %v980
    %s984 = scalar_lea.vmem [#allocation5], 1
    %v985 = vld [vmem:[%s984] sm:$0x1]
    %v987 = vlaneseq
    %v988 = vshrl.u32 %v987, 7
    %v989 = vsub.s32 0, %v988
    %v990 = vrot.slane %v985, %v989
    %v992 = vmul.f32 %v431, %v990
    %v993 = vmul.f32 %v436, %v990
    %994 = vmatprep.subr.mxu0 0.0
    %995 = vmatpush1.msra.mxu0 %v992
    %996 = vmatprep.subr.mxu0 0.0
    %997 = vmatpush1.msra.mxu0 %v993
    %998 = vmatprep.subr.mxu0 0.0
    %999 = vmatpush1.msra.mxu0 0.0
    %1000 = vmatprep.subr.mxu0 0.0
    %1001 = vmatpush1.msra.mxu0 0.0
    %1002 = vmatprep.subr.mxu0 0.0
    %1003 = vmatpush1.msra.mxu0 0.0
    %1004 = vmatprep.subr.mxu0 0.0
    %1005 = vmatpush1.msra.mxu0 0.0
    %1006 = vmatprep.subr.mxu0 0.0
    %1007 = vmatpush1.msra.mxu0 0.0
    %1008 = vmatprep.subr.mxu0 0.0
    %1009 = vmatpush1.msra.mxu0 0.0
    %1010 = vmatprep.subr.mxu0 0.0
    %1011 = vmatpush1.msra.mxu0 0.0
    %1012 = vmatprep.subr.mxu0 0.0
    %1013 = vmatpush1.msra.mxu0 0.0
    %1014 = vmatprep.subr.mxu0 0.0
    %1015 = vmatpush1.msra.mxu0 0.0
    %1016 = vmatprep.subr.mxu0 0.0
    %1017 = vmatpush1.msra.mxu0 0.0
    %1018 = vmatprep.subr.mxu0 0.0
    %1019 = vmatpush1.msra.mxu0 0.0
    %1020 = vmatprep.subr.mxu0 0.0
    %1021 = vmatpush1.msra.mxu0 0.0
    %1022 = vmatprep.subr.mxu0 0.0
    %1023 = vmatpush1.msra.mxu0 0.0
    %1024 = vmatprep.subr.mxu0 0.0
    %1025 = vmatpush1.msra.mxu0 0.0
    %1026 = vmatprep.subr.mxu0 0.0
    %1027 = vmatpush1.msra.mxu0 0.0
    %1028 = vmatprep.subr.mxu0 0.0
    %1029 = vmatpush1.msra.mxu0 0.0
    %1030 = vmatprep.subr.mxu0 0.0
    %1031 = vmatpush1.msra.mxu0 0.0
    %1032 = vmatprep.subr.mxu0 0.0
    %1033 = vmatpush1.msra.mxu0 0.0
    %1034 = vmatprep.subr.mxu0 0.0
    %1035 = vmatpush1.msra.mxu0 0.0
    %1036 = vmatprep.subr.mxu0 0.0
    %1037 = vmatpush1.msra.mxu0 0.0
    %1038 = vmatprep.subr.mxu0 0.0
    %1039 = vmatpush1.msra.mxu0 0.0
    %1040 = vmatprep.subr.mxu0 0.0
    %1041 = vmatpush1.msra.mxu0 0.0
    %1042 = vmatprep.subr.mxu0 0.0
    %1043 = vmatpush1.msra.mxu0 0.0
    %1044 = vmatprep.subr.mxu0 0.0
    %1045 = vmatpush1.msra.mxu0 0.0
    %1046 = vmatprep.subr.mxu0 0.0
    %1047 = vmatpush1.msra.mxu0 0.0
    %1048 = vmatprep.subr.mxu0 0.0
    %1049 = vmatpush1.msra.mxu0 0.0
    %1050 = vmatprep.subr.mxu0 0.0
    %1051 = vmatpush1.msra.mxu0 0.0
    %1052 = vmatprep.subr.mxu0 0.0
    %1053 = vmatpush1.msra.mxu0 0.0
    %1054 = vmatprep.subr.mxu0 0.0
    %1055 = vmatpush1.msra.mxu0 0.0
    %1056 = vmatprep.subr.mxu0 0.0
    %1057 = vmatpush1.msra.mxu0 0.0
    %1058 = vmatprep.mubr.f32.mxu0 0.0
    %1059 = vmatmul.mubr.f32.gmra.mrb[0].mxu0 %v268
    %v1060 = vpop.f32.mrb[0].mxu0
    %v1061 = vadd.f32 0.0, %v1060
    %v1062 = vpop.f32.mrb[0].mxu0
    %1063 = vmatprep.mubr.f32.mxu0 0.0
    %1064 = vmatmul.mubr.f32.gmra.mrb[0].mxu0 %v271
    %v1065 = vpop.f32.mrb[0].mxu0
    %v1066 = vadd.f32 0.0, %v1065
    %v1067 = vpop.f32.mrb[0].mxu0
    %1068 = vdwg.mxu0
    %v1069 = vadd.f32 %v982, %v1061
    %v1070 = vadd.f32 %v983, %v1066
    %s1071 = scalar_lea.vmem [#allocation5], 2
    %v1072 = vld [vmem:[%s1071] sm:$0x1]
    %v1074 = vlaneseq
    %v1075 = vshrl.u32 %v1074, 7
    %v1076 = vsub.s32 0, %v1075
    %v1077 = vrot.slane %v1072, %v1076
    %v1079 = vmul.f32 %v431, %v1077
    %v1080 = vmul.f32 %v436, %v1077
    %1081 = vmatprep.subr.mxu0 0.0
    %1082 = vmatpush1.msra.mxu0 %v1079
    %1083 = vmatprep.subr.mxu0 0.0
    %1084 = vmatpush1.msra.mxu0 %v1080
    %1085 = vmatprep.subr.mxu0 0.0
    %1086 = vmatpush1.msra.mxu0 0.0
    %1087 = vmatprep.subr.mxu0 0.0
    %1088 = vmatpush1.msra.mxu0 0.0
    %1089 = vmatprep.subr.mxu0 0.0
    %1090 = vmatpush1.msra.mxu0 0.0
    %1091 = vmatprep.subr.mxu0 0.0
    %1092 = vmatpush1.msra.mxu0 0.0
    %1093 = vmatprep.subr.mxu0 0.0
    %1094 = vmatpush1.msra.mxu0 0.0
    %1095 = vmatprep.subr.mxu0 0.0
    %1096 = vmatpush1.msra.mxu0 0.0
    %1097 = vmatprep.subr.mxu0 0.0
    %1098 = vmatpush1.msra.mxu0 0.0
    %1099 = vmatprep.subr.mxu0 0.0
    %1100 = vmatpush1.msra.mxu0 0.0
    %1101 = vmatprep.subr.mxu0 0.0
    %1102 = vmatpush1.msra.mxu0 0.0
    %1103 = vmatprep.subr.mxu0 0.0
    %1104 = vmatpush1.msra.mxu0 0.0
    %1105 = vmatprep.subr.mxu0 0.0
    %1106 = vmatpush1.msra.mxu0 0.0
    %1107 = vmatprep.subr.mxu0 0.0
    %1108 = vmatpush1.msra.mxu0 0.0
    %1109 = vmatprep.subr.mxu0 0.0
    %1110 = vmatpush1.msra.mxu0 0.0
    %1111 = vmatprep.subr.mxu0 0.0
    %1112 = vmatpush1.msra.mxu0 0.0
    %1113 = vmatprep.subr.mxu0 0.0
    %1114 = vmatpush1.msra.mxu0 0.0
    %1115 = vmatprep.subr.mxu0 0.0
    %1116 = vmatpush1.msra.mxu0 0.0
    %1117 = vmatprep.subr.mxu0 0.0
    %1118 = vmatpush1.msra.mxu0 0.0
    %1119 = vmatprep.subr.mxu0 0.0
    %1120 = vmatpush1.msra.mxu0 0.0
    %1121 = vmatprep.subr.mxu0 0.0
    %1122 = vmatpush1.msra.mxu0 0.0
    %1123 = vmatprep.subr.mxu0 0.0
    %1124 = vmatpush1.msra.mxu0 0.0
    %1125 = vmatprep.subr.mxu0 0.0
    %1126 = vmatpush1.msra.mxu0 0.0
    %1127 = vmatprep.subr.mxu0 0.0
    %1128 = vmatpush1.msra.mxu0 0.0
    %1129 = vmatprep.subr.mxu0 0.0
    %1130 = vmatpush1.msra.mxu0 0.0
    %1131 = vmatprep.subr.mxu0 0.0
    %1132 = vmatpush1.msra.mxu0 0.0
    %1133 = vmatprep.subr.mxu0 0.0
    %1134 = vmatpush1.msra.mxu0 0.0
    %1135 = vmatprep.subr.mxu0 0.0
    %1136 = vmatpush1.msra.mxu0 0.0
    %1137 = vmatprep.subr.mxu0 0.0
    %1138 = vmatpush1.msra.mxu0 0.0
    %1139 = vmatprep.subr.mxu0 0.0
    %1140 = vmatpush1.msra.mxu0 0.0
    %1141 = vmatprep.subr.mxu0 0.0
    %1142 = vmatpush1.msra.mxu0 0.0
    %1143 = vmatprep.subr.mxu0 0.0
    %1144 = vmatpush1.msra.mxu0 0.0
    %1145 = vmatprep.mubr.f32.mxu0 0.0
    %1146 = vmatmul.mubr.f32.gmra.mrb[0].mxu0 %v268
    %v1147 = vpop.f32.mrb[0].mxu0
    %v1148 = vadd.f32 0.0, %v1147
    %v1149 = vpop.f32.mrb[0].mxu0
    %1150 = vmatprep.mubr.f32.mxu0 0.0
    %1151 = vmatmul.mubr.f32.gmra.mrb[0].mxu0 %v271
    %v1152 = vpop.f32.mrb[0].mxu0
    %v1153 = vadd.f32 0.0, %v1152
    %v1154 = vpop.f32.mrb[0].mxu0
    %1155 = vdwg.mxu0
    %1156 = vmatprep.subr.mxu0 0.0
    %1157 = vmatpush1.msra.mxu0 %v1148
    %1158 = vmatprep.subr.mxu0 0.0
    %1159 = vmatpush1.msra.mxu0 %v1153
    %1160 = vmatprep.subr.mxu0 0.0
    %1161 = vmatpush1.msra.mxu0 0.0
    %1162 = vmatprep.subr.mxu0 0.0
    %1163 = vmatpush1.msra.mxu0 0.0
    %1164 = vmatprep.subr.mxu0 0.0
    %1165 = vmatpush1.msra.mxu0 0.0
    %1166 = vmatprep.subr.mxu0 0.0
    %1167 = vmatpush1.msra.mxu0 0.0
    %1168 = vmatprep.subr.mxu0 0.0
    %1169 = vmatpush1.msra.mxu0 0.0
    %1170 = vmatprep.subr.mxu0 0.0
    %1171 = vmatpush1.msra.mxu0 0.0
    %1172 = vmatprep.subr.mxu0 0.0
    %1173 = vmatpush1.msra.mxu0 0.0
    %1174 = vmatprep.subr.mxu0 0.0
    %1175 = vmatpush1.msra.mxu0 0.0
    %1176 = vmatprep.subr.mxu0 0.0
    %1177 = vmatpush1.msra.mxu0 0.0
    %1178 = vmatprep.subr.mxu0 0.0
    %1179 = vmatpush1.msra.mxu0 0.0
    %1180 = vmatprep.subr.mxu0 0.0
    %1181 = vmatpush1.msra.mxu0 0.0
    %1182 = vmatprep.subr.mxu0 0.0
    %1183 = vmatpush1.msra.mxu0 0.0
    %1184 = vmatprep.subr.mxu0 0.0
    %1185 = vmatpush1.msra.mxu0 0.0
    %1186 = vmatprep.subr.mxu0 0.0
    %1187 = vmatpush1.msra.mxu0 0.0
    %1188 = vmatprep.subr.mxu0 0.0
    %1189 = vmatpush1.msra.mxu0 0.0
    %1190 = vmatprep.subr.mxu0 0.0
    %1191 = vmatpush1.msra.mxu0 0.0
    %1192 = vmatprep.subr.mxu0 0.0
    %1193 = vmatpush1.msra.mxu0 0.0
    %1194 = vmatprep.subr.mxu0 0.0
    %1195 = vmatpush1.msra.mxu0 0.0
    %1196 = vmatprep.subr.mxu0 0.0
    %1197 = vmatpush1.msra.mxu0 0.0
    %1198 = vmatprep.subr.mxu0 0.0
    %1199 = vmatpush1.msra.mxu0 0.0
    %1200 = vmatprep.subr.mxu0 0.0
    %1201 = vmatpush1.msra.mxu0 0.0
    %1202 = vmatprep.subr.mxu0 0.0
    %1203 = vmatpush1.msra.mxu0 0.0
    %1204 = vmatprep.subr.mxu0 0.0
    %1205 = vmatpush1.msra.mxu0 0.0
    %1206 = vmatprep.subr.mxu0 0.0
    %1207 = vmatpush1.msra.mxu0 0.0
    %1208 = vmatprep.subr.mxu0 0.0
    %1209 = vmatpush1.msra.mxu0 0.0
    %1210 = vmatprep.subr.mxu0 0.0
    %1211 = vmatpush1.msra.mxu0 0.0
    %1212 = vmatprep.subr.mxu0 0.0
    %1213 = vmatpush1.msra.mxu0 0.0
    %1214 = vmatprep.subr.mxu0 0.0
    %1215 = vmatpush1.msra.mxu0 0.0
    %1216 = vmatprep.subr.mxu0 0.0
    %1217 = vmatpush1.msra.mxu0 0.0
    %1218 = vmatprep.subr.mxu0 0.0
    %1219 = vmatpush1.msra.mxu0 0.0
    %1220 = vmatprep.mubr.f32.mxu0 0.0
    %1221 = vmatmul.mubr.f32.gmra.mrb[0].mxu0 %v268
    %v1222 = vpop.f32.mrb[0].mxu0
    %v1223 = vadd.f32 0.0, %v1222
    %v1224 = vpop.f32.mrb[0].mxu0
    %1225 = vmatprep.mubr.f32.mxu0 0.0
    %1226 = vmatmul.mubr.f32.gmra.mrb[0].mxu0 %v271
    %v1227 = vpop.f32.mrb[0].mxu0
    %v1228 = vadd.f32 0.0, %v1227
    %v1229 = vpop.f32.mrb[0].mxu0
    %1230 = vdwg.mxu0
    %v1231 = vmul.f32 %v1223, 2.0
    %v1232 = vmul.f32 %v1228, 2.0
    %v1233 = vsub.f32 %v1231, %v1079
    %v1234 = vsub.f32 %v1232, %v1080
    %v1235 = vadd.f32 %v1069, %v1233
    %v1236 = vadd.f32 %v1070, %v1234
    %v1237 = vld [vmem:[#allocation8] sm:$0xff]
    %v1238 = vld [vmem:[#allocation8 + $0x8] sm:$0xff]
    %s1239 = scalar_lea.vmem [#allocation8], 16
    %v1240 = vld [vmem:[%s1239] sm:$0xff]
    %v1241 = vld [vmem:[%s1239 + $0x8] sm:$0xff]
    %1242 = vmatprep.subr.mxu0 0.0
    %1243 = vmatpush1.msra.mxu0 %v1240
    %1244 = vmatprep.subr.mxu0 0.0
    %1245 = vmatpush1.msra.mxu0 %v1241
    %1246 = vmatprep.subr.mxu0 0.0
    %1247 = vmatpush1.msra.mxu0 0.0
    %1248 = vmatprep.subr.mxu0 0.0
    %1249 = vmatpush1.msra.mxu0 0.0
    %1250 = vmatprep.subr.mxu0 0.0
    %1251 = vmatpush1.msra.mxu0 0.0
    %1252 = vmatprep.subr.mxu0 0.0
    %1253 = vmatpush1.msra.mxu0 0.0
    %1254 = vmatprep.subr.mxu0 0.0
    %1255 = vmatpush1.msra.mxu0 0.0
    %1256 = vmatprep.subr.mxu0 0.0
    %1257 = vmatpush1.msra.mxu0 0.0
    %1258 = vmatprep.subr.mxu0 0.0
    %1259 = vmatpush1.msra.mxu0 0.0
    %1260 = vmatprep.subr.mxu0 0.0
    %1261 = vmatpush1.msra.mxu0 0.0
    %1262 = vmatprep.subr.mxu0 0.0
    %1263 = vmatpush1.msra.mxu0 0.0
    %1264 = vmatprep.subr.mxu0 0.0
    %1265 = vmatpush1.msra.mxu0 0.0
    %1266 = vmatprep.subr.mxu0 0.0
    %1267 = vmatpush1.msra.mxu0 0.0
    %1268 = vmatprep.subr.mxu0 0.0
    %1269 = vmatpush1.msra.mxu0 0.0
    %1270 = vmatprep.subr.mxu0 0.0
    %1271 = vmatpush1.msra.mxu0 0.0
    %1272 = vmatprep.subr.mxu0 0.0
    %1273 = vmatpush1.msra.mxu0 0.0
    %1274 = vmatprep.subr.mxu0 0.0
    %1275 = vmatpush1.msra.mxu0 0.0
    %1276 = vmatprep.subr.mxu0 0.0
    %1277 = vmatpush1.msra.mxu0 0.0
    %1278 = vmatprep.subr.mxu0 0.0
    %1279 = vmatpush1.msra.mxu0 0.0
    %1280 = vmatprep.subr.mxu0 0.0
    %1281 = vmatpush1.msra.mxu0 0.0
    %1282 = vmatprep.subr.mxu0 0.0
    %1283 = vmatpush1.msra.mxu0 0.0
    %1284 = vmatprep.subr.mxu0 0.0
    %1285 = vmatpush1.msra.mxu0 0.0
    %1286 = vmatprep.subr.mxu0 0.0
    %1287 = vmatpush1.msra.mxu0 0.0
    %1288 = vmatprep.subr.mxu0 0.0
    %1289 = vmatpush1.msra.mxu0 0.0
    %1290 = vmatprep.subr.mxu0 0.0
    %1291 = vmatpush1.msra.mxu0 0.0
    %1292 = vmatprep.subr.mxu0 0.0
    %1293 = vmatpush1.msra.mxu0 0.0
    %1294 = vmatprep.subr.mxu0 0.0
    %1295 = vmatpush1.msra.mxu0 0.0
    %1296 = vmatprep.subr.mxu0 0.0
    %1297 = vmatpush1.msra.mxu0 0.0
    %1298 = vmatprep.subr.mxu0 0.0
    %1299 = vmatpush1.msra.mxu0 0.0
    %1300 = vmatprep.subr.mxu0 0.0
    %1301 = vmatpush1.msra.mxu0 0.0
    %1302 = vmatprep.subr.mxu0 0.0
    %1303 = vmatpush1.msra.mxu0 0.0
    %1304 = vmatprep.subr.mxu0 0.0
    %1305 = vmatpush1.msra.mxu0 0.0
    %1306 = vmatprep.mubr.f32.mxu0 0.0
    %1307 = vmatmul.mubr.f32.gmra.mrb[0].mxu0 %v705
    %v1308 = vpop.f32.mrb[0].mxu0
    %v1309 = vadd.f32 0.0, %v1308
    %v1310 = vpop.f32.mrb[0].mxu0
    %1311 = vmatprep.mubr.f32.mxu0 0.0
    %1312 = vmatmul.mubr.f32.gmra.mrb[0].mxu0 %v708
    %v1313 = vpop.f32.mrb[0].mxu0
    %v1314 = vadd.f32 0.0, %v1313
    %v1315 = vpop.f32.mrb[0].mxu0
    %1316 = vdwg.mxu0
    %1317 = vmatprep.subr.mxu0 0.0
    %1318 = vmatpush1.msra.mxu0 %v1237
    %1319 = vmatprep.subr.mxu0 0.0
    %1320 = vmatpush1.msra.mxu0 %v1238
    %1321 = vmatprep.subr.mxu0 0.0
    %1322 = vmatpush1.msra.mxu0 0.0
    %1323 = vmatprep.subr.mxu0 0.0
    %1324 = vmatpush1.msra.mxu0 0.0
    %1325 = vmatprep.subr.mxu0 0.0
    %1326 = vmatpush1.msra.mxu0 0.0
    %1327 = vmatprep.subr.mxu0 0.0
    %1328 = vmatpush1.msra.mxu0 0.0
    %1329 = vmatprep.subr.mxu0 0.0
    %1330 = vmatpush1.msra.mxu0 0.0
    %1331 = vmatprep.subr.mxu0 0.0
    %1332 = vmatpush1.msra.mxu0 0.0
    %1333 = vmatprep.subr.mxu0 0.0
    %1334 = vmatpush1.msra.mxu0 0.0
    %1335 = vmatprep.subr.mxu0 0.0
    %1336 = vmatpush1.msra.mxu0 0.0
    %1337 = vmatprep.subr.mxu0 0.0
    %1338 = vmatpush1.msra.mxu0 0.0
    %1339 = vmatprep.subr.mxu0 0.0
    %1340 = vmatpush1.msra.mxu0 0.0
    %1341 = vmatprep.subr.mxu0 0.0
    %1342 = vmatpush1.msra.mxu0 0.0
    %1343 = vmatprep.subr.mxu0 0.0
    %1344 = vmatpush1.msra.mxu0 0.0
    %1345 = vmatprep.subr.mxu0 0.0
    %1346 = vmatpush1.msra.mxu0 0.0
    %1347 = vmatprep.subr.mxu0 0.0
    %1348 = vmatpush1.msra.mxu0 0.0
    %1349 = vmatprep.subr.mxu0 0.0
    %1350 = vmatpush1.msra.mxu0 0.0
    %1351 = vmatprep.subr.mxu0 0.0
    %1352 = vmatpush1.msra.mxu0 0.0
    %1353 = vmatprep.subr.mxu0 0.0
    %1354 = vmatpush1.msra.mxu0 0.0
    %1355 = vmatprep.subr.mxu0 0.0
    %1356 = vmatpush1.msra.mxu0 0.0
    %1357 = vmatprep.subr.mxu0 0.0
    %1358 = vmatpush1.msra.mxu0 0.0
    %1359 = vmatprep.subr.mxu0 0.0
    %1360 = vmatpush1.msra.mxu0 0.0
    %1361 = vmatprep.subr.mxu0 0.0
    %1362 = vmatpush1.msra.mxu0 0.0
    %1363 = vmatprep.subr.mxu0 0.0
    %1364 = vmatpush1.msra.mxu0 0.0
    %1365 = vmatprep.subr.mxu0 0.0
    %1366 = vmatpush1.msra.mxu0 0.0
    %1367 = vmatprep.subr.mxu0 0.0
    %1368 = vmatpush1.msra.mxu0 0.0
    %1369 = vmatprep.subr.mxu0 0.0
    %1370 = vmatpush1.msra.mxu0 0.0
    %1371 = vmatprep.subr.mxu0 0.0
    %1372 = vmatpush1.msra.mxu0 0.0
    %1373 = vmatprep.subr.mxu0 0.0
    %1374 = vmatpush1.msra.mxu0 0.0
    %1375 = vmatprep.subr.mxu0 0.0
    %1376 = vmatpush1.msra.mxu0 0.0
    %1377 = vmatprep.subr.mxu0 0.0
    %1378 = vmatpush1.msra.mxu0 0.0
    %1379 = vmatprep.subr.mxu0 0.0
    %1380 = vmatpush1.msra.mxu0 0.0
    %1381 = vmatprep.mubr.f32.mxu0 0.0
    %1382 = vmatmul.mubr.f32.gmra.mrb[0].mxu0 %v786
    %v1383 = vpop.f32.mrb[0].mxu0
    %v1384 = vadd.f32 %v1309, %v1383
    %v1385 = vpop.f32.mrb[0].mxu0
    %1386 = vmatprep.mubr.f32.mxu0 0.0
    %1387 = vmatmul.mubr.f32.gmra.mrb[0].mxu0 %v789
    %v1388 = vpop.f32.mrb[0].mxu0
    %v1389 = vadd.f32 %v1314, %v1388
    %v1390 = vpop.f32.mrb[0].mxu0
    %1391 = vdwg.mxu0
    %s1392 = scalar_lea.vmem [#allocation8], 32
    %v1393 = vld [vmem:[%s1392] sm:$0xff]
    %v1394 = vld [vmem:[%s1392 + $0x8] sm:$0xff]
    %1395 = vmatprep.subr.mxu0 0.0
    %1396 = vmatpush1.msra.mxu0 %v1393
    %1397 = vmatprep.subr.mxu0 0.0
    %1398 = vmatpush1.msra.mxu0 %v1394
    %1399 = vmatprep.subr.mxu0 0.0
    %1400 = vmatpush1.msra.mxu0 0.0
    %1401 = vmatprep.subr.mxu0 0.0
    %1402 = vmatpush1.msra.mxu0 0.0
    %1403 = vmatprep.subr.mxu0 0.0
    %1404 = vmatpush1.msra.mxu0 0.0
    %1405 = vmatprep.subr.mxu0 0.0
    %1406 = vmatpush1.msra.mxu0 0.0
    %1407 = vmatprep.subr.mxu0 0.0
    %1408 = vmatpush1.msra.mxu0 0.0
    %1409 = vmatprep.subr.mxu0 0.0
    %1410 = vmatpush1.msra.mxu0 0.0
    %1411 = vmatprep.subr.mxu0 0.0
    %1412 = vmatpush1.msra.mxu0 0.0
    %1413 = vmatprep.subr.mxu0 0.0
    %1414 = vmatpush1.msra.mxu0 0.0
    %1415 = vmatprep.subr.mxu0 0.0
    %1416 = vmatpush1.msra.mxu0 0.0
    %1417 = vmatprep.subr.mxu0 0.0
    %1418 = vmatpush1.msra.mxu0 0.0
    %1419 = vmatprep.subr.mxu0 0.0
    %1420 = vmatpush1.msra.mxu0 0.0
    %1421 = vmatprep.subr.mxu0 0.0
    %1422 = vmatpush1.msra.mxu0 0.0
    %1423 = vmatprep.subr.mxu0 0.0
    %1424 = vmatpush1.msra.mxu0 0.0
    %1425 = vmatprep.subr.mxu0 0.0
    %1426 = vmatpush1.msra.mxu0 0.0
    %1427 = vmatprep.subr.mxu0 0.0
    %1428 = vmatpush1.msra.mxu0 0.0
    %1429 = vmatprep.subr.mxu0 0.0
    %1430 = vmatpush1.msra.mxu0 0.0
    %1431 = vmatprep.subr.mxu0 0.0
    %1432 = vmatpush1.msra.mxu0 0.0
    %1433 = vmatprep.subr.mxu0 0.0
    %1434 = vmatpush1.msra.mxu0 0.0
    %1435 = vmatprep.subr.mxu0 0.0
    %1436 = vmatpush1.msra.mxu0 0.0
    %1437 = vmatprep.subr.mxu0 0.0
    %1438 = vmatpush1.msra.mxu0 0.0
    %1439 = vmatprep.subr.mxu0 0.0
    %1440 = vmatpush1.msra.mxu0 0.0
    %1441 = vmatprep.subr.mxu0 0.0
    %1442 = vmatpush1.msra.mxu0 0.0
    %1443 = vmatprep.subr.mxu0 0.0
    %1444 = vmatpush1.msra.mxu0 0.0
    %1445 = vmatprep.subr.mxu0 0.0
    %1446 = vmatpush1.msra.mxu0 0.0
    %1447 = vmatprep.subr.mxu0 0.0
    %1448 = vmatpush1.msra.mxu0 0.0
    %1449 = vmatprep.subr.mxu0 0.0
    %1450 = vmatpush1.msra.mxu0 0.0
    %1451 = vmatprep.subr.mxu0 0.0
    %1452 = vmatpush1.msra.mxu0 0.0
    %1453 = vmatprep.subr.mxu0 0.0
    %1454 = vmatpush1.msra.mxu0 0.0
    %1455 = vmatprep.subr.mxu0 0.0
    %1456 = vmatpush1.msra.mxu0 0.0
    %1457 = vmatprep.subr.mxu0 0.0
    %1458 = vmatpush1.msra.mxu0 0.0
    %1459 = vmatprep.mubr.f32.mxu0 0.0
    %1460 = vmatmul.mubr.f32.gmra.mrb[0].mxu0 %v870
    %v1461 = vpop.f32.mrb[0].mxu0
    %v1462 = vadd.f32 0.0, %v1461
    %v1463 = vpop.f32.mrb[0].mxu0
    %1464 = vmatprep.mubr.f32.mxu0 0.0
    %1465 = vmatmul.mubr.f32.gmra.mrb[0].mxu0 %v873
    %v1466 = vpop.f32.mrb[0].mxu0
    %v1467 = vadd.f32 0.0, %v1466
    %v1468 = vpop.f32.mrb[0].mxu0
    %1469 = vdwg.mxu0
    %v1470 = vadd.f32 %v1384, %v1462
    %v1471 = vadd.f32 %v1389, %v1467
    %v1472 = vadd.f32 %v1235, %v1470
    %v1473 = vadd.f32 %v1236, %v1471
    %v1474 = vld [vmem:[%s10] sm:$0x1]
    %v1476 = vlaneseq
    %v1477 = vshrl.u32 %v1476, 7
    %v1478 = vsub.s32 0, %v1477
    %v1479 = vrot.slane %v1474, %v1478
    %v1481 = vadd.f32 %v1472, %v1479
    %v1482 = vadd.f32 %v1473, %v1479
    %v1483 = vxor.u32 %v1481, 2147483648
    %v1484 = vxor.u32 %v1482, 2147483648
    %v1485 = vmul.f32 %v1483, 1.442695
    %v1486 = vpow.pop %v1485
    %v1487 = vmul.f32 %v1484, 1.442695
    %v1488 = vpow.pop %v1487
    %v1489 = vadd.f32 %v1486, 1.0
    %v1490 = vadd.f32 %v1488, 1.0
    %v1491 = vrcp.pop %v1489
    %v1492 = vmul.f32 1.0, %v1491
    %v1493 = vrcp.pop %v1490
    %v1494 = vmul.f32 1.0, %v1493
    %v1495 = vmul.f32 %v972, %v264
    %v1496 = vmul.f32 %v974, %v265
    %1497 = vmatprep.subr.mxu0 0.0
    %1498 = vmatpush1.msra.mxu0 %v1495
    %1499 = vmatprep.subr.mxu0 0.0
    %1500 = vmatpush1.msra.mxu0 %v1496
    %1501 = vmatprep.subr.mxu0 0.0
    %1502 = vmatpush1.msra.mxu0 0.0
    %1503 = vmatprep.subr.mxu0 0.0
    %1504 = vmatpush1.msra.mxu0 0.0
    %1505 = vmatprep.subr.mxu0 0.0
    %1506 = vmatpush1.msra.mxu0 0.0
    %1507 = vmatprep.subr.mxu0 0.0
    %1508 = vmatpush1.msra.mxu0 0.0
    %1509 = vmatprep.subr.mxu0 0.0
    %1510 = vmatpush1.msra.mxu0 0.0
    %1511 = vmatprep.subr.mxu0 0.0
    %1512 = vmatpush1.msra.mxu0 0.0
    %1513 = vmatprep.subr.mxu0 0.0
    %1514 = vmatpush1.msra.mxu0 0.0
    %1515 = vmatprep.subr.mxu0 0.0
    %1516 = vmatpush1.msra.mxu0 0.0
    %1517 = vmatprep.subr.mxu0 0.0
    %1518 = vmatpush1.msra.mxu0 0.0
    %1519 = vmatprep.subr.mxu0 0.0
    %1520 = vmatpush1.msra.mxu0 0.0
    %1521 = vmatprep.subr.mxu0 0.0
    %1522 = vmatpush1.msra.mxu0 0.0
    %1523 = vmatprep.subr.mxu0 0.0
    %1524 = vmatpush1.msra.mxu0 0.0
    %1525 = vmatprep.subr.mxu0 0.0
    %1526 = vmatpush1.msra.mxu0 0.0
    %1527 = vmatprep.subr.mxu0 0.0
    %1528 = vmatpush1.msra.mxu0 0.0
    %1529 = vmatprep.subr.mxu0 0.0
    %1530 = vmatpush1.msra.mxu0 0.0
    %1531 = vmatprep.subr.mxu0 0.0
    %1532 = vmatpush1.msra.mxu0 0.0
    %1533 = vmatprep.subr.mxu0 0.0
    %1534 = vmatpush1.msra.mxu0 0.0
    %1535 = vmatprep.subr.mxu0 0.0
    %1536 = vmatpush1.msra.mxu0 0.0
    %1537 = vmatprep.subr.mxu0 0.0
    %1538 = vmatpush1.msra.mxu0 0.0
    %1539 = vmatprep.subr.mxu0 0.0
    %1540 = vmatpush1.msra.mxu0 0.0
    %1541 = vmatprep.subr.mxu0 0.0
    %1542 = vmatpush1.msra.mxu0 0.0
    %1543 = vmatprep.subr.mxu0 0.0
    %1544 = vmatpush1.msra.mxu0 0.0
    %1545 = vmatprep.subr.mxu0 0.0
    %1546 = vmatpush1.msra.mxu0 0.0
    %1547 = vmatprep.subr.mxu0 0.0
    %1548 = vmatpush1.msra.mxu0 0.0
    %1549 = vmatprep.subr.mxu0 0.0
    %1550 = vmatpush1.msra.mxu0 0.0
    %1551 = vmatprep.subr.mxu0 0.0
    %1552 = vmatpush1.msra.mxu0 0.0
    %1553 = vmatprep.subr.mxu0 0.0
    %1554 = vmatpush1.msra.mxu0 0.0
    %1555 = vmatprep.subr.mxu0 0.0
    %1556 = vmatpush1.msra.mxu0 0.0
    %1557 = vmatprep.subr.mxu0 0.0
    %1558 = vmatpush1.msra.mxu0 0.0
    %1559 = vmatprep.subr.mxu0 0.0
    %1560 = vmatpush1.msra.mxu0 0.0
    %1561 = vmatprep.mubr.f32.mxu0 0.0
    %1562 = vmatmul.mubr.f32.gmra.mrb[0].mxu0 %v268
    %v1563 = vpop.f32.mrb[0].mxu0
    %v1564 = vadd.f32 0.0, %v1563
    %v1565 = vpop.f32.mrb[0].mxu0
    %1566 = vmatprep.mubr.f32.mxu0 0.0
    %1567 = vmatmul.mubr.f32.gmra.mrb[0].mxu0 %v271
    %v1568 = vpop.f32.mrb[0].mxu0
    %v1569 = vadd.f32 0.0, %v1568
    %v1570 = vpop.f32.mrb[0].mxu0
    %1571 = vdwg.mxu0
    %1572 = vmatprep.subr.mxu0 0.0
    %1573 = vmatpush1.msra.mxu0 %v1564
    %1574 = vmatprep.subr.mxu0 0.0
    %1575 = vmatpush1.msra.mxu0 %v1569
    %1576 = vmatprep.subr.mxu0 0.0
    %1577 = vmatpush1.msra.mxu0 0.0
    %1578 = vmatprep.subr.mxu0 0.0
    %1579 = vmatpush1.msra.mxu0 0.0
    %1580 = vmatprep.subr.mxu0 0.0
    %1581 = vmatpush1.msra.mxu0 0.0
    %1582 = vmatprep.subr.mxu0 0.0
    %1583 = vmatpush1.msra.mxu0 0.0
    %1584 = vmatprep.subr.mxu0 0.0
    %1585 = vmatpush1.msra.mxu0 0.0
    %1586 = vmatprep.subr.mxu0 0.0
    %1587 = vmatpush1.msra.mxu0 0.0
    %1588 = vmatprep.subr.mxu0 0.0
    %1589 = vmatpush1.msra.mxu0 0.0
    %1590 = vmatprep.subr.mxu0 0.0
    %1591 = vmatpush1.msra.mxu0 0.0
    %1592 = vmatprep.subr.mxu0 0.0
    %1593 = vmatpush1.msra.mxu0 0.0
    %1594 = vmatprep.subr.mxu0 0.0
    %1595 = vmatpush1.msra.mxu0 0.0
    %1596 = vmatprep.subr.mxu0 0.0
    %1597 = vmatpush1.msra.mxu0 0.0
    %1598 = vmatprep.subr.mxu0 0.0
    %1599 = vmatpush1.msra.mxu0 0.0
    %1600 = vmatprep.subr.mxu0 0.0
    %1601 = vmatpush1.msra.mxu0 0.0
    %1602 = vmatprep.subr.mxu0 0.0
    %1603 = vmatpush1.msra.mxu0 0.0
    %1604 = vmatprep.subr.mxu0 0.0
    %1605 = vmatpush1.msra.mxu0 0.0
    %1606 = vmatprep.subr.mxu0 0.0
    %1607 = vmatpush1.msra.mxu0 0.0
    %1608 = vmatprep.subr.mxu0 0.0
    %1609 = vmatpush1.msra.mxu0 0.0
    %1610 = vmatprep.subr.mxu0 0.0
    %1611 = vmatpush1.msra.mxu0 0.0
    %1612 = vmatprep.subr.mxu0 0.0
    %1613 = vmatpush1.msra.mxu0 0.0
    %1614 = vmatprep.subr.mxu0 0.0
    %1615 = vmatpush1.msra.mxu0 0.0
    %1616 = vmatprep.subr.mxu0 0.0
    %1617 = vmatpush1.msra.mxu0 0.0
    %1618 = vmatprep.subr.mxu0 0.0
    %1619 = vmatpush1.msra.mxu0 0.0
    %1620 = vmatprep.subr.mxu0 0.0
    %1621 = vmatpush1.msra.mxu0 0.0
    %1622 = vmatprep.subr.mxu0 0.0
    %1623 = vmatpush1.msra.mxu0 0.0
    %1624 = vmatprep.subr.mxu0 0.0
    %1625 = vmatpush1.msra.mxu0 0.0
    %1626 = vmatprep.subr.mxu0 0.0
    %1627 = vmatpush1.msra.mxu0 0.0
    %1628 = vmatprep.subr.mxu0 0.0
    %1629 = vmatpush1.msra.mxu0 0.0
    %1630 = vmatprep.subr.mxu0 0.0
    %1631 = vmatpush1.msra.mxu0 0.0
    %1632 = vmatprep.subr.mxu0 0.0
    %1633 = vmatpush1.msra.mxu0 0.0
    %1634 = vmatprep.subr.mxu0 0.0
    %1635 = vmatpush1.msra.mxu0 0.0
    %1636 = vmatprep.mubr.f32.mxu0 0.0
    %1637 = vmatmul.mubr.f32.gmra.mrb[0].mxu0 %v268
    %v1638 = vpop.f32.mrb[0].mxu0
    %v1639 = vadd.f32 0.0, %v1638
    %v1640 = vpop.f32.mrb[0].mxu0
    %1641 = vmatprep.mubr.f32.mxu0 0.0
    %1642 = vmatmul.mubr.f32.gmra.mrb[0].mxu0 %v271
    %v1643 = vpop.f32.mrb[0].mxu0
    %v1644 = vadd.f32 0.0, %v1643
    %v1645 = vpop.f32.mrb[0].mxu0
    %1646 = vdwg.mxu0
    %v1647 = vmul.f32 %v1639, 2.0
    %v1648 = vmul.f32 %v1644, 2.0
    %v1649 = vsub.f32 %v1647, %v1495
    %v1650 = vsub.f32 %v1648, %v1496
    %v1651 = vld [vmem:[#allocation7] sm:$0x1]
    %v1653 = vlaneseq
    %v1654 = vshrl.u32 %v1653, 7
    %v1655 = vsub.s32 0, %v1654
    %v1656 = vrot.slane %v1651, %v1655
    %v1658 = vmul.f32 %v431, %v1656
    %v1659 = vmul.f32 %v436, %v1656
    %s1660 = scalar_lea.vmem [#allocation7], 1
    %v1661 = vld [vmem:[%s1660] sm:$0x1]
    %v1663 = vlaneseq
    %v1664 = vshrl.u32 %v1663, 7
    %v1665 = vsub.s32 0, %v1664
    %v1666 = vrot.slane %v1661, %v1665
    %v1668 = vmul.f32 %v431, %v1666
    %v1669 = vmul.f32 %v436, %v1666
    %1670 = vmatprep.subr.mxu0 0.0
    %1671 = vmatpush1.msra.mxu0 %v1668
    %1672 = vmatprep.subr.mxu0 0.0
    %1673 = vmatpush1.msra.mxu0 %v1669
    %1674 = vmatprep.subr.mxu0 0.0
    %1675 = vmatpush1.msra.mxu0 0.0
    %1676 = vmatprep.subr.mxu0 0.0
    %1677 = vmatpush1.msra.mxu0 0.0
    %1678 = vmatprep.subr.mxu0 0.0
    %1679 = vmatpush1.msra.mxu0 0.0
    %1680 = vmatprep.subr.mxu0 0.0
    %1681 = vmatpush1.msra.mxu0 0.0
    %1682 = vmatprep.subr.mxu0 0.0
    %1683 = vmatpush1.msra.mxu0 0.0
    %1684 = vmatprep.subr.mxu0 0.0
    %1685 = vmatpush1.msra.mxu0 0.0
    %1686 = vmatprep.subr.mxu0 0.0
    %1687 = vmatpush1.msra.mxu0 0.0
    %1688 = vmatprep.subr.mxu0 0.0
    %1689 = vmatpush1.msra.mxu0 0.0
    %1690 = vmatprep.subr.mxu0 0.0
    %1691 = vmatpush1.msra.mxu0 0.0
    %1692 = vmatprep.subr.mxu0 0.0
    %1693 = vmatpush1.msra.mxu0 0.0
    %1694 = vmatprep.subr.mxu0 0.0
    %1695 = vmatpush1.msra.mxu0 0.0
    %1696 = vmatprep.subr.mxu0 0.0
    %1697 = vmatpush1.msra.mxu0 0.0
    %1698 = vmatprep.subr.mxu0 0.0
    %1699 = vmatpush1.msra.mxu0 0.0
    %1700 = vmatprep.subr.mxu0 0.0
    %1701 = vmatpush1.msra.mxu0 0.0
    %1702 = vmatprep.subr.mxu0 0.0
    %1703 = vmatpush1.msra.mxu0 0.0
    %1704 = vmatprep.subr.mxu0 0.0
    %1705 = vmatpush1.msra.mxu0 0.0
    %1706 = vmatprep.subr.mxu0 0.0
    %1707 = vmatpush1.msra.mxu0 0.0
    %1708 = vmatprep.subr.mxu0 0.0
    %1709 = vmatpush1.msra.mxu0 0.0
    %1710 = vmatprep.subr.mxu0 0.0
    %1711 = vmatpush1.msra.mxu0 0.0
    %1712 = vmatprep.subr.mxu0 0.0
    %1713 = vmatpush1.msra.mxu0 0.0
    %1714 = vmatprep.subr.mxu0 0.0
    %1715 = vmatpush1.msra.mxu0 0.0
    %1716 = vmatprep.subr.mxu0 0.0
    %1717 = vmatpush1.msra.mxu0 0.0
    %1718 = vmatprep.subr.mxu0 0.0
    %1719 = vmatpush1.msra.mxu0 0.0
    %1720 = vmatprep.subr.mxu0 0.0
    %1721 = vmatpush1.msra.mxu0 0.0
    %1722 = vmatprep.subr.mxu0 0.0
    %1723 = vmatpush1.msra.mxu0 0.0
    %1724 = vmatprep.subr.mxu0 0.0
    %1725 = vmatpush1.msra.mxu0 0.0
    %1726 = vmatprep.subr.mxu0 0.0
    %1727 = vmatpush1.msra.mxu0 0.0
    %1728 = vmatprep.subr.mxu0 0.0
    %1729 = vmatpush1.msra.mxu0 0.0
    %1730 = vmatprep.subr.mxu0 0.0
    %1731 = vmatpush1.msra.mxu0 0.0
    %1732 = vmatprep.subr.mxu0 0.0
    %1733 = vmatpush1.msra.mxu0 0.0
    %1734 = vmatprep.mubr.f32.mxu0 0.0
    %1735 = vmatmul.mubr.f32.gmra.mrb[0].mxu0 %v268
    %v1736 = vpop.f32.mrb[0].mxu0
    %v1737 = vadd.f32 0.0, %v1736
    %v1738 = vpop.f32.mrb[0].mxu0
    %1739 = vmatprep.mubr.f32.mxu0 0.0
    %1740 = vmatmul.mubr.f32.gmra.mrb[0].mxu0 %v271
    %v1741 = vpop.f32.mrb[0].mxu0
    %v1742 = vadd.f32 0.0, %v1741
    %v1743 = vpop.f32.mrb[0].mxu0
    %1744 = vdwg.mxu0
    %v1745 = vadd.f32 %v1658, %v1737
    %v1746 = vadd.f32 %v1659, %v1742
    %s1747 = scalar_lea.vmem [#allocation7], 2
    %v1748 = vld [vmem:[%s1747] sm:$0x1]
    %v1750 = vlaneseq
    %v1751 = vshrl.u32 %v1750, 7
    %v1752 = vsub.s32 0, %v1751
    %v1753 = vrot.slane %v1748, %v1752
    %v1755 = vmul.f32 %v431, %v1753
    %v1756 = vmul.f32 %v436, %v1753
    %1757 = vmatprep.subr.mxu0 0.0
    %1758 = vmatpush1.msra.mxu0 %v1755
    %1759 = vmatprep.subr.mxu0 0.0
    %1760 = vmatpush1.msra.mxu0 %v1756
    %1761 = vmatprep.subr.mxu0 0.0
    %1762 = vmatpush1.msra.mxu0 0.0
    %1763 = vmatprep.subr.mxu0 0.0
    %1764 = vmatpush1.msra.mxu0 0.0
    %1765 = vmatprep.subr.mxu0 0.0
    %1766 = vmatpush1.msra.mxu0 0.0
    %1767 = vmatprep.subr.mxu0 0.0
    %1768 = vmatpush1.msra.mxu0 0.0
    %1769 = vmatprep.subr.mxu0 0.0
    %1770 = vmatpush1.msra.mxu0 0.0
    %1771 = vmatprep.subr.mxu0 0.0
    %1772 = vmatpush1.msra.mxu0 0.0
    %1773 = vmatprep.subr.mxu0 0.0
    %1774 = vmatpush1.msra.mxu0 0.0
    %1775 = vmatprep.subr.mxu0 0.0
    %1776 = vmatpush1.msra.mxu0 0.0
    %1777 = vmatprep.subr.mxu0 0.0
    %1778 = vmatpush1.msra.mxu0 0.0
    %1779 = vmatprep.subr.mxu0 0.0
    %1780 = vmatpush1.msra.mxu0 0.0
    %1781 = vmatprep.subr.mxu0 0.0
    %1782 = vmatpush1.msra.mxu0 0.0
    %1783 = vmatprep.subr.mxu0 0.0
    %1784 = vmatpush1.msra.mxu0 0.0
    %1785 = vmatprep.subr.mxu0 0.0
    %1786 = vmatpush1.msra.mxu0 0.0
    %1787 = vmatprep.subr.mxu0 0.0
    %1788 = vmatpush1.msra.mxu0 0.0
    %1789 = vmatprep.subr.mxu0 0.0
    %1790 = vmatpush1.msra.mxu0 0.0
    %1791 = vmatprep.subr.mxu0 0.0
    %1792 = vmatpush1.msra.mxu0 0.0
    %1793 = vmatprep.subr.mxu0 0.0
    %1794 = vmatpush1.msra.mxu0 0.0
    %1795 = vmatprep.subr.mxu0 0.0
    %1796 = vmatpush1.msra.mxu0 0.0
    %1797 = vmatprep.subr.mxu0 0.0
    %1798 = vmatpush1.msra.mxu0 0.0
    %1799 = vmatprep.subr.mxu0 0.0
    %1800 = vmatpush1.msra.mxu0 0.0
    %1801 = vmatprep.subr.mxu0 0.0
    %1802 = vmatpush1.msra.mxu0 0.0
    %1803 = vmatprep.subr.mxu0 0.0
    %1804 = vmatpush1.msra.mxu0 0.0
    %1805 = vmatprep.subr.mxu0 0.0
    %1806 = vmatpush1.msra.mxu0 0.0
    %1807 = vmatprep.subr.mxu0 0.0
    %1808 = vmatpush1.msra.mxu0 0.0
    %1809 = vmatprep.subr.mxu0 0.0
    %1810 = vmatpush1.msra.mxu0 0.0
    %1811 = vmatprep.subr.mxu0 0.0
    %1812 = vmatpush1.msra.mxu0 0.0
    %1813 = vmatprep.subr.mxu0 0.0
    %1814 = vmatpush1.msra.mxu0 0.0
    %1815 = vmatprep.subr.mxu0 0.0
    %1816 = vmatpush1.msra.mxu0 0.0
    %1817 = vmatprep.subr.mxu0 0.0
    %1818 = vmatpush1.msra.mxu0 0.0
    %1819 = vmatprep.subr.mxu0 0.0
    %1820 = vmatpush1.msra.mxu0 0.0
    %1821 = vmatprep.mubr.f32.mxu0 0.0
    %1822 = vmatmul.mubr.f32.gmra.mrb[0].mxu0 %v268
    %v1823 = vpop.f32.mrb[0].mxu0
    %v1824 = vadd.f32 0.0, %v1823
    %v1825 = vpop.f32.mrb[0].mxu0
    %1826 = vmatprep.mubr.f32.mxu0 0.0
    %1827 = vmatmul.mubr.f32.gmra.mrb[0].mxu0 %v271
    %v1828 = vpop.f32.mrb[0].mxu0
    %v1829 = vadd.f32 0.0, %v1828
    %v1830 = vpop.f32.mrb[0].mxu0
    %1831 = vdwg.mxu0
    %1832 = vmatprep.subr.mxu0 0.0
    %1833 = vmatpush1.msra.mxu0 %v1824
    %1834 = vmatprep.subr.mxu0 0.0
    %1835 = vmatpush1.msra.mxu0 %v1829
    %1836 = vmatprep.subr.mxu0 0.0
    %1837 = vmatpush1.msra.mxu0 0.0
    %1838 = vmatprep.subr.mxu0 0.0
    %1839 = vmatpush1.msra.mxu0 0.0
    %1840 = vmatprep.subr.mxu0 0.0
    %1841 = vmatpush1.msra.mxu0 0.0
    %1842 = vmatprep.subr.mxu0 0.0
    %1843 = vmatpush1.msra.mxu0 0.0
    %1844 = vmatprep.subr.mxu0 0.0
    %1845 = vmatpush1.msra.mxu0 0.0
    %1846 = vmatprep.subr.mxu0 0.0
    %1847 = vmatpush1.msra.mxu0 0.0
    %1848 = vmatprep.subr.mxu0 0.0
    %1849 = vmatpush1.msra.mxu0 0.0
    %1850 = vmatprep.subr.mxu0 0.0
    %1851 = vmatpush1.msra.mxu0 0.0
    %1852 = vmatprep.subr.mxu0 0.0
    %1853 = vmatpush1.msra.mxu0 0.0
    %1854 = vmatprep.subr.mxu0 0.0
    %1855 = vmatpush1.msra.mxu0 0.0
    %1856 = vmatprep.subr.mxu0 0.0
    %1857 = vmatpush1.msra.mxu0 0.0
    %1858 = vmatprep.subr.mxu0 0.0
    %1859 = vmatpush1.msra.mxu0 0.0
    %1860 = vmatprep.subr.mxu0 0.0
    %1861 = vmatpush1.msra.mxu0 0.0
    %1862 = vmatprep.subr.mxu0 0.0
    %1863 = vmatpush1.msra.mxu0 0.0
    %1864 = vmatprep.subr.mxu0 0.0
    %1865 = vmatpush1.msra.mxu0 0.0
    %1866 = vmatprep.subr.mxu0 0.0
    %1867 = vmatpush1.msra.mxu0 0.0
    %1868 = vmatprep.subr.mxu0 0.0
    %1869 = vmatpush1.msra.mxu0 0.0
    %1870 = vmatprep.subr.mxu0 0.0
    %1871 = vmatpush1.msra.mxu0 0.0
    %1872 = vmatprep.subr.mxu0 0.0
    %1873 = vmatpush1.msra.mxu0 0.0
    %1874 = vmatprep.subr.mxu0 0.0
    %1875 = vmatpush1.msra.mxu0 0.0
    %1876 = vmatprep.subr.mxu0 0.0
    %1877 = vmatpush1.msra.mxu0 0.0
    %1878 = vmatprep.subr.mxu0 0.0
    %1879 = vmatpush1.msra.mxu0 0.0
    %1880 = vmatprep.subr.mxu0 0.0
    %1881 = vmatpush1.msra.mxu0 0.0
    %1882 = vmatprep.subr.mxu0 0.0
    %1883 = vmatpush1.msra.mxu0 0.0
    %1884 = vmatprep.subr.mxu0 0.0
    %1885 = vmatpush1.msra.mxu0 0.0
    %1886 = vmatprep.subr.mxu0 0.0
    %1887 = vmatpush1.msra.mxu0 0.0
    %1888 = vmatprep.subr.mxu0 0.0
    %1889 = vmatpush1.msra.mxu0 0.0
    %1890 = vmatprep.subr.mxu0 0.0
    %1891 = vmatpush1.msra.mxu0 0.0
    %1892 = vmatprep.subr.mxu0 0.0
    %1893 = vmatpush1.msra.mxu0 0.0
    %1894 = vmatprep.subr.mxu0 0.0
    %1895 = vmatpush1.msra.mxu0 0.0
    %1896 = vmatprep.mubr.f32.mxu0 0.0
    %1897 = vmatmul.mubr.f32.gmra.mrb[0].mxu0 %v268
    %v1898 = vpop.f32.mrb[0].mxu0
    %v1899 = vadd.f32 0.0, %v1898
    %v1900 = vpop.f32.mrb[0].mxu0
    %1901 = vmatprep.mubr.f32.mxu0 0.0
    %1902 = vmatmul.mubr.f32.gmra.mrb[0].mxu0 %v271
    %v1903 = vpop.f32.mrb[0].mxu0
    %v1904 = vadd.f32 0.0, %v1903
    %v1905 = vpop.f32.mrb[0].mxu0
    %1906 = vdwg.mxu0
    %v1907 = vmul.f32 %v1899, 2.0
    %v1908 = vmul.f32 %v1904, 2.0
    %v1909 = vsub.f32 %v1907, %v1755
    %v1910 = vsub.f32 %v1908, %v1756
    %v1911 = vadd.f32 %v1745, %v1909
    %v1912 = vadd.f32 %v1746, %v1910
    %v1913 = vld [vmem:[#allocation10] sm:$0xff]
    %v1914 = vld [vmem:[#allocation10 + $0x8] sm:$0xff]
    %s1915 = scalar_lea.vmem [#allocation10], 16
    %v1916 = vld [vmem:[%s1915] sm:$0xff]
    %v1917 = vld [vmem:[%s1915 + $0x8] sm:$0xff]
    %v1919 = vsel %vm266, %v1564, 0
    %v1922 = vsel %vm266, %v1569, 0
    %1924 = vmatprep.subr.mxu0 0.0
    %1925 = vmatpush1.msra.mxu0 %v1916
    %1926 = vmatprep.subr.mxu0 0.0
    %1927 = vmatpush1.msra.mxu0 %v1917
    %1928 = vmatprep.subr.mxu0 0.0
    %1929 = vmatpush1.msra.mxu0 0.0
    %1930 = vmatprep.subr.mxu0 0.0
    %1931 = vmatpush1.msra.mxu0 0.0
    %1932 = vmatprep.subr.mxu0 0.0
    %1933 = vmatpush1.msra.mxu0 0.0
    %1934 = vmatprep.subr.mxu0 0.0
    %1935 = vmatpush1.msra.mxu0 0.0
    %1936 = vmatprep.subr.mxu0 0.0
    %1937 = vmatpush1.msra.mxu0 0.0
    %1938 = vmatprep.subr.mxu0 0.0
    %1939 = vmatpush1.msra.mxu0 0.0
    %1940 = vmatprep.subr.mxu0 0.0
    %1941 = vmatpush1.msra.mxu0 0.0
    %1942 = vmatprep.subr.mxu0 0.0
    %1943 = vmatpush1.msra.mxu0 0.0
    %1944 = vmatprep.subr.mxu0 0.0
    %1945 = vmatpush1.msra.mxu0 0.0
    %1946 = vmatprep.subr.mxu0 0.0
    %1947 = vmatpush1.msra.mxu0 0.0
    %1948 = vmatprep.subr.mxu0 0.0
    %1949 = vmatpush1.msra.mxu0 0.0
    %1950 = vmatprep.subr.mxu0 0.0
    %1951 = vmatpush1.msra.mxu0 0.0
    %1952 = vmatprep.subr.mxu0 0.0
    %1953 = vmatpush1.msra.mxu0 0.0
    %1954 = vmatprep.subr.mxu0 0.0
    %1955 = vmatpush1.msra.mxu0 0.0
    %1956 = vmatprep.subr.mxu0 0.0
    %1957 = vmatpush1.msra.mxu0 0.0
    %1958 = vmatprep.subr.mxu0 0.0
    %1959 = vmatpush1.msra.mxu0 0.0
    %1960 = vmatprep.subr.mxu0 0.0
    %1961 = vmatpush1.msra.mxu0 0.0
    %1962 = vmatprep.subr.mxu0 0.0
    %1963 = vmatpush1.msra.mxu0 0.0
    %1964 = vmatprep.subr.mxu0 0.0
    %1965 = vmatpush1.msra.mxu0 0.0
    %1966 = vmatprep.subr.mxu0 0.0
    %1967 = vmatpush1.msra.mxu0 0.0
    %1968 = vmatprep.subr.mxu0 0.0
    %1969 = vmatpush1.msra.mxu0 0.0
    %1970 = vmatprep.subr.mxu0 0.0
    %1971 = vmatpush1.msra.mxu0 0.0
    %1972 = vmatprep.subr.mxu0 0.0
    %1973 = vmatpush1.msra.mxu0 0.0
    %1974 = vmatprep.subr.mxu0 0.0
    %1975 = vmatpush1.msra.mxu0 0.0
    %1976 = vmatprep.subr.mxu0 0.0
    %1977 = vmatpush1.msra.mxu0 0.0
    %1978 = vmatprep.subr.mxu0 0.0
    %1979 = vmatpush1.msra.mxu0 0.0
    %1980 = vmatprep.subr.mxu0 0.0
    %1981 = vmatpush1.msra.mxu0 0.0
    %1982 = vmatprep.subr.mxu0 0.0
    %1983 = vmatpush1.msra.mxu0 0.0
    %1984 = vmatprep.subr.mxu0 0.0
    %1985 = vmatpush1.msra.mxu0 0.0
    %1986 = vmatprep.subr.mxu0 0.0
    %1987 = vmatpush1.msra.mxu0 0.0
    %1988 = vmatprep.mubr.f32.mxu0 0.0
    %1989 = vmatmul.mubr.f32.gmra.mrb[0].mxu0 %v1919
    %v1990 = vpop.f32.mrb[0].mxu0
    %v1991 = vadd.f32 0.0, %v1990
    %v1992 = vpop.f32.mrb[0].mxu0
    %1993 = vmatprep.mubr.f32.mxu0 0.0
    %1994 = vmatmul.mubr.f32.gmra.mrb[0].mxu0 %v1922
    %v1995 = vpop.f32.mrb[0].mxu0
    %v1996 = vadd.f32 0.0, %v1995
    %v1997 = vpop.f32.mrb[0].mxu0
    %1998 = vdwg.mxu0
    %v2000 = vsel %vm266, %v1495, 0
    %v2003 = vsel %vm266, %v1496, 0
    %2005 = vmatprep.subr.mxu0 0.0
    %2006 = vmatpush1.msra.mxu0 %v1913
    %2007 = vmatprep.subr.mxu0 0.0
    %2008 = vmatpush1.msra.mxu0 %v1914
    %2009 = vmatprep.subr.mxu0 0.0
    %2010 = vmatpush1.msra.mxu0 0.0
    %2011 = vmatprep.subr.mxu0 0.0
    %2012 = vmatpush1.msra.mxu0 0.0
    %2013 = vmatprep.subr.mxu0 0.0
    %2014 = vmatpush1.msra.mxu0 0.0
    %2015 = vmatprep.subr.mxu0 0.0
    %2016 = vmatpush1.msra.mxu0 0.0
    %2017 = vmatprep.subr.mxu0 0.0
    %2018 = vmatpush1.msra.mxu0 0.0
    %2019 = vmatprep.subr.mxu0 0.0
    %2020 = vmatpush1.msra.mxu0 0.0
    %2021 = vmatprep.subr.mxu0 0.0
    %2022 = vmatpush1.msra.mxu0 0.0
    %2023 = vmatprep.subr.mxu0 0.0
    %2024 = vmatpush1.msra.mxu0 0.0
    %2025 = vmatprep.subr.mxu0 0.0
    %2026 = vmatpush1.msra.mxu0 0.0
    %2027 = vmatprep.subr.mxu0 0.0
    %2028 = vmatpush1.msra.mxu0 0.0
    %2029 = vmatprep.subr.mxu0 0.0
    %2030 = vmatpush1.msra.mxu0 0.0
    %2031 = vmatprep.subr.mxu0 0.0
    %2032 = vmatpush1.msra.mxu0 0.0
    %2033 = vmatprep.subr.mxu0 0.0
    %2034 = vmatpush1.msra.mxu0 0.0
    %2035 = vmatprep.subr.mxu0 0.0
    %2036 = vmatpush1.msra.mxu0 0.0
    %2037 = vmatprep.subr.mxu0 0.0
    %2038 = vmatpush1.msra.mxu0 0.0
    %2039 = vmatprep.subr.mxu0 0.0
    %2040 = vmatpush1.msra.mxu0 0.0
    %2041 = vmatprep.subr.mxu0 0.0
    %2042 = vmatpush1.msra.mxu0 0.0
    %2043 = vmatprep.subr.mxu0 0.0
    %2044 = vmatpush1.msra.mxu0 0.0
    %2045 = vmatprep.subr.mxu0 0.0
    %2046 = vmatpush1.msra.mxu0 0.0
    %2047 = vmatprep.subr.mxu0 0.0
    %2048 = vmatpush1.msra.mxu0 0.0
    %2049 = vmatprep.subr.mxu0 0.0
    %2050 = vmatpush1.msra.mxu0 0.0
    %2051 = vmatprep.subr.mxu0 0.0
    %2052 = vmatpush1.msra.mxu0 0.0
    %2053 = vmatprep.subr.mxu0 0.0
    %2054 = vmatpush1.msra.mxu0 0.0
    %2055 = vmatprep.subr.mxu0 0.0
    %2056 = vmatpush1.msra.mxu0 0.0
    %2057 = vmatprep.subr.mxu0 0.0
    %2058 = vmatpush1.msra.mxu0 0.0
    %2059 = vmatprep.subr.mxu0 0.0
    %2060 = vmatpush1.msra.mxu0 0.0
    %2061 = vmatprep.subr.mxu0 0.0
    %2062 = vmatpush1.msra.mxu0 0.0
    %2063 = vmatprep.subr.mxu0 0.0
    %2064 = vmatpush1.msra.mxu0 0.0
    %2065 = vmatprep.subr.mxu0 0.0
    %2066 = vmatpush1.msra.mxu0 0.0
    %2067 = vmatprep.subr.mxu0 0.0
    %2068 = vmatpush1.msra.mxu0 0.0
    %2069 = vmatprep.mubr.f32.mxu0 0.0
    %2070 = vmatmul.mubr.f32.gmra.mrb[0].mxu0 %v2000
    %v2071 = vpop.f32.mrb[0].mxu0
    %v2072 = vadd.f32 %v1991, %v2071
    %v2073 = vpop.f32.mrb[0].mxu0
    %2074 = vmatprep.mubr.f32.mxu0 0.0
    %2075 = vmatmul.mubr.f32.gmra.mrb[0].mxu0 %v2003
    %v2076 = vpop.f32.mrb[0].mxu0
    %v2077 = vadd.f32 %v1996, %v2076
    %v2078 = vpop.f32.mrb[0].mxu0
    %2079 = vdwg.mxu0
    %s2080 = scalar_lea.vmem [#allocation10], 32
    %v2081 = vld [vmem:[%s2080] sm:$0xff]
    %v2082 = vld [vmem:[%s2080 + $0x8] sm:$0xff]
    %v2084 = vsel %vm266, %v1649, 0
    %v2087 = vsel %vm266, %v1650, 0
    %2089 = vmatprep.subr.mxu0 0.0
    %2090 = vmatpush1.msra.mxu0 %v2081
    %2091 = vmatprep.subr.mxu0 0.0
    %2092 = vmatpush1.msra.mxu0 %v2082
    %2093 = vmatprep.subr.mxu0 0.0
    %2094 = vmatpush1.msra.mxu0 0.0
    %2095 = vmatprep.subr.mxu0 0.0
    %2096 = vmatpush1.msra.mxu0 0.0
    %2097 = vmatprep.subr.mxu0 0.0
    %2098 = vmatpush1.msra.mxu0 0.0
    %2099 = vmatprep.subr.mxu0 0.0
    %2100 = vmatpush1.msra.mxu0 0.0
    %2101 = vmatprep.subr.mxu0 0.0
    %2102 = vmatpush1.msra.mxu0 0.0
    %2103 = vmatprep.subr.mxu0 0.0
    %2104 = vmatpush1.msra.mxu0 0.0
    %2105 = vmatprep.subr.mxu0 0.0
    %2106 = vmatpush1.msra.mxu0 0.0
    %2107 = vmatprep.subr.mxu0 0.0
    %2108 = vmatpush1.msra.mxu0 0.0
    %2109 = vmatprep.subr.mxu0 0.0
    %2110 = vmatpush1.msra.mxu0 0.0
    %2111 = vmatprep.subr.mxu0 0.0
    %2112 = vmatpush1.msra.mxu0 0.0
    %2113 = vmatprep.subr.mxu0 0.0
    %2114 = vmatpush1.msra.mxu0 0.0
    %2115 = vmatprep.subr.mxu0 0.0
    %2116 = vmatpush1.msra.mxu0 0.0
    %2117 = vmatprep.subr.mxu0 0.0
    %2118 = vmatpush1.msra.mxu0 0.0
    %2119 = vmatprep.subr.mxu0 0.0
    %2120 = vmatpush1.msra.mxu0 0.0
    %2121 = vmatprep.subr.mxu0 0.0
    %2122 = vmatpush1.msra.mxu0 0.0
    %2123 = vmatprep.subr.mxu0 0.0
    %2124 = vmatpush1.msra.mxu0 0.0
    %2125 = vmatprep.subr.mxu0 0.0
    %2126 = vmatpush1.msra.mxu0 0.0
    %2127 = vmatprep.subr.mxu0 0.0
    %2128 = vmatpush1.msra.mxu0 0.0
    %2129 = vmatprep.subr.mxu0 0.0
    %2130 = vmatpush1.msra.mxu0 0.0
    %2131 = vmatprep.subr.mxu0 0.0
    %2132 = vmatpush1.msra.mxu0 0.0
    %2133 = vmatprep.subr.mxu0 0.0
    %2134 = vmatpush1.msra.mxu0 0.0
    %2135 = vmatprep.subr.mxu0 0.0
    %2136 = vmatpush1.msra.mxu0 0.0
    %2137 = vmatprep.subr.mxu0 0.0
    %2138 = vmatpush1.msra.mxu0 0.0
    %2139 = vmatprep.subr.mxu0 0.0
    %2140 = vmatpush1.msra.mxu0 0.0
    %2141 = vmatprep.subr.mxu0 0.0
    %2142 = vmatpush1.msra.mxu0 0.0
    %2143 = vmatprep.subr.mxu0 0.0
    %2144 = vmatpush1.msra.mxu0 0.0
    %2145 = vmatprep.subr.mxu0 0.0
    %2146 = vmatpush1.msra.mxu0 0.0
    %2147 = vmatprep.subr.mxu0 0.0
    %2148 = vmatpush1.msra.mxu0 0.0
    %2149 = vmatprep.subr.mxu0 0.0
    %2150 = vmatpush1.msra.mxu0 0.0
    %2151 = vmatprep.subr.mxu0 0.0
    %2152 = vmatpush1.msra.mxu0 0.0
    %2153 = vmatprep.mubr.f32.mxu0 0.0
    %2154 = vmatmul.mubr.f32.gmra.mrb[0].mxu0 %v2084
    %v2155 = vpop.f32.mrb[0].mxu0
    %v2156 = vadd.f32 0.0, %v2155
    %v2157 = vpop.f32.mrb[0].mxu0
    %2158 = vmatprep.mubr.f32.mxu0 0.0
    %2159 = vmatmul.mubr.f32.gmra.mrb[0].mxu0 %v2087
    %v2160 = vpop.f32.mrb[0].mxu0
    %v2161 = vadd.f32 0.0, %v2160
    %v2162 = vpop.f32.mrb[0].mxu0
    %2163 = vdwg.mxu0
    %v2164 = vadd.f32 %v2072, %v2156
    %v2165 = vadd.f32 %v2077, %v2161
    %v2166 = vadd.f32 %v1911, %v2164
    %v2167 = vadd.f32 %v1912, %v2165
    %v2168 = vld [vmem:[#allocation11] sm:$0x1]
    %v2170 = vlaneseq
    %v2171 = vshrl.u32 %v2170, 7
    %v2172 = vsub.s32 0, %v2171
    %v2173 = vrot.slane %v2168, %v2172
    %v2175 = vadd.f32 %v2166, %v2173
    %v2176 = vadd.f32 %v2167, %v2173
    %v2177 = vtanh.pop %v2175
    %v2178 = vtanh.pop %v2176
    %v2179 = vmul.f32 %v1492, %v264
    %v2180 = vmul.f32 %v1494, %v265
    %v2181 = vsub.f32 1.0, %v1492
    %v2182 = vsub.f32 1.0, %v1494
    %v2183 = vmul.f32 %v2181, %v2177
    %v2184 = vmul.f32 %v2182, %v2178
    %v2185 = vadd.f32 %v2179, %v2183
    %v2186 = vadd.f32 %v2180, %v2184
    %2187 = vst.msk [vmem:[%s24] sm:$0xff] %vm266, %v2185
    %2188 = vst.msk [vmem:[%s24 + $0x8] sm:$0xff] %vm266, %v2186
    %s2189 = scalar_lea.vmem %s1, 16
    %v2190 = vld [vmem:[%s2189] sm:$0xff]
    %v2191 = vld [vmem:[%s2189 + $0x8] sm:$0xff]
    %2192 = vmatprep.subr.mxu0 0.0
    %2193 = vmatpush1.msra.mxu0 %v2185
    %2194 = vmatprep.subr.mxu0 0.0
    %2195 = vmatpush1.msra.mxu0 %v2186
    %2196 = vmatprep.subr.mxu0 0.0
    %2197 = vmatpush1.msra.mxu0 0.0
    %2198 = vmatprep.subr.mxu0 0.0
    %2199 = vmatpush1.msra.mxu0 0.0
    %2200 = vmatprep.subr.mxu0 0.0
    %2201 = vmatpush1.msra.mxu0 0.0
    %2202 = vmatprep.subr.mxu0 0.0
    %2203 = vmatpush1.msra.mxu0 0.0
    %2204 = vmatprep.subr.mxu0 0.0
    %2205 = vmatpush1.msra.mxu0 0.0
    %2206 = vmatprep.subr.mxu0 0.0
    %2207 = vmatpush1.msra.mxu0 0.0
    %2208 = vmatprep.subr.mxu0 0.0
    %2209 = vmatpush1.msra.mxu0 0.0
    %2210 = vmatprep.subr.mxu0 0.0
    %2211 = vmatpush1.msra.mxu0 0.0
    %2212 = vmatprep.subr.mxu0 0.0
    %2213 = vmatpush1.msra.mxu0 0.0
    %2214 = vmatprep.subr.mxu0 0.0
    %2215 = vmatpush1.msra.mxu0 0.0
    %2216 = vmatprep.subr.mxu0 0.0
    %2217 = vmatpush1.msra.mxu0 0.0
    %2218 = vmatprep.subr.mxu0 0.0
    %2219 = vmatpush1.msra.mxu0 0.0
    %2220 = vmatprep.subr.mxu0 0.0
    %2221 = vmatpush1.msra.mxu0 0.0
    %2222 = vmatprep.subr.mxu0 0.0
    %2223 = vmatpush1.msra.mxu0 0.0
    %2224 = vmatprep.subr.mxu0 0.0
    %2225 = vmatpush1.msra.mxu0 0.0
    %2226 = vmatprep.subr.mxu0 0.0
    %2227 = vmatpush1.msra.mxu0 0.0
    %2228 = vmatprep.subr.mxu0 0.0
    %2229 = vmatpush1.msra.mxu0 0.0
    %2230 = vmatprep.subr.mxu0 0.0
    %2231 = vmatpush1.msra.mxu0 0.0
    %2232 = vmatprep.subr.mxu0 0.0
    %2233 = vmatpush1.msra.mxu0 0.0
    %2234 = vmatprep.subr.mxu0 0.0
    %2235 = vmatpush1.msra.mxu0 0.0
    %2236 = vmatprep.subr.mxu0 0.0
    %2237 = vmatpush1.msra.mxu0 0.0
    %2238 = vmatprep.subr.mxu0 0.0
    %2239 = vmatpush1.msra.mxu0 0.0
    %2240 = vmatprep.subr.mxu0 0.0
    %2241 = vmatpush1.msra.mxu0 0.0
    %2242 = vmatprep.subr.mxu0 0.0
    %2243 = vmatpush1.msra.mxu0 0.0
    %2244 = vmatprep.subr.mxu0 0.0
    %2245 = vmatpush1.msra.mxu0 0.0
    %2246 = vmatprep.subr.mxu0 0.0
    %2247 = vmatpush1.msra.mxu0 0.0
    %2248 = vmatprep.subr.mxu0 0.0
    %2249 = vmatpush1.msra.mxu0 0.0
    %2250 = vmatprep.subr.mxu0 0.0
    %2251 = vmatpush1.msra.mxu0 0.0
    %2252 = vmatprep.subr.mxu0 0.0
    %2253 = vmatpush1.msra.mxu0 0.0
    %2254 = vmatprep.subr.mxu0 0.0
    %2255 = vmatpush1.msra.mxu0 0.0
    %2256 = vmatprep.mubr.f32.mxu0 0.0
    %2257 = vmatmul.mubr.f32.gmra.mrb[0].mxu0 %v268
    %v2258 = vpop.f32.mrb[0].mxu0
    %v2259 = vadd.f32 0.0, %v2258
    %v2260 = vpop.f32.mrb[0].mxu0
    %2261 = vmatprep.mubr.f32.mxu0 0.0
    %2262 = vmatmul.mubr.f32.gmra.mrb[0].mxu0 %v271
    %v2263 = vpop.f32.mrb[0].mxu0
    %v2264 = vadd.f32 0.0, %v2263
    %v2265 = vpop.f32.mrb[0].mxu0
    %2266 = vdwg.mxu0
    %2267 = vmatprep.subr.mxu0 0.0
    %2268 = vmatpush1.msra.mxu0 %v2259
    %2269 = vmatprep.subr.mxu0 0.0
    %2270 = vmatpush1.msra.mxu0 %v2264
    %2271 = vmatprep.subr.mxu0 0.0
    %2272 = vmatpush1.msra.mxu0 0.0
    %2273 = vmatprep.subr.mxu0 0.0
    %2274 = vmatpush1.msra.mxu0 0.0
    %2275 = vmatprep.subr.mxu0 0.0
    %2276 = vmatpush1.msra.mxu0 0.0
    %2277 = vmatprep.subr.mxu0 0.0
    %2278 = vmatpush1.msra.mxu0 0.0
    %2279 = vmatprep.subr.mxu0 0.0
    %2280 = vmatpush1.msra.mxu0 0.0
    %2281 = vmatprep.subr.mxu0 0.0
    %2282 = vmatpush1.msra.mxu0 0.0
    %2283 = vmatprep.subr.mxu0 0.0
    %2284 = vmatpush1.msra.mxu0 0.0
    %2285 = vmatprep.subr.mxu0 0.0
    %2286 = vmatpush1.msra.mxu0 0.0
    %2287 = vmatprep.subr.mxu0 0.0
    %2288 = vmatpush1.msra.mxu0 0.0
    %2289 = vmatprep.subr.mxu0 0.0
    %2290 = vmatpush1.msra.mxu0 0.0
    %2291 = vmatprep.subr.mxu0 0.0
    %2292 = vmatpush1.msra.mxu0 0.0
    %2293 = vmatprep.subr.mxu0 0.0
    %2294 = vmatpush1.msra.mxu0 0.0
    %2295 = vmatprep.subr.mxu0 0.0
    %2296 = vmatpush1.msra.mxu0 0.0
    %2297 = vmatprep.subr.mxu0 0.0
    %2298 = vmatpush1.msra.mxu0 0.0
    %2299 = vmatprep.subr.mxu0 0.0
    %2300 = vmatpush1.msra.mxu0 0.0
    %2301 = vmatprep.subr.mxu0 0.0
    %2302 = vmatpush1.msra.mxu0 0.0
    %2303 = vmatprep.subr.mxu0 0.0
    %2304 = vmatpush1.msra.mxu0 0.0
    %2305 = vmatprep.subr.mxu0 0.0
    %2306 = vmatpush1.msra.mxu0 0.0
    %2307 = vmatprep.subr.mxu0 0.0
    %2308 = vmatpush1.msra.mxu0 0.0
    %2309 = vmatprep.subr.mxu0 0.0
    %2310 = vmatpush1.msra.mxu0 0.0
    %2311 = vmatprep.subr.mxu0 0.0
    %2312 = vmatpush1.msra.mxu0 0.0
    %2313 = vmatprep.subr.mxu0 0.0
    %2314 = vmatpush1.msra.mxu0 0.0
    %2315 = vmatprep.subr.mxu0 0.0
    %2316 = vmatpush1.msra.mxu0 0.0
    %2317 = vmatprep.subr.mxu0 0.0
    %2318 = vmatpush1.msra.mxu0 0.0
    %2319 = vmatprep.subr.mxu0 0.0
    %2320 = vmatpush1.msra.mxu0 0.0
    %2321 = vmatprep.subr.mxu0 0.0
    %2322 = vmatpush1.msra.mxu0 0.0
    %2323 = vmatprep.subr.mxu0 0.0
    %2324 = vmatpush1.msra.mxu0 0.0
    %2325 = vmatprep.subr.mxu0 0.0
    %2326 = vmatpush1.msra.mxu0 0.0
    %2327 = vmatprep.subr.mxu0 0.0
    %2328 = vmatpush1.msra.mxu0 0.0
    %2329 = vmatprep.subr.mxu0 0.0
    %2330 = vmatpush1.msra.mxu0 0.0
    %2331 = vmatprep.mubr.f32.mxu0 0.0
    %2332 = vmatmul.mubr.f32.gmra.mrb[0].mxu0 %v268
    %v2333 = vpop.f32.mrb[0].mxu0
    %v2334 = vadd.f32 0.0, %v2333
    %v2335 = vpop.f32.mrb[0].mxu0
    %2336 = vmatprep.mubr.f32.mxu0 0.0
    %2337 = vmatmul.mubr.f32.gmra.mrb[0].mxu0 %v271
    %v2338 = vpop.f32.mrb[0].mxu0
    %v2339 = vadd.f32 0.0, %v2338
    %v2340 = vpop.f32.mrb[0].mxu0
    %2341 = vdwg.mxu0
    %v2342 = vmul.f32 %v2334, 2.0
    %v2343 = vmul.f32 %v2339, 2.0
    %v2344 = vsub.f32 %v2342, %v2185
    %v2345 = vsub.f32 %v2343, %v2186
    %2346 = vmatprep.subr.mxu0 0.0
    %2347 = vmatpush1.msra.mxu0 %v2190
    %2348 = vmatprep.subr.mxu0 0.0
    %2349 = vmatpush1.msra.mxu0 %v2191
    %2350 = vmatprep.subr.mxu0 0.0
    %2351 = vmatpush1.msra.mxu0 0.0
    %2352 = vmatprep.subr.mxu0 0.0
    %2353 = vmatpush1.msra.mxu0 0.0
    %2354 = vmatprep.subr.mxu0 0.0
    %2355 = vmatpush1.msra.mxu0 0.0
    %2356 = vmatprep.subr.mxu0 0.0
    %2357 = vmatpush1.msra.mxu0 0.0
    %2358 = vmatprep.subr.mxu0 0.0
    %2359 = vmatpush1.msra.mxu0 0.0
    %2360 = vmatprep.subr.mxu0 0.0
    %2361 = vmatpush1.msra.mxu0 0.0
    %2362 = vmatprep.subr.mxu0 0.0
    %2363 = vmatpush1.msra.mxu0 0.0
    %2364 = vmatprep.subr.mxu0 0.0
    %2365 = vmatpush1.msra.mxu0 0.0
    %2366 = vmatprep.subr.mxu0 0.0
    %2367 = vmatpush1.msra.mxu0 0.0
    %2368 = vmatprep.subr.mxu0 0.0
    %2369 = vmatpush1.msra.mxu0 0.0
    %2370 = vmatprep.subr.mxu0 0.0
    %2371 = vmatpush1.msra.mxu0 0.0
    %2372 = vmatprep.subr.mxu0 0.0
    %2373 = vmatpush1.msra.mxu0 0.0
    %2374 = vmatprep.subr.mxu0 0.0
    %2375 = vmatpush1.msra.mxu0 0.0
    %2376 = vmatprep.subr.mxu0 0.0
    %2377 = vmatpush1.msra.mxu0 0.0
    %2378 = vmatprep.subr.mxu0 0.0
    %2379 = vmatpush1.msra.mxu0 0.0
    %2380 = vmatprep.subr.mxu0 0.0
    %2381 = vmatpush1.msra.mxu0 0.0
    %2382 = vmatprep.subr.mxu0 0.0
    %2383 = vmatpush1.msra.mxu0 0.0
    %2384 = vmatprep.subr.mxu0 0.0
    %2385 = vmatpush1.msra.mxu0 0.0
    %2386 = vmatprep.subr.mxu0 0.0
    %2387 = vmatpush1.msra.mxu0 0.0
    %2388 = vmatprep.subr.mxu0 0.0
    %2389 = vmatpush1.msra.mxu0 0.0
    %2390 = vmatprep.subr.mxu0 0.0
    %2391 = vmatpush1.msra.mxu0 0.0
    %2392 = vmatprep.subr.mxu0 0.0
    %2393 = vmatpush1.msra.mxu0 0.0
    %2394 = vmatprep.subr.mxu0 0.0
    %2395 = vmatpush1.msra.mxu0 0.0
    %2396 = vmatprep.subr.mxu0 0.0
    %2397 = vmatpush1.msra.mxu0 0.0
    %2398 = vmatprep.subr.mxu0 0.0
    %2399 = vmatpush1.msra.mxu0 0.0
    %2400 = vmatprep.subr.mxu0 0.0
    %2401 = vmatpush1.msra.mxu0 0.0
    %2402 = vmatprep.subr.mxu0 0.0
    %2403 = vmatpush1.msra.mxu0 0.0
    %2404 = vmatprep.subr.mxu0 0.0
    %2405 = vmatpush1.msra.mxu0 0.0
    %2406 = vmatprep.subr.mxu0 0.0
    %2407 = vmatpush1.msra.mxu0 0.0
    %2408 = vmatprep.subr.mxu0 0.0
    %2409 = vmatpush1.msra.mxu0 0.0
    %2410 = vmatprep.mubr.f32.mxu0 0.0
    %2411 = vmatmul.mubr.f32.gmra.mrb[0].mxu0 %v268
    %v2412 = vpop.f32.mrb[0].mxu0
    %v2413 = vadd.f32 0.0, %v2412
    %v2414 = vpop.f32.mrb[0].mxu0
    %2415 = vmatprep.mubr.f32.mxu0 0.0
    %2416 = vmatmul.mubr.f32.gmra.mrb[0].mxu0 %v271
    %v2417 = vpop.f32.mrb[0].mxu0
    %v2418 = vadd.f32 0.0, %v2417
    %v2419 = vpop.f32.mrb[0].mxu0
    %2420 = vdwg.mxu0
    %2421 = vmatprep.subr.mxu0 0.0
    %2422 = vmatpush1.msra.mxu0 %v2413
    %2423 = vmatprep.subr.mxu0 0.0
    %2424 = vmatpush1.msra.mxu0 %v2418
    %2425 = vmatprep.subr.mxu0 0.0
    %2426 = vmatpush1.msra.mxu0 0.0
    %2427 = vmatprep.subr.mxu0 0.0
    %2428 = vmatpush1.msra.mxu0 0.0
    %2429 = vmatprep.subr.mxu0 0.0
    %2430 = vmatpush1.msra.mxu0 0.0
    %2431 = vmatprep.subr.mxu0 0.0
    %2432 = vmatpush1.msra.mxu0 0.0
    %2433 = vmatprep.subr.mxu0 0.0
    %2434 = vmatpush1.msra.mxu0 0.0
    %2435 = vmatprep.subr.mxu0 0.0
    %2436 = vmatpush1.msra.mxu0 0.0
    %2437 = vmatprep.subr.mxu0 0.0
    %2438 = vmatpush1.msra.mxu0 0.0
    %2439 = vmatprep.subr.mxu0 0.0
    %2440 = vmatpush1.msra.mxu0 0.0
    %2441 = vmatprep.subr.mxu0 0.0
    %2442 = vmatpush1.msra.mxu0 0.0
    %2443 = vmatprep.subr.mxu0 0.0
    %2444 = vmatpush1.msra.mxu0 0.0
    %2445 = vmatprep.subr.mxu0 0.0
    %2446 = vmatpush1.msra.mxu0 0.0
    %2447 = vmatprep.subr.mxu0 0.0
    %2448 = vmatpush1.msra.mxu0 0.0
    %2449 = vmatprep.subr.mxu0 0.0
    %2450 = vmatpush1.msra.mxu0 0.0
    %2451 = vmatprep.subr.mxu0 0.0
    %2452 = vmatpush1.msra.mxu0 0.0
    %2453 = vmatprep.subr.mxu0 0.0
    %2454 = vmatpush1.msra.mxu0 0.0
    %2455 = vmatprep.subr.mxu0 0.0
    %2456 = vmatpush1.msra.mxu0 0.0
    %2457 = vmatprep.subr.mxu0 0.0
    %2458 = vmatpush1.msra.mxu0 0.0
    %2459 = vmatprep.subr.mxu0 0.0
    %2460 = vmatpush1.msra.mxu0 0.0
    %2461 = vmatprep.subr.mxu0 0.0
    %2462 = vmatpush1.msra.mxu0 0.0
    %2463 = vmatprep.subr.mxu0 0.0
    %2464 = vmatpush1.msra.mxu0 0.0
    %2465 = vmatprep.subr.mxu0 0.0
    %2466 = vmatpush1.msra.mxu0 0.0
    %2467 = vmatprep.subr.mxu0 0.0
    %2468 = vmatpush1.msra.mxu0 0.0
    %2469 = vmatprep.subr.mxu0 0.0
    %2470 = vmatpush1.msra.mxu0 0.0
    %2471 = vmatprep.subr.mxu0 0.0
    %2472 = vmatpush1.msra.mxu0 0.0
    %2473 = vmatprep.subr.mxu0 0.0
    %2474 = vmatpush1.msra.mxu0 0.0
    %2475 = vmatprep.subr.mxu0 0.0
    %2476 = vmatpush1.msra.mxu0 0.0
    %2477 = vmatprep.subr.mxu0 0.0
    %2478 = vmatpush1.msra.mxu0 0.0
    %2479 = vmatprep.subr.mxu0 0.0
    %2480 = vmatpush1.msra.mxu0 0.0
    %2481 = vmatprep.subr.mxu0 0.0
    %2482 = vmatpush1.msra.mxu0 0.0
    %2483 = vmatprep.subr.mxu0 0.0
    %2484 = vmatpush1.msra.mxu0 0.0
    %2485 = vmatprep.mubr.f32.mxu0 0.0
    %2486 = vmatmul.mubr.f32.gmra.mrb[0].mxu0 %v268
    %v2487 = vpop.f32.mrb[0].mxu0
    %v2488 = vadd.f32 0.0, %v2487
    %v2489 = vpop.f32.mrb[0].mxu0
    %2490 = vmatprep.mubr.f32.mxu0 0.0
    %2491 = vmatmul.mubr.f32.gmra.mrb[0].mxu0 %v271
    %v2492 = vpop.f32.mrb[0].mxu0
    %v2493 = vadd.f32 0.0, %v2492
    %v2494 = vpop.f32.mrb[0].mxu0
    %2495 = vdwg.mxu0
    %v2496 = vmul.f32 %v2488, 2.0
    %v2497 = vmul.f32 %v2493, 2.0
    %v2498 = vsub.f32 %v2496, %v2190
    %v2499 = vsub.f32 %v2497, %v2191
    %v2500 = vld [vmem:[%s12] sm:$0xff]
    %v2501 = vld [vmem:[%s12 + $0x8] sm:$0xff]
    %s2502 = scalar_lea.vmem %s12, 16
    %v2503 = vld [vmem:[%s2502] sm:$0xff]
    %v2504 = vld [vmem:[%s2502 + $0x8] sm:$0xff]
    %v2506 = vsel %vm266, %v2259, 0
    %v2509 = vsel %vm266, %v2264, 0
    %2511 = vmatprep.subr.mxu0 0.0
    %2512 = vmatpush1.msra.mxu0 %v2503
    %2513 = vmatprep.subr.mxu0 0.0
    %2514 = vmatpush1.msra.mxu0 %v2504
    %2515 = vmatprep.subr.mxu0 0.0
    %2516 = vmatpush1.msra.mxu0 0.0
    %2517 = vmatprep.subr.mxu0 0.0
    %2518 = vmatpush1.msra.mxu0 0.0
    %2519 = vmatprep.subr.mxu0 0.0
    %2520 = vmatpush1.msra.mxu0 0.0
    %2521 = vmatprep.subr.mxu0 0.0
    %2522 = vmatpush1.msra.mxu0 0.0
    %2523 = vmatprep.subr.mxu0 0.0
    %2524 = vmatpush1.msra.mxu0 0.0
    %2525 = vmatprep.subr.mxu0 0.0
    %2526 = vmatpush1.msra.mxu0 0.0
    %2527 = vmatprep.subr.mxu0 0.0
    %2528 = vmatpush1.msra.mxu0 0.0
    %2529 = vmatprep.subr.mxu0 0.0
    %2530 = vmatpush1.msra.mxu0 0.0
    %2531 = vmatprep.subr.mxu0 0.0
    %2532 = vmatpush1.msra.mxu0 0.0
    %2533 = vmatprep.subr.mxu0 0.0
    %2534 = vmatpush1.msra.mxu0 0.0
    %2535 = vmatprep.subr.mxu0 0.0
    %2536 = vmatpush1.msra.mxu0 0.0
    %2537 = vmatprep.subr.mxu0 0.0
    %2538 = vmatpush1.msra.mxu0 0.0
    %2539 = vmatprep.subr.mxu0 0.0
    %2540 = vmatpush1.msra.mxu0 0.0
    %2541 = vmatprep.subr.mxu0 0.0
    %2542 = vmatpush1.msra.mxu0 0.0
    %2543 = vmatprep.subr.mxu0 0.0
    %2544 = vmatpush1.msra.mxu0 0.0
    %2545 = vmatprep.subr.mxu0 0.0
    %2546 = vmatpush1.msra.mxu0 0.0
    %2547 = vmatprep.subr.mxu0 0.0
    %2548 = vmatpush1.msra.mxu0 0.0
    %2549 = vmatprep.subr.mxu0 0.0
    %2550 = vmatpush1.msra.mxu0 0.0
    %2551 = vmatprep.subr.mxu0 0.0
    %2552 = vmatpush1.msra.mxu0 0.0
    %2553 = vmatprep.subr.mxu0 0.0
    %2554 = vmatpush1.msra.mxu0 0.0
    %2555 = vmatprep.subr.mxu0 0.0
    %2556 = vmatpush1.msra.mxu0 0.0
    %2557 = vmatprep.subr.mxu0 0.0
    %2558 = vmatpush1.msra.mxu0 0.0
    %2559 = vmatprep.subr.mxu0 0.0
    %2560 = vmatpush1.msra.mxu0 0.0
    %2561 = vmatprep.subr.mxu0 0.0
    %2562 = vmatpush1.msra.mxu0 0.0
    %2563 = vmatprep.subr.mxu0 0.0
    %2564 = vmatpush1.msra.mxu0 0.0
    %2565 = vmatprep.subr.mxu0 0.0
    %2566 = vmatpush1.msra.mxu0 0.0
    %2567 = vmatprep.subr.mxu0 0.0
    %2568 = vmatpush1.msra.mxu0 0.0
    %2569 = vmatprep.subr.mxu0 0.0
    %2570 = vmatpush1.msra.mxu0 0.0
    %2571 = vmatprep.subr.mxu0 0.0
    %2572 = vmatpush1.msra.mxu0 0.0
    %2573 = vmatprep.subr.mxu0 0.0
    %2574 = vmatpush1.msra.mxu0 0.0
    %2575 = vmatprep.mubr.f32.mxu0 0.0
    %2576 = vmatmul.mubr.f32.gmra.mrb[0].mxu0 %v2506
    %v2577 = vpop.f32.mrb[0].mxu0
    %v2578 = vadd.f32 0.0, %v2577
    %v2579 = vpop.f32.mrb[0].mxu0
    %2580 = vmatprep.mubr.f32.mxu0 0.0
    %2581 = vmatmul.mubr.f32.gmra.mrb[0].mxu0 %v2509
    %v2582 = vpop.f32.mrb[0].mxu0
    %v2583 = vadd.f32 0.0, %v2582
    %v2584 = vpop.f32.mrb[0].mxu0
    %2585 = vdwg.mxu0
    %v2587 = vsel %vm266, %v2185, 0
    %v2590 = vsel %vm266, %v2186, 0
    %2592 = vmatprep.subr.mxu0 0.0
    %2593 = vmatpush1.msra.mxu0 %v2500
    %2594 = vmatprep.subr.mxu0 0.0
    %2595 = vmatpush1.msra.mxu0 %v2501
    %2596 = vmatprep.subr.mxu0 0.0
    %2597 = vmatpush1.msra.mxu0 0.0
    %2598 = vmatprep.subr.mxu0 0.0
    %2599 = vmatpush1.msra.mxu0 0.0
    %2600 = vmatprep.subr.mxu0 0.0
    %2601 = vmatpush1.msra.mxu0 0.0
    %2602 = vmatprep.subr.mxu0 0.0
    %2603 = vmatpush1.msra.mxu0 0.0
    %2604 = vmatprep.subr.mxu0 0.0
    %2605 = vmatpush1.msra.mxu0 0.0
    %2606 = vmatprep.subr.mxu0 0.0
    %2607 = vmatpush1.msra.mxu0 0.0
    %2608 = vmatprep.subr.mxu0 0.0
    %2609 = vmatpush1.msra.mxu0 0.0
    %2610 = vmatprep.subr.mxu0 0.0
    %2611 = vmatpush1.msra.mxu0 0.0
    %2612 = vmatprep.subr.mxu0 0.0
    %2613 = vmatpush1.msra.mxu0 0.0
    %2614 = vmatprep.subr.mxu0 0.0
    %2615 = vmatpush1.msra.mxu0 0.0
    %2616 = vmatprep.subr.mxu0 0.0
    %2617 = vmatpush1.msra.mxu0 0.0
    %2618 = vmatprep.subr.mxu0 0.0
    %2619 = vmatpush1.msra.mxu0 0.0
    %2620 = vmatprep.subr.mxu0 0.0
    %2621 = vmatpush1.msra.mxu0 0.0
    %2622 = vmatprep.subr.mxu0 0.0
    %2623 = vmatpush1.msra.mxu0 0.0
    %2624 = vmatprep.subr.mxu0 0.0
    %2625 = vmatpush1.msra.mxu0 0.0
    %2626 = vmatprep.subr.mxu0 0.0
    %2627 = vmatpush1.msra.mxu0 0.0
    %2628 = vmatprep.subr.mxu0 0.0
    %2629 = vmatpush1.msra.mxu0 0.0
    %2630 = vmatprep.subr.mxu0 0.0
    %2631 = vmatpush1.msra.mxu0 0.0
    %2632 = vmatprep.subr.mxu0 0.0
    %2633 = vmatpush1.msra.mxu0 0.0
    %2634 = vmatprep.subr.mxu0 0.0
    %2635 = vmatpush1.msra.mxu0 0.0
    %2636 = vmatprep.subr.mxu0 0.0
    %2637 = vmatpush1.msra.mxu0 0.0
    %2638 = vmatprep.subr.mxu0 0.0
    %2639 = vmatpush1.msra.mxu0 0.0
    %2640 = vmatprep.subr.mxu0 0.0
    %2641 = vmatpush1.msra.mxu0 0.0
    %2642 = vmatprep.subr.mxu0 0.0
    %2643 = vmatpush1.msra.mxu0 0.0
    %2644 = vmatprep.subr.mxu0 0.0
    %2645 = vmatpush1.msra.mxu0 0.0
    %2646 = vmatprep.subr.mxu0 0.0
    %2647 = vmatpush1.msra.mxu0 0.0
    %2648 = vmatprep.subr.mxu0 0.0
    %2649 = vmatpush1.msra.mxu0 0.0
    %2650 = vmatprep.subr.mxu0 0.0
    %2651 = vmatpush1.msra.mxu0 0.0
    %2652 = vmatprep.subr.mxu0 0.0
    %2653 = vmatpush1.msra.mxu0 0.0
    %2654 = vmatprep.subr.mxu0 0.0
    %2655 = vmatpush1.msra.mxu0 0.0
    %2656 = vmatprep.mubr.f32.mxu0 0.0
    %2657 = vmatmul.mubr.f32.gmra.mrb[0].mxu0 %v2587
    %v2658 = vpop.f32.mrb[0].mxu0
    %v2659 = vadd.f32 %v2578, %v2658
    %v2660 = vpop.f32.mrb[0].mxu0
    %2661 = vmatprep.mubr.f32.mxu0 0.0
    %2662 = vmatmul.mubr.f32.gmra.mrb[0].mxu0 %v2590
    %v2663 = vpop.f32.mrb[0].mxu0
    %v2664 = vadd.f32 %v2583, %v2663
    %v2665 = vpop.f32.mrb[0].mxu0
    %2666 = vdwg.mxu0
    %s2667 = scalar_lea.vmem %s12, 32
    %v2668 = vld [vmem:[%s2667] sm:$0xff]
    %v2669 = vld [vmem:[%s2667 + $0x8] sm:$0xff]
    %v2671 = vsel %vm266, %v2344, 0
    %v2674 = vsel %vm266, %v2345, 0
    %2676 = vmatprep.subr.mxu0 0.0
    %2677 = vmatpush1.msra.mxu0 %v2668
    %2678 = vmatprep.subr.mxu0 0.0
    %2679 = vmatpush1.msra.mxu0 %v2669
    %2680 = vmatprep.subr.mxu0 0.0
    %2681 = vmatpush1.msra.mxu0 0.0
    %2682 = vmatprep.subr.mxu0 0.0
    %2683 = vmatpush1.msra.mxu0 0.0
    %2684 = vmatprep.subr.mxu0 0.0
    %2685 = vmatpush1.msra.mxu0 0.0
    %2686 = vmatprep.subr.mxu0 0.0
    %2687 = vmatpush1.msra.mxu0 0.0
    %2688 = vmatprep.subr.mxu0 0.0
    %2689 = vmatpush1.msra.mxu0 0.0
    %2690 = vmatprep.subr.mxu0 0.0
    %2691 = vmatpush1.msra.mxu0 0.0
    %2692 = vmatprep.subr.mxu0 0.0
    %2693 = vmatpush1.msra.mxu0 0.0
    %2694 = vmatprep.subr.mxu0 0.0
    %2695 = vmatpush1.msra.mxu0 0.0
    %2696 = vmatprep.subr.mxu0 0.0
    %2697 = vmatpush1.msra.mxu0 0.0
    %2698 = vmatprep.subr.mxu0 0.0
    %2699 = vmatpush1.msra.mxu0 0.0
    %2700 = vmatprep.subr.mxu0 0.0
    %2701 = vmatpush1.msra.mxu0 0.0
    %2702 = vmatprep.subr.mxu0 0.0
    %2703 = vmatpush1.msra.mxu0 0.0
    %2704 = vmatprep.subr.mxu0 0.0
    %2705 = vmatpush1.msra.mxu0 0.0
    %2706 = vmatprep.subr.mxu0 0.0
    %2707 = vmatpush1.msra.mxu0 0.0
    %2708 = vmatprep.subr.mxu0 0.0
    %2709 = vmatpush1.msra.mxu0 0.0
    %2710 = vmatprep.subr.mxu0 0.0
    %2711 = vmatpush1.msra.mxu0 0.0
    %2712 = vmatprep.subr.mxu0 0.0
    %2713 = vmatpush1.msra.mxu0 0.0
    %2714 = vmatprep.subr.mxu0 0.0
    %2715 = vmatpush1.msra.mxu0 0.0
    %2716 = vmatprep.subr.mxu0 0.0
    %2717 = vmatpush1.msra.mxu0 0.0
    %2718 = vmatprep.subr.mxu0 0.0
    %2719 = vmatpush1.msra.mxu0 0.0
    %2720 = vmatprep.subr.mxu0 0.0
    %2721 = vmatpush1.msra.mxu0 0.0
    %2722 = vmatprep.subr.mxu0 0.0
    %2723 = vmatpush1.msra.mxu0 0.0
    %2724 = vmatprep.subr.mxu0 0.0
    %2725 = vmatpush1.msra.mxu0 0.0
    %2726 = vmatprep.subr.mxu0 0.0
    %2727 = vmatpush1.msra.mxu0 0.0
    %2728 = vmatprep.subr.mxu0 0.0
    %2729 = vmatpush1.msra.mxu0 0.0
    %2730 = vmatprep.subr.mxu0 0.0
    %2731 = vmatpush1.msra.mxu0 0.0
    %2732 = vmatprep.subr.mxu0 0.0
    %2733 = vmatpush1.msra.mxu0 0.0
    %2734 = vmatprep.subr.mxu0 0.0
    %2735 = vmatpush1.msra.mxu0 0.0
    %2736 = vmatprep.subr.mxu0 0.0
    %2737 = vmatpush1.msra.mxu0 0.0
    %2738 = vmatprep.subr.mxu0 0.0
    %2739 = vmatpush1.msra.mxu0 0.0
    %2740 = vmatprep.mubr.f32.mxu0 0.0
    %2741 = vmatmul.mubr.f32.gmra.mrb[0].mxu0 %v2671
    %v2742 = vpop.f32.mrb[0].mxu0
    %v2743 = vadd.f32 0.0, %v2742
    %v2744 = vpop.f32.mrb[0].mxu0
    %2745 = vmatprep.mubr.f32.mxu0 0.0
    %2746 = vmatmul.mubr.f32.gmra.mrb[0].mxu0 %v2674
    %v2747 = vpop.f32.mrb[0].mxu0
    %v2748 = vadd.f32 0.0, %v2747
    %v2749 = vpop.f32.mrb[0].mxu0
    %2750 = vdwg.mxu0
    %v2751 = vadd.f32 %v2659, %v2743
    %v2752 = vadd.f32 %v2664, %v2748
    %v2753 = vld [vmem:[#allocation16] sm:$0xff]
    %v2754 = vld [vmem:[#allocation16 + $0x8] sm:$0xff]
    %s2755 = scalar_lea.vmem [#allocation16], 16
    %v2756 = vld [vmem:[%s2755] sm:$0xff]
    %v2757 = vld [vmem:[%s2755 + $0x8] sm:$0xff]
    %v2759 = vsel %vm266, %v2413, 0
    %v2762 = vsel %vm266, %v2418, 0
    %2764 = vmatprep.subr.mxu0 0.0
    %2765 = vmatpush1.msra.mxu0 %v2756
    %2766 = vmatprep.subr.mxu0 0.0
    %2767 = vmatpush1.msra.mxu0 %v2757
    %2768 = vmatprep.subr.mxu0 0.0
    %2769 = vmatpush1.msra.mxu0 0.0
    %2770 = vmatprep.subr.mxu0 0.0
    %2771 = vmatpush1.msra.mxu0 0.0
    %2772 = vmatprep.subr.mxu0 0.0
    %2773 = vmatpush1.msra.mxu0 0.0
    %2774 = vmatprep.subr.mxu0 0.0
    %2775 = vmatpush1.msra.mxu0 0.0
    %2776 = vmatprep.subr.mxu0 0.0
    %2777 = vmatpush1.msra.mxu0 0.0
    %2778 = vmatprep.subr.mxu0 0.0
    %2779 = vmatpush1.msra.mxu0 0.0
    %2780 = vmatprep.subr.mxu0 0.0
    %2781 = vmatpush1.msra.mxu0 0.0
    %2782 = vmatprep.subr.mxu0 0.0
    %2783 = vmatpush1.msra.mxu0 0.0
    %2784 = vmatprep.subr.mxu0 0.0
    %2785 = vmatpush1.msra.mxu0 0.0
    %2786 = vmatprep.subr.mxu0 0.0
    %2787 = vmatpush1.msra.mxu0 0.0
    %2788 = vmatprep.subr.mxu0 0.0
    %2789 = vmatpush1.msra.mxu0 0.0
    %2790 = vmatprep.subr.mxu0 0.0
    %2791 = vmatpush1.msra.mxu0 0.0
    %2792 = vmatprep.subr.mxu0 0.0
    %2793 = vmatpush1.msra.mxu0 0.0
    %2794 = vmatprep.subr.mxu0 0.0
    %2795 = vmatpush1.msra.mxu0 0.0
    %2796 = vmatprep.subr.mxu0 0.0
    %2797 = vmatpush1.msra.mxu0 0.0
    %2798 = vmatprep.subr.mxu0 0.0
    %2799 = vmatpush1.msra.mxu0 0.0
    %2800 = vmatprep.subr.mxu0 0.0
    %2801 = vmatpush1.msra.mxu0 0.0
    %2802 = vmatprep.subr.mxu0 0.0
    %2803 = vmatpush1.msra.mxu0 0.0
    %2804 = vmatprep.subr.mxu0 0.0
    %2805 = vmatpush1.msra.mxu0 0.0
    %2806 = vmatprep.subr.mxu0 0.0
    %2807 = vmatpush1.msra.mxu0 0.0
    %2808 = vmatprep.subr.mxu0 0.0
    %2809 = vmatpush1.msra.mxu0 0.0
    %2810 = vmatprep.subr.mxu0 0.0
    %2811 = vmatpush1.msra.mxu0 0.0
    %2812 = vmatprep.subr.mxu0 0.0
    %2813 = vmatpush1.msra.mxu0 0.0
    %2814 = vmatprep.subr.mxu0 0.0
    %2815 = vmatpush1.msra.mxu0 0.0
    %2816 = vmatprep.subr.mxu0 0.0
    %2817 = vmatpush1.msra.mxu0 0.0
    %2818 = vmatprep.subr.mxu0 0.0
    %2819 = vmatpush1.msra.mxu0 0.0
    %2820 = vmatprep.subr.mxu0 0.0
    %2821 = vmatpush1.msra.mxu0 0.0
    %2822 = vmatprep.subr.mxu0 0.0
    %2823 = vmatpush1.msra.mxu0 0.0
    %2824 = vmatprep.subr.mxu0 0.0
    %2825 = vmatpush1.msra.mxu0 0.0
    %2826 = vmatprep.subr.mxu0 0.0
    %2827 = vmatpush1.msra.mxu0 0.0
    %2828 = vmatprep.mubr.f32.mxu0 0.0
    %2829 = vmatmul.mubr.f32.gmra.mrb[0].mxu0 %v2759
    %v2830 = vpop.f32.mrb[0].mxu0
    %v2831 = vadd.f32 0.0, %v2830
    %v2832 = vpop.f32.mrb[0].mxu0
    %2833 = vmatprep.mubr.f32.mxu0 0.0
    %2834 = vmatmul.mubr.f32.gmra.mrb[0].mxu0 %v2762
    %v2835 = vpop.f32.mrb[0].mxu0
    %v2836 = vadd.f32 0.0, %v2835
    %v2837 = vpop.f32.mrb[0].mxu0
    %2838 = vdwg.mxu0
    %v2840 = vsel %vm266, %v2190, 0
    %v2843 = vsel %vm266, %v2191, 0
    %2845 = vmatprep.subr.mxu0 0.0
    %2846 = vmatpush1.msra.mxu0 %v2753
    %2847 = vmatprep.subr.mxu0 0.0
    %2848 = vmatpush1.msra.mxu0 %v2754
    %2849 = vmatprep.subr.mxu0 0.0
    %2850 = vmatpush1.msra.mxu0 0.0
    %2851 = vmatprep.subr.mxu0 0.0
    %2852 = vmatpush1.msra.mxu0 0.0
    %2853 = vmatprep.subr.mxu0 0.0
    %2854 = vmatpush1.msra.mxu0 0.0
    %2855 = vmatprep.subr.mxu0 0.0
    %2856 = vmatpush1.msra.mxu0 0.0
    %2857 = vmatprep.subr.mxu0 0.0
    %2858 = vmatpush1.msra.mxu0 0.0
    %2859 = vmatprep.subr.mxu0 0.0
    %2860 = vmatpush1.msra.mxu0 0.0
    %2861 = vmatprep.subr.mxu0 0.0
    %2862 = vmatpush1.msra.mxu0 0.0
    %2863 = vmatprep.subr.mxu0 0.0
    %2864 = vmatpush1.msra.mxu0 0.0
    %2865 = vmatprep.subr.mxu0 0.0
    %2866 = vmatpush1.msra.mxu0 0.0
    %2867 = vmatprep.subr.mxu0 0.0
    %2868 = vmatpush1.msra.mxu0 0.0
    %2869 = vmatprep.subr.mxu0 0.0
    %2870 = vmatpush1.msra.mxu0 0.0
    %2871 = vmatprep.subr.mxu0 0.0
    %2872 = vmatpush1.msra.mxu0 0.0
    %2873 = vmatprep.subr.mxu0 0.0
    %2874 = vmatpush1.msra.mxu0 0.0
    %2875 = vmatprep.subr.mxu0 0.0
    %2876 = vmatpush1.msra.mxu0 0.0
    %2877 = vmatprep.subr.mxu0 0.0
    %2878 = vmatpush1.msra.mxu0 0.0
    %2879 = vmatprep.subr.mxu0 0.0
    %2880 = vmatpush1.msra.mxu0 0.0
    %2881 = vmatprep.subr.mxu0 0.0
    %2882 = vmatpush1.msra.mxu0 0.0
    %2883 = vmatprep.subr.mxu0 0.0
    %2884 = vmatpush1.msra.mxu0 0.0
    %2885 = vmatprep.subr.mxu0 0.0
    %2886 = vmatpush1.msra.mxu0 0.0
    %2887 = vmatprep.subr.mxu0 0.0
    %2888 = vmatpush1.msra.mxu0 0.0
    %2889 = vmatprep.subr.mxu0 0.0
    %2890 = vmatpush1.msra.mxu0 0.0
    %2891 = vmatprep.subr.mxu0 0.0
    %2892 = vmatpush1.msra.mxu0 0.0
    %2893 = vmatprep.subr.mxu0 0.0
    %2894 = vmatpush1.msra.mxu0 0.0
    %2895 = vmatprep.subr.mxu0 0.0
    %2896 = vmatpush1.msra.mxu0 0.0
    %2897 = vmatprep.subr.mxu0 0.0
    %2898 = vmatpush1.msra.mxu0 0.0
    %2899 = vmatprep.subr.mxu0 0.0
    %2900 = vmatpush1.msra.mxu0 0.0
    %2901 = vmatprep.subr.mxu0 0.0
    %2902 = vmatpush1.msra.mxu0 0.0
    %2903 = vmatprep.subr.mxu0 0.0
    %2904 = vmatpush1.msra.mxu0 0.0
    %2905 = vmatprep.subr.mxu0 0.0
    %2906 = vmatpush1.msra.mxu0 0.0
    %2907 = vmatprep.subr.mxu0 0.0
    %2908 = vmatpush1.msra.mxu0 0.0
    %2909 = vmatprep.mubr.f32.mxu0 0.0
    %2910 = vmatmul.mubr.f32.gmra.mrb[0].mxu0 %v2840
    %v2911 = vpop.f32.mrb[0].mxu0
    %v2912 = vadd.f32 %v2831, %v2911
    %v2913 = vpop.f32.mrb[0].mxu0
    %2914 = vmatprep.mubr.f32.mxu0 0.0
    %2915 = vmatmul.mubr.f32.gmra.mrb[0].mxu0 %v2843
    %v2916 = vpop.f32.mrb[0].mxu0
    %v2917 = vadd.f32 %v2836, %v2916
    %v2918 = vpop.f32.mrb[0].mxu0
    %2919 = vdwg.mxu0
    %s2920 = scalar_lea.vmem [#allocation16], 32
    %v2921 = vld [vmem:[%s2920] sm:$0xff]
    %v2922 = vld [vmem:[%s2920 + $0x8] sm:$0xff]
    %v2924 = vsel %vm266, %v2498, 0
    %v2927 = vsel %vm266, %v2499, 0
    %2929 = vmatprep.subr.mxu0 0.0
    %2930 = vmatpush1.msra.mxu0 %v2921
    %2931 = vmatprep.subr.mxu0 0.0
    %2932 = vmatpush1.msra.mxu0 %v2922
    %2933 = vmatprep.subr.mxu0 0.0
    %2934 = vmatpush1.msra.mxu0 0.0
    %2935 = vmatprep.subr.mxu0 0.0
    %2936 = vmatpush1.msra.mxu0 0.0
    %2937 = vmatprep.subr.mxu0 0.0
    %2938 = vmatpush1.msra.mxu0 0.0
    %2939 = vmatprep.subr.mxu0 0.0
    %2940 = vmatpush1.msra.mxu0 0.0
    %2941 = vmatprep.subr.mxu0 0.0
    %2942 = vmatpush1.msra.mxu0 0.0
    %2943 = vmatprep.subr.mxu0 0.0
    %2944 = vmatpush1.msra.mxu0 0.0
    %2945 = vmatprep.subr.mxu0 0.0
    %2946 = vmatpush1.msra.mxu0 0.0
    %2947 = vmatprep.subr.mxu0 0.0
    %2948 = vmatpush1.msra.mxu0 0.0
    %2949 = vmatprep.subr.mxu0 0.0
    %2950 = vmatpush1.msra.mxu0 0.0
    %2951 = vmatprep.subr.mxu0 0.0
    %2952 = vmatpush1.msra.mxu0 0.0
    %2953 = vmatprep.subr.mxu0 0.0
    %2954 = vmatpush1.msra.mxu0 0.0
    %2955 = vmatprep.subr.mxu0 0.0
    %2956 = vmatpush1.msra.mxu0 0.0
    %2957 = vmatprep.subr.mxu0 0.0
    %2958 = vmatpush1.msra.mxu0 0.0
    %2959 = vmatprep.subr.mxu0 0.0
    %2960 = vmatpush1.msra.mxu0 0.0
    %2961 = vmatprep.subr.mxu0 0.0
    %2962 = vmatpush1.msra.mxu0 0.0
    %2963 = vmatprep.subr.mxu0 0.0
    %2964 = vmatpush1.msra.mxu0 0.0
    %2965 = vmatprep.subr.mxu0 0.0
    %2966 = vmatpush1.msra.mxu0 0.0
    %2967 = vmatprep.subr.mxu0 0.0
    %2968 = vmatpush1.msra.mxu0 0.0
    %2969 = vmatprep.subr.mxu0 0.0
    %2970 = vmatpush1.msra.mxu0 0.0
    %2971 = vmatprep.subr.mxu0 0.0
    %2972 = vmatpush1.msra.mxu0 0.0
    %2973 = vmatprep.subr.mxu0 0.0
    %2974 = vmatpush1.msra.mxu0 0.0
    %2975 = vmatprep.subr.mxu0 0.0
    %2976 = vmatpush1.msra.mxu0 0.0
    %2977 = vmatprep.subr.mxu0 0.0
    %2978 = vmatpush1.msra.mxu0 0.0
    %2979 = vmatprep.subr.mxu0 0.0
    %2980 = vmatpush1.msra.mxu0 0.0
    %2981 = vmatprep.subr.mxu0 0.0
    %2982 = vmatpush1.msra.mxu0 0.0
    %2983 = vmatprep.subr.mxu0 0.0
    %2984 = vmatpush1.msra.mxu0 0.0
    %2985 = vmatprep.subr.mxu0 0.0
    %2986 = vmatpush1.msra.mxu0 0.0
    %2987 = vmatprep.subr.mxu0 0.0
    %2988 = vmatpush1.msra.mxu0 0.0
    %2989 = vmatprep.subr.mxu0 0.0
    %2990 = vmatpush1.msra.mxu0 0.0
    %2991 = vmatprep.subr.mxu0 0.0
    %2992 = vmatpush1.msra.mxu0 0.0
    %2993 = vmatprep.mubr.f32.mxu0 0.0
    %2994 = vmatmul.mubr.f32.gmra.mrb[0].mxu0 %v2924
    %v2995 = vpop.f32.mrb[0].mxu0
    %v2996 = vadd.f32 0.0, %v2995
    %v2997 = vpop.f32.mrb[0].mxu0
    %2998 = vmatprep.mubr.f32.mxu0 0.0
    %2999 = vmatmul.mubr.f32.gmra.mrb[0].mxu0 %v2927
    %v3000 = vpop.f32.mrb[0].mxu0
    %v3001 = vadd.f32 0.0, %v3000
    %v3002 = vpop.f32.mrb[0].mxu0
    %3003 = vdwg.mxu0
    %v3004 = vadd.f32 %v2912, %v2996
    %v3005 = vadd.f32 %v2917, %v3001
    %v3006 = vadd.f32 %v2751, %v3004
    %v3007 = vadd.f32 %v2752, %v3005
    %v3008 = vld [vmem:[#allocation20] sm:$0x1]
    %v3010 = vlaneseq
    %v3011 = vshrl.u32 %v3010, 7
    %v3012 = vsub.s32 0, %v3011
    %v3013 = vrot.slane %v3008, %v3012
    %v3015 = vadd.f32 %v3006, %v3013
    %v3016 = vadd.f32 %v3007, %v3013
    %v3017 = vxor.u32 %v3015, 2147483648
    %v3018 = vxor.u32 %v3016, 2147483648
    %v3019 = vmul.f32 %v3017, 1.442695
    %v3020 = vpow.pop %v3019
    %v3021 = vmul.f32 %v3018, 1.442695
    %v3022 = vpow.pop %v3021
    %v3023 = vadd.f32 %v3020, 1.0
    %v3024 = vadd.f32 %v3022, 1.0
    %v3025 = vrcp.pop %v3023
    %v3026 = vmul.f32 1.0, %v3025
    %v3027 = vrcp.pop %v3024
    %v3028 = vmul.f32 1.0, %v3027
    %v3029 = vld [vmem:[#allocation13] sm:$0xff]
    %v3030 = vld [vmem:[#allocation13 + $0x8] sm:$0xff]
    %s3031 = scalar_lea.vmem [#allocation13], 16
    %v3032 = vld [vmem:[%s3031] sm:$0xff]
    %v3033 = vld [vmem:[%s3031 + $0x8] sm:$0xff]
    %3034 = vmatprep.subr.mxu0 0.0
    %3035 = vmatpush1.msra.mxu0 %v3032
    %3036 = vmatprep.subr.mxu0 0.0
    %3037 = vmatpush1.msra.mxu0 %v3033
    %3038 = vmatprep.subr.mxu0 0.0
    %3039 = vmatpush1.msra.mxu0 0.0
    %3040 = vmatprep.subr.mxu0 0.0
    %3041 = vmatpush1.msra.mxu0 0.0
    %3042 = vmatprep.subr.mxu0 0.0
    %3043 = vmatpush1.msra.mxu0 0.0
    %3044 = vmatprep.subr.mxu0 0.0
    %3045 = vmatpush1.msra.mxu0 0.0
    %3046 = vmatprep.subr.mxu0 0.0
    %3047 = vmatpush1.msra.mxu0 0.0
    %3048 = vmatprep.subr.mxu0 0.0
    %3049 = vmatpush1.msra.mxu0 0.0
    %3050 = vmatprep.subr.mxu0 0.0
    %3051 = vmatpush1.msra.mxu0 0.0
    %3052 = vmatprep.subr.mxu0 0.0
    %3053 = vmatpush1.msra.mxu0 0.0
    %3054 = vmatprep.subr.mxu0 0.0
    %3055 = vmatpush1.msra.mxu0 0.0
    %3056 = vmatprep.subr.mxu0 0.0
    %3057 = vmatpush1.msra.mxu0 0.0
    %3058 = vmatprep.subr.mxu0 0.0
    %3059 = vmatpush1.msra.mxu0 0.0
    %3060 = vmatprep.subr.mxu0 0.0
    %3061 = vmatpush1.msra.mxu0 0.0
    %3062 = vmatprep.subr.mxu0 0.0
    %3063 = vmatpush1.msra.mxu0 0.0
    %3064 = vmatprep.subr.mxu0 0.0
    %3065 = vmatpush1.msra.mxu0 0.0
    %3066 = vmatprep.subr.mxu0 0.0
    %3067 = vmatpush1.msra.mxu0 0.0
    %3068 = vmatprep.subr.mxu0 0.0
    %3069 = vmatpush1.msra.mxu0 0.0
    %3070 = vmatprep.subr.mxu0 0.0
    %3071 = vmatpush1.msra.mxu0 0.0
    %3072 = vmatprep.subr.mxu0 0.0
    %3073 = vmatpush1.msra.mxu0 0.0
    %3074 = vmatprep.subr.mxu0 0.0
    %3075 = vmatpush1.msra.mxu0 0.0
    %3076 = vmatprep.subr.mxu0 0.0
    %3077 = vmatpush1.msra.mxu0 0.0
    %3078 = vmatprep.subr.mxu0 0.0
    %3079 = vmatpush1.msra.mxu0 0.0
    %3080 = vmatprep.subr.mxu0 0.0
    %3081 = vmatpush1.msra.mxu0 0.0
    %3082 = vmatprep.subr.mxu0 0.0
    %3083 = vmatpush1.msra.mxu0 0.0
    %3084 = vmatprep.subr.mxu0 0.0
    %3085 = vmatpush1.msra.mxu0 0.0
    %3086 = vmatprep.subr.mxu0 0.0
    %3087 = vmatpush1.msra.mxu0 0.0
    %3088 = vmatprep.subr.mxu0 0.0
    %3089 = vmatpush1.msra.mxu0 0.0
    %3090 = vmatprep.subr.mxu0 0.0
    %3091 = vmatpush1.msra.mxu0 0.0
    %3092 = vmatprep.subr.mxu0 0.0
    %3093 = vmatpush1.msra.mxu0 0.0
    %3094 = vmatprep.subr.mxu0 0.0
    %3095 = vmatpush1.msra.mxu0 0.0
    %3096 = vmatprep.subr.mxu0 0.0
    %3097 = vmatpush1.msra.mxu0 0.0
    %3098 = vmatprep.mubr.f32.mxu0 0.0
    %3099 = vmatmul.mubr.f32.gmra.mrb[0].mxu0 %v2506
    %v3100 = vpop.f32.mrb[0].mxu0
    %v3101 = vadd.f32 0.0, %v3100
    %v3102 = vpop.f32.mrb[0].mxu0
    %3103 = vmatprep.mubr.f32.mxu0 0.0
    %3104 = vmatmul.mubr.f32.gmra.mrb[0].mxu0 %v2509
    %v3105 = vpop.f32.mrb[0].mxu0
    %v3106 = vadd.f32 0.0, %v3105
    %v3107 = vpop.f32.mrb[0].mxu0
    %3108 = vdwg.mxu0
    %3109 = vmatprep.subr.mxu0 0.0
    %3110 = vmatpush1.msra.mxu0 %v3029
    %3111 = vmatprep.subr.mxu0 0.0
    %3112 = vmatpush1.msra.mxu0 %v3030
    %3113 = vmatprep.subr.mxu0 0.0
    %3114 = vmatpush1.msra.mxu0 0.0
    %3115 = vmatprep.subr.mxu0 0.0
    %3116 = vmatpush1.msra.mxu0 0.0
    %3117 = vmatprep.subr.mxu0 0.0
    %3118 = vmatpush1.msra.mxu0 0.0
    %3119 = vmatprep.subr.mxu0 0.0
    %3120 = vmatpush1.msra.mxu0 0.0
    %3121 = vmatprep.subr.mxu0 0.0
    %3122 = vmatpush1.msra.mxu0 0.0
    %3123 = vmatprep.subr.mxu0 0.0
    %3124 = vmatpush1.msra.mxu0 0.0
    %3125 = vmatprep.subr.mxu0 0.0
    %3126 = vmatpush1.msra.mxu0 0.0
    %3127 = vmatprep.subr.mxu0 0.0
    %3128 = vmatpush1.msra.mxu0 0.0
    %3129 = vmatprep.subr.mxu0 0.0
    %3130 = vmatpush1.msra.mxu0 0.0
    %3131 = vmatprep.subr.mxu0 0.0
    %3132 = vmatpush1.msra.mxu0 0.0
    %3133 = vmatprep.subr.mxu0 0.0
    %3134 = vmatpush1.msra.mxu0 0.0
    %3135 = vmatprep.subr.mxu0 0.0
    %3136 = vmatpush1.msra.mxu0 0.0
    %3137 = vmatprep.subr.mxu0 0.0
    %3138 = vmatpush1.msra.mxu0 0.0
    %3139 = vmatprep.subr.mxu0 0.0
    %3140 = vmatpush1.msra.mxu0 0.0
    %3141 = vmatprep.subr.mxu0 0.0
    %3142 = vmatpush1.msra.mxu0 0.0
    %3143 = vmatprep.subr.mxu0 0.0
    %3144 = vmatpush1.msra.mxu0 0.0
    %3145 = vmatprep.subr.mxu0 0.0
    %3146 = vmatpush1.msra.mxu0 0.0
    %3147 = vmatprep.subr.mxu0 0.0
    %3148 = vmatpush1.msra.mxu0 0.0
    %3149 = vmatprep.subr.mxu0 0.0
    %3150 = vmatpush1.msra.mxu0 0.0
    %3151 = vmatprep.subr.mxu0 0.0
    %3152 = vmatpush1.msra.mxu0 0.0
    %3153 = vmatprep.subr.mxu0 0.0
    %3154 = vmatpush1.msra.mxu0 0.0
    %3155 = vmatprep.subr.mxu0 0.0
    %3156 = vmatpush1.msra.mxu0 0.0
    %3157 = vmatprep.subr.mxu0 0.0
    %3158 = vmatpush1.msra.mxu0 0.0
    %3159 = vmatprep.subr.mxu0 0.0
    %3160 = vmatpush1.msra.mxu0 0.0
    %3161 = vmatprep.subr.mxu0 0.0
    %3162 = vmatpush1.msra.mxu0 0.0
    %3163 = vmatprep.subr.mxu0 0.0
    %3164 = vmatpush1.msra.mxu0 0.0
    %3165 = vmatprep.subr.mxu0 0.0
    %3166 = vmatpush1.msra.mxu0 0.0
    %3167 = vmatprep.subr.mxu0 0.0
    %3168 = vmatpush1.msra.mxu0 0.0
    %3169 = vmatprep.subr.mxu0 0.0
    %3170 = vmatpush1.msra.mxu0 0.0
    %3171 = vmatprep.subr.mxu0 0.0
    %3172 = vmatpush1.msra.mxu0 0.0
    %3173 = vmatprep.mubr.f32.mxu0 0.0
    %3174 = vmatmul.mubr.f32.gmra.mrb[0].mxu0 %v2587
    %v3175 = vpop.f32.mrb[0].mxu0
    %v3176 = vadd.f32 %v3101, %v3175
    %v3177 = vpop.f32.mrb[0].mxu0
    %3178 = vmatprep.mubr.f32.mxu0 0.0
    %3179 = vmatmul.mubr.f32.gmra.mrb[0].mxu0 %v2590
    %v3180 = vpop.f32.mrb[0].mxu0
    %v3181 = vadd.f32 %v3106, %v3180
    %v3182 = vpop.f32.mrb[0].mxu0
    %3183 = vdwg.mxu0
    %s3184 = scalar_lea.vmem [#allocation13], 32
    %v3185 = vld [vmem:[%s3184] sm:$0xff]
    %v3186 = vld [vmem:[%s3184 + $0x8] sm:$0xff]
    %3187 = vmatprep.subr.mxu0 0.0
    %3188 = vmatpush1.msra.mxu0 %v3185
    %3189 = vmatprep.subr.mxu0 0.0
    %3190 = vmatpush1.msra.mxu0 %v3186
    %3191 = vmatprep.subr.mxu0 0.0
    %3192 = vmatpush1.msra.mxu0 0.0
    %3193 = vmatprep.subr.mxu0 0.0
    %3194 = vmatpush1.msra.mxu0 0.0
    %3195 = vmatprep.subr.mxu0 0.0
    %3196 = vmatpush1.msra.mxu0 0.0
    %3197 = vmatprep.subr.mxu0 0.0
    %3198 = vmatpush1.msra.mxu0 0.0
    %3199 = vmatprep.subr.mxu0 0.0
    %3200 = vmatpush1.msra.mxu0 0.0
    %3201 = vmatprep.subr.mxu0 0.0
    %3202 = vmatpush1.msra.mxu0 0.0
    %3203 = vmatprep.subr.mxu0 0.0
    %3204 = vmatpush1.msra.mxu0 0.0
    %3205 = vmatprep.subr.mxu0 0.0
    %3206 = vmatpush1.msra.mxu0 0.0
    %3207 = vmatprep.subr.mxu0 0.0
    %3208 = vmatpush1.msra.mxu0 0.0
    %3209 = vmatprep.subr.mxu0 0.0
    %3210 = vmatpush1.msra.mxu0 0.0
    %3211 = vmatprep.subr.mxu0 0.0
    %3212 = vmatpush1.msra.mxu0 0.0
    %3213 = vmatprep.subr.mxu0 0.0
    %3214 = vmatpush1.msra.mxu0 0.0
    %3215 = vmatprep.subr.mxu0 0.0
    %3216 = vmatpush1.msra.mxu0 0.0
    %3217 = vmatprep.subr.mxu0 0.0
    %3218 = vmatpush1.msra.mxu0 0.0
    %3219 = vmatprep.subr.mxu0 0.0
    %3220 = vmatpush1.msra.mxu0 0.0
    %3221 = vmatprep.subr.mxu0 0.0
    %3222 = vmatpush1.msra.mxu0 0.0
    %3223 = vmatprep.subr.mxu0 0.0
    %3224 = vmatpush1.msra.mxu0 0.0
    %3225 = vmatprep.subr.mxu0 0.0
    %3226 = vmatpush1.msra.mxu0 0.0
    %3227 = vmatprep.subr.mxu0 0.0
    %3228 = vmatpush1.msra.mxu0 0.0
    %3229 = vmatprep.subr.mxu0 0.0
    %3230 = vmatpush1.msra.mxu0 0.0
    %3231 = vmatprep.subr.mxu0 0.0
    %3232 = vmatpush1.msra.mxu0 0.0
    %3233 = vmatprep.subr.mxu0 0.0
    %3234 = vmatpush1.msra.mxu0 0.0
    %3235 = vmatprep.subr.mxu0 0.0
    %3236 = vmatpush1.msra.mxu0 0.0
    %3237 = vmatprep.subr.mxu0 0.0
    %3238 = vmatpush1.msra.mxu0 0.0
    %3239 = vmatprep.subr.mxu0 0.0
    %3240 = vmatpush1.msra.mxu0 0.0
    %3241 = vmatprep.subr.mxu0 0.0
    %3242 = vmatpush1.msra.mxu0 0.0
    %3243 = vmatprep.subr.mxu0 0.0
    %3244 = vmatpush1.msra.mxu0 0.0
    %3245 = vmatprep.subr.mxu0 0.0
    %3246 = vmatpush1.msra.mxu0 0.0
    %3247 = vmatprep.subr.mxu0 0.0
    %3248 = vmatpush1.msra.mxu0 0.0
    %3249 = vmatprep.subr.mxu0 0.0
    %3250 = vmatpush1.msra.mxu0 0.0
    %3251 = vmatprep.mubr.f32.mxu0 0.0
    %3252 = vmatmul.mubr.f32.gmra.mrb[0].mxu0 %v2671
    %v3253 = vpop.f32.mrb[0].mxu0
    %v3254 = vadd.f32 0.0, %v3253
    %v3255 = vpop.f32.mrb[0].mxu0
    %3256 = vmatprep.mubr.f32.mxu0 0.0
    %3257 = vmatmul.mubr.f32.gmra.mrb[0].mxu0 %v2674
    %v3258 = vpop.f32.mrb[0].mxu0
    %v3259 = vadd.f32 0.0, %v3258
    %v3260 = vpop.f32.mrb[0].mxu0
    %3261 = vdwg.mxu0
    %v3262 = vadd.f32 %v3176, %v3254
    %v3263 = vadd.f32 %v3181, %v3259
    %v3264 = vld [vmem:[#allocation17] sm:$0xff]
    %v3265 = vld [vmem:[#allocation17 + $0x8] sm:$0xff]
    %s3266 = scalar_lea.vmem [#allocation17], 16
    %v3267 = vld [vmem:[%s3266] sm:$0xff]
    %v3268 = vld [vmem:[%s3266 + $0x8] sm:$0xff]
    %3269 = vmatprep.subr.mxu0 0.0
    %3270 = vmatpush1.msra.mxu0 %v3267
    %3271 = vmatprep.subr.mxu0 0.0
    %3272 = vmatpush1.msra.mxu0 %v3268
    %3273 = vmatprep.subr.mxu0 0.0
    %3274 = vmatpush1.msra.mxu0 0.0
    %3275 = vmatprep.subr.mxu0 0.0
    %3276 = vmatpush1.msra.mxu0 0.0
    %3277 = vmatprep.subr.mxu0 0.0
    %3278 = vmatpush1.msra.mxu0 0.0
    %3279 = vmatprep.subr.mxu0 0.0
    %3280 = vmatpush1.msra.mxu0 0.0
    %3281 = vmatprep.subr.mxu0 0.0
    %3282 = vmatpush1.msra.mxu0 0.0
    %3283 = vmatprep.subr.mxu0 0.0
    %3284 = vmatpush1.msra.mxu0 0.0
    %3285 = vmatprep.subr.mxu0 0.0
    %3286 = vmatpush1.msra.mxu0 0.0
    %3287 = vmatprep.subr.mxu0 0.0
    %3288 = vmatpush1.msra.mxu0 0.0
    %3289 = vmatprep.subr.mxu0 0.0
    %3290 = vmatpush1.msra.mxu0 0.0
    %3291 = vmatprep.subr.mxu0 0.0
    %3292 = vmatpush1.msra.mxu0 0.0
    %3293 = vmatprep.subr.mxu0 0.0
    %3294 = vmatpush1.msra.mxu0 0.0
    %3295 = vmatprep.subr.mxu0 0.0
    %3296 = vmatpush1.msra.mxu0 0.0
    %3297 = vmatprep.subr.mxu0 0.0
    %3298 = vmatpush1.msra.mxu0 0.0
    %3299 = vmatprep.subr.mxu0 0.0
    %3300 = vmatpush1.msra.mxu0 0.0
    %3301 = vmatprep.subr.mxu0 0.0
    %3302 = vmatpush1.msra.mxu0 0.0
    %3303 = vmatprep.subr.mxu0 0.0
    %3304 = vmatpush1.msra.mxu0 0.0
    %3305 = vmatprep.subr.mxu0 0.0
    %3306 = vmatpush1.msra.mxu0 0.0
    %3307 = vmatprep.subr.mxu0 0.0
    %3308 = vmatpush1.msra.mxu0 0.0
    %3309 = vmatprep.subr.mxu0 0.0
    %3310 = vmatpush1.msra.mxu0 0.0
    %3311 = vmatprep.subr.mxu0 0.0
    %3312 = vmatpush1.msra.mxu0 0.0
    %3313 = vmatprep.subr.mxu0 0.0
    %3314 = vmatpush1.msra.mxu0 0.0
    %3315 = vmatprep.subr.mxu0 0.0
    %3316 = vmatpush1.msra.mxu0 0.0
    %3317 = vmatprep.subr.mxu0 0.0
    %3318 = vmatpush1.msra.mxu0 0.0
    %3319 = vmatprep.subr.mxu0 0.0
    %3320 = vmatpush1.msra.mxu0 0.0
    %3321 = vmatprep.subr.mxu0 0.0
    %3322 = vmatpush1.msra.mxu0 0.0
    %3323 = vmatprep.subr.mxu0 0.0
    %3324 = vmatpush1.msra.mxu0 0.0
    %3325 = vmatprep.subr.mxu0 0.0
    %3326 = vmatpush1.msra.mxu0 0.0
    %3327 = vmatprep.subr.mxu0 0.0
    %3328 = vmatpush1.msra.mxu0 0.0
    %3329 = vmatprep.subr.mxu0 0.0
    %3330 = vmatpush1.msra.mxu0 0.0
    %3331 = vmatprep.subr.mxu0 0.0
    %3332 = vmatpush1.msra.mxu0 0.0
    %3333 = vmatprep.mubr.f32.mxu0 0.0
    %3334 = vmatmul.mubr.f32.gmra.mrb[0].mxu0 %v2759
    %v3335 = vpop.f32.mrb[0].mxu0
    %v3336 = vadd.f32 0.0, %v3335
    %v3337 = vpop.f32.mrb[0].mxu0
    %3338 = vmatprep.mubr.f32.mxu0 0.0
    %3339 = vmatmul.mubr.f32.gmra.mrb[0].mxu0 %v2762
    %v3340 = vpop.f32.mrb[0].mxu0
    %v3341 = vadd.f32 0.0, %v3340
    %v3342 = vpop.f32.mrb[0].mxu0
    %3343 = vdwg.mxu0
    %3344 = vmatprep.subr.mxu0 0.0
    %3345 = vmatpush1.msra.mxu0 %v3264
    %3346 = vmatprep.subr.mxu0 0.0
    %3347 = vmatpush1.msra.mxu0 %v3265
    %3348 = vmatprep.subr.mxu0 0.0
    %3349 = vmatpush1.msra.mxu0 0.0
    %3350 = vmatprep.subr.mxu0 0.0
    %3351 = vmatpush1.msra.mxu0 0.0
    %3352 = vmatprep.subr.mxu0 0.0
    %3353 = vmatpush1.msra.mxu0 0.0
    %3354 = vmatprep.subr.mxu0 0.0
    %3355 = vmatpush1.msra.mxu0 0.0
    %3356 = vmatprep.subr.mxu0 0.0
    %3357 = vmatpush1.msra.mxu0 0.0
    %3358 = vmatprep.subr.mxu0 0.0
    %3359 = vmatpush1.msra.mxu0 0.0
    %3360 = vmatprep.subr.mxu0 0.0
    %3361 = vmatpush1.msra.mxu0 0.0
    %3362 = vmatprep.subr.mxu0 0.0
    %3363 = vmatpush1.msra.mxu0 0.0
    %3364 = vmatprep.subr.mxu0 0.0
    %3365 = vmatpush1.msra.mxu0 0.0
    %3366 = vmatprep.subr.mxu0 0.0
    %3367 = vmatpush1.msra.mxu0 0.0
    %3368 = vmatprep.subr.mxu0 0.0
    %3369 = vmatpush1.msra.mxu0 0.0
    %3370 = vmatprep.subr.mxu0 0.0
    %3371 = vmatpush1.msra.mxu0 0.0
    %3372 = vmatprep.subr.mxu0 0.0
    %3373 = vmatpush1.msra.mxu0 0.0
    %3374 = vmatprep.subr.mxu0 0.0
    %3375 = vmatpush1.msra.mxu0 0.0
    %3376 = vmatprep.subr.mxu0 0.0
    %3377 = vmatpush1.msra.mxu0 0.0
    %3378 = vmatprep.subr.mxu0 0.0
    %3379 = vmatpush1.msra.mxu0 0.0
    %3380 = vmatprep.subr.mxu0 0.0
    %3381 = vmatpush1.msra.mxu0 0.0
    %3382 = vmatprep.subr.mxu0 0.0
    %3383 = vmatpush1.msra.mxu0 0.0
    %3384 = vmatprep.subr.mxu0 0.0
    %3385 = vmatpush1.msra.mxu0 0.0
    %3386 = vmatprep.subr.mxu0 0.0
    %3387 = vmatpush1.msra.mxu0 0.0
    %3388 = vmatprep.subr.mxu0 0.0
    %3389 = vmatpush1.msra.mxu0 0.0
    %3390 = vmatprep.subr.mxu0 0.0
    %3391 = vmatpush1.msra.mxu0 0.0
    %3392 = vmatprep.subr.mxu0 0.0
    %3393 = vmatpush1.msra.mxu0 0.0
    %3394 = vmatprep.subr.mxu0 0.0
    %3395 = vmatpush1.msra.mxu0 0.0
    %3396 = vmatprep.subr.mxu0 0.0
    %3397 = vmatpush1.msra.mxu0 0.0
    %3398 = vmatprep.subr.mxu0 0.0
    %3399 = vmatpush1.msra.mxu0 0.0
    %3400 = vmatprep.subr.mxu0 0.0
    %3401 = vmatpush1.msra.mxu0 0.0
    %3402 = vmatprep.subr.mxu0 0.0
    %3403 = vmatpush1.msra.mxu0 0.0
    %3404 = vmatprep.subr.mxu0 0.0
    %3405 = vmatpush1.msra.mxu0 0.0
    %3406 = vmatprep.subr.mxu0 0.0
    %3407 = vmatpush1.msra.mxu0 0.0
    %3408 = vmatprep.mubr.f32.mxu0 0.0
    %3409 = vmatmul.mubr.f32.gmra.mrb[0].mxu0 %v2840
    %v3410 = vpop.f32.mrb[0].mxu0
    %v3411 = vadd.f32 %v3336, %v3410
    %v3412 = vpop.f32.mrb[0].mxu0
    %3413 = vmatprep.mubr.f32.mxu0 0.0
    %3414 = vmatmul.mubr.f32.gmra.mrb[0].mxu0 %v2843
    %v3415 = vpop.f32.mrb[0].mxu0
    %v3416 = vadd.f32 %v3341, %v3415
    %v3417 = vpop.f32.mrb[0].mxu0
    %3418 = vdwg.mxu0
    %s3419 = scalar_lea.vmem [#allocation17], 32
    %v3420 = vld [vmem:[%s3419] sm:$0xff]
    %v3421 = vld [vmem:[%s3419 + $0x8] sm:$0xff]
    %3422 = vmatprep.subr.mxu0 0.0
    %3423 = vmatpush1.msra.mxu0 %v3420
    %3424 = vmatprep.subr.mxu0 0.0
    %3425 = vmatpush1.msra.mxu0 %v3421
    %3426 = vmatprep.subr.mxu0 0.0
    %3427 = vmatpush1.msra.mxu0 0.0
    %3428 = vmatprep.subr.mxu0 0.0
    %3429 = vmatpush1.msra.mxu0 0.0
    %3430 = vmatprep.subr.mxu0 0.0
    %3431 = vmatpush1.msra.mxu0 0.0
    %3432 = vmatprep.subr.mxu0 0.0
    %3433 = vmatpush1.msra.mxu0 0.0
    %3434 = vmatprep.subr.mxu0 0.0
    %3435 = vmatpush1.msra.mxu0 0.0
    %3436 = vmatprep.subr.mxu0 0.0
    %3437 = vmatpush1.msra.mxu0 0.0
    %3438 = vmatprep.subr.mxu0 0.0
    %3439 = vmatpush1.msra.mxu0 0.0
    %3440 = vmatprep.subr.mxu0 0.0
    %3441 = vmatpush1.msra.mxu0 0.0
    %3442 = vmatprep.subr.mxu0 0.0
    %3443 = vmatpush1.msra.mxu0 0.0
    %3444 = vmatprep.subr.mxu0 0.0
    %3445 = vmatpush1.msra.mxu0 0.0
    %3446 = vmatprep.subr.mxu0 0.0
    %3447 = vmatpush1.msra.mxu0 0.0
    %3448 = vmatprep.subr.mxu0 0.0
    %3449 = vmatpush1.msra.mxu0 0.0
    %3450 = vmatprep.subr.mxu0 0.0
    %3451 = vmatpush1.msra.mxu0 0.0
    %3452 = vmatprep.subr.mxu0 0.0
    %3453 = vmatpush1.msra.mxu0 0.0
    %3454 = vmatprep.subr.mxu0 0.0
    %3455 = vmatpush1.msra.mxu0 0.0
    %3456 = vmatprep.subr.mxu0 0.0
    %3457 = vmatpush1.msra.mxu0 0.0
    %3458 = vmatprep.subr.mxu0 0.0
    %3459 = vmatpush1.msra.mxu0 0.0
    %3460 = vmatprep.subr.mxu0 0.0
    %3461 = vmatpush1.msra.mxu0 0.0
    %3462 = vmatprep.subr.mxu0 0.0
    %3463 = vmatpush1.msra.mxu0 0.0
    %3464 = vmatprep.subr.mxu0 0.0
    %3465 = vmatpush1.msra.mxu0 0.0
    %3466 = vmatprep.subr.mxu0 0.0
    %3467 = vmatpush1.msra.mxu0 0.0
    %3468 = vmatprep.subr.mxu0 0.0
    %3469 = vmatpush1.msra.mxu0 0.0
    %3470 = vmatprep.subr.mxu0 0.0
    %3471 = vmatpush1.msra.mxu0 0.0
    %3472 = vmatprep.subr.mxu0 0.0
    %3473 = vmatpush1.msra.mxu0 0.0
    %3474 = vmatprep.subr.mxu0 0.0
    %3475 = vmatpush1.msra.mxu0 0.0
    %3476 = vmatprep.subr.mxu0 0.0
    %3477 = vmatpush1.msra.mxu0 0.0
    %3478 = vmatprep.subr.mxu0 0.0
    %3479 = vmatpush1.msra.mxu0 0.0
    %3480 = vmatprep.subr.mxu0 0.0
    %3481 = vmatpush1.msra.mxu0 0.0
    %3482 = vmatprep.subr.mxu0 0.0
    %3483 = vmatpush1.msra.mxu0 0.0
    %3484 = vmatprep.subr.mxu0 0.0
    %3485 = vmatpush1.msra.mxu0 0.0
    %3486 = vmatprep.mubr.f32.mxu0 0.0
    %3487 = vmatmul.mubr.f32.gmra.mrb[0].mxu0 %v2924
    %v3488 = vpop.f32.mrb[0].mxu0
    %v3489 = vadd.f32 0.0, %v3488
    %v3490 = vpop.f32.mrb[0].mxu0
    %3491 = vmatprep.mubr.f32.mxu0 0.0
    %3492 = vmatmul.mubr.f32.gmra.mrb[0].mxu0 %v2927
    %v3493 = vpop.f32.mrb[0].mxu0
    %v3494 = vadd.f32 0.0, %v3493
    %v3495 = vpop.f32.mrb[0].mxu0
    %3496 = vdwg.mxu0
    %v3497 = vadd.f32 %v3411, %v3489
    %v3498 = vadd.f32 %v3416, %v3494
    %v3499 = vadd.f32 %v3262, %v3497
    %v3500 = vadd.f32 %v3263, %v3498
    %v3501 = vld [vmem:[#allocation22] sm:$0x1]
    %v3503 = vlaneseq
    %v3504 = vshrl.u32 %v3503, 7
    %v3505 = vsub.s32 0, %v3504
    %v3506 = vrot.slane %v3501, %v3505
    %v3508 = vadd.f32 %v3499, %v3506
    %v3509 = vadd.f32 %v3500, %v3506
    %v3510 = vxor.u32 %v3508, 2147483648
    %v3511 = vxor.u32 %v3509, 2147483648
    %v3512 = vmul.f32 %v3510, 1.442695
    %v3513 = vpow.pop %v3512
    %v3514 = vmul.f32 %v3511, 1.442695
    %v3515 = vpow.pop %v3514
    %v3516 = vadd.f32 %v3513, 1.0
    %v3517 = vadd.f32 %v3515, 1.0
    %v3518 = vrcp.pop %v3516
    %v3519 = vmul.f32 1.0, %v3518
    %v3520 = vrcp.pop %v3517
    %v3521 = vmul.f32 1.0, %v3520
    %v3522 = vmul.f32 %v3026, %v2190
    %v3523 = vmul.f32 %v3028, %v2191
    %3524 = vmatprep.subr.mxu0 0.0
    %3525 = vmatpush1.msra.mxu0 %v3522
    %3526 = vmatprep.subr.mxu0 0.0
    %3527 = vmatpush1.msra.mxu0 %v3523
    %3528 = vmatprep.subr.mxu0 0.0
    %3529 = vmatpush1.msra.mxu0 0.0
    %3530 = vmatprep.subr.mxu0 0.0
    %3531 = vmatpush1.msra.mxu0 0.0
    %3532 = vmatprep.subr.mxu0 0.0
    %3533 = vmatpush1.msra.mxu0 0.0
    %3534 = vmatprep.subr.mxu0 0.0
    %3535 = vmatpush1.msra.mxu0 0.0
    %3536 = vmatprep.subr.mxu0 0.0
    %3537 = vmatpush1.msra.mxu0 0.0
    %3538 = vmatprep.subr.mxu0 0.0
    %3539 = vmatpush1.msra.mxu0 0.0
    %3540 = vmatprep.subr.mxu0 0.0
    %3541 = vmatpush1.msra.mxu0 0.0
    %3542 = vmatprep.subr.mxu0 0.0
    %3543 = vmatpush1.msra.mxu0 0.0
    %3544 = vmatprep.subr.mxu0 0.0
    %3545 = vmatpush1.msra.mxu0 0.0
    %3546 = vmatprep.subr.mxu0 0.0
    %3547 = vmatpush1.msra.mxu0 0.0
    %3548 = vmatprep.subr.mxu0 0.0
    %3549 = vmatpush1.msra.mxu0 0.0
    %3550 = vmatprep.subr.mxu0 0.0
    %3551 = vmatpush1.msra.mxu0 0.0
    %3552 = vmatprep.subr.mxu0 0.0
    %3553 = vmatpush1.msra.mxu0 0.0
    %3554 = vmatprep.subr.mxu0 0.0
    %3555 = vmatpush1.msra.mxu0 0.0
    %3556 = vmatprep.subr.mxu0 0.0
    %3557 = vmatpush1.msra.mxu0 0.0
    %3558 = vmatprep.subr.mxu0 0.0
    %3559 = vmatpush1.msra.mxu0 0.0
    %3560 = vmatprep.subr.mxu0 0.0
    %3561 = vmatpush1.msra.mxu0 0.0
    %3562 = vmatprep.subr.mxu0 0.0
    %3563 = vmatpush1.msra.mxu0 0.0
    %3564 = vmatprep.subr.mxu0 0.0
    %3565 = vmatpush1.msra.mxu0 0.0
    %3566 = vmatprep.subr.mxu0 0.0
    %3567 = vmatpush1.msra.mxu0 0.0
    %3568 = vmatprep.subr.mxu0 0.0
    %3569 = vmatpush1.msra.mxu0 0.0
    %3570 = vmatprep.subr.mxu0 0.0
    %3571 = vmatpush1.msra.mxu0 0.0
    %3572 = vmatprep.subr.mxu0 0.0
    %3573 = vmatpush1.msra.mxu0 0.0
    %3574 = vmatprep.subr.mxu0 0.0
    %3575 = vmatpush1.msra.mxu0 0.0
    %3576 = vmatprep.subr.mxu0 0.0
    %3577 = vmatpush1.msra.mxu0 0.0
    %3578 = vmatprep.subr.mxu0 0.0
    %3579 = vmatpush1.msra.mxu0 0.0
    %3580 = vmatprep.subr.mxu0 0.0
    %3581 = vmatpush1.msra.mxu0 0.0
    %3582 = vmatprep.subr.mxu0 0.0
    %3583 = vmatpush1.msra.mxu0 0.0
    %3584 = vmatprep.subr.mxu0 0.0
    %3585 = vmatpush1.msra.mxu0 0.0
    %3586 = vmatprep.subr.mxu0 0.0
    %3587 = vmatpush1.msra.mxu0 0.0
    %3588 = vmatprep.mubr.f32.mxu0 0.0
    %3589 = vmatmul.mubr.f32.gmra.mrb[0].mxu0 %v268
    %v3590 = vpop.f32.mrb[0].mxu0
    %v3591 = vadd.f32 0.0, %v3590
    %v3592 = vpop.f32.mrb[0].mxu0
    %3593 = vmatprep.mubr.f32.mxu0 0.0
    %3594 = vmatmul.mubr.f32.gmra.mrb[0].mxu0 %v271
    %v3595 = vpop.f32.mrb[0].mxu0
    %v3596 = vadd.f32 0.0, %v3595
    %v3597 = vpop.f32.mrb[0].mxu0
    %3598 = vdwg.mxu0
    %3599 = vmatprep.subr.mxu0 0.0
    %3600 = vmatpush1.msra.mxu0 %v3591
    %3601 = vmatprep.subr.mxu0 0.0
    %3602 = vmatpush1.msra.mxu0 %v3596
    %3603 = vmatprep.subr.mxu0 0.0
    %3604 = vmatpush1.msra.mxu0 0.0
    %3605 = vmatprep.subr.mxu0 0.0
    %3606 = vmatpush1.msra.mxu0 0.0
    %3607 = vmatprep.subr.mxu0 0.0
    %3608 = vmatpush1.msra.mxu0 0.0
    %3609 = vmatprep.subr.mxu0 0.0
    %3610 = vmatpush1.msra.mxu0 0.0
    %3611 = vmatprep.subr.mxu0 0.0
    %3612 = vmatpush1.msra.mxu0 0.0
    %3613 = vmatprep.subr.mxu0 0.0
    %3614 = vmatpush1.msra.mxu0 0.0
    %3615 = vmatprep.subr.mxu0 0.0
    %3616 = vmatpush1.msra.mxu0 0.0
    %3617 = vmatprep.subr.mxu0 0.0
    %3618 = vmatpush1.msra.mxu0 0.0
    %3619 = vmatprep.subr.mxu0 0.0
    %3620 = vmatpush1.msra.mxu0 0.0
    %3621 = vmatprep.subr.mxu0 0.0
    %3622 = vmatpush1.msra.mxu0 0.0
    %3623 = vmatprep.subr.mxu0 0.0
    %3624 = vmatpush1.msra.mxu0 0.0
    %3625 = vmatprep.subr.mxu0 0.0
    %3626 = vmatpush1.msra.mxu0 0.0
    %3627 = vmatprep.subr.mxu0 0.0
    %3628 = vmatpush1.msra.mxu0 0.0
    %3629 = vmatprep.subr.mxu0 0.0
    %3630 = vmatpush1.msra.mxu0 0.0
    %3631 = vmatprep.subr.mxu0 0.0
    %3632 = vmatpush1.msra.mxu0 0.0
    %3633 = vmatprep.subr.mxu0 0.0
    %3634 = vmatpush1.msra.mxu0 0.0
    %3635 = vmatprep.subr.mxu0 0.0
    %3636 = vmatpush1.msra.mxu0 0.0
    %3637 = vmatprep.subr.mxu0 0.0
    %3638 = vmatpush1.msra.mxu0 0.0
    %3639 = vmatprep.subr.mxu0 0.0
    %3640 = vmatpush1.msra.mxu0 0.0
    %3641 = vmatprep.subr.mxu0 0.0
    %3642 = vmatpush1.msra.mxu0 0.0
    %3643 = vmatprep.subr.mxu0 0.0
    %3644 = vmatpush1.msra.mxu0 0.0
    %3645 = vmatprep.subr.mxu0 0.0
    %3646 = vmatpush1.msra.mxu0 0.0
    %3647 = vmatprep.subr.mxu0 0.0
    %3648 = vmatpush1.msra.mxu0 0.0
    %3649 = vmatprep.subr.mxu0 0.0
    %3650 = vmatpush1.msra.mxu0 0.0
    %3651 = vmatprep.subr.mxu0 0.0
    %3652 = vmatpush1.msra.mxu0 0.0
    %3653 = vmatprep.subr.mxu0 0.0
    %3654 = vmatpush1.msra.mxu0 0.0
    %3655 = vmatprep.subr.mxu0 0.0
    %3656 = vmatpush1.msra.mxu0 0.0
    %3657 = vmatprep.subr.mxu0 0.0
    %3658 = vmatpush1.msra.mxu0 0.0
    %3659 = vmatprep.subr.mxu0 0.0
    %3660 = vmatpush1.msra.mxu0 0.0
    %3661 = vmatprep.subr.mxu0 0.0
    %3662 = vmatpush1.msra.mxu0 0.0
    %3663 = vmatprep.mubr.f32.mxu0 0.0
    %3664 = vmatmul.mubr.f32.gmra.mrb[0].mxu0 %v268
    %v3665 = vpop.f32.mrb[0].mxu0
    %v3666 = vadd.f32 0.0, %v3665
    %v3667 = vpop.f32.mrb[0].mxu0
    %3668 = vmatprep.mubr.f32.mxu0 0.0
    %3669 = vmatmul.mubr.f32.gmra.mrb[0].mxu0 %v271
    %v3670 = vpop.f32.mrb[0].mxu0
    %v3671 = vadd.f32 0.0, %v3670
    %v3672 = vpop.f32.mrb[0].mxu0
    %3673 = vdwg.mxu0
    %v3674 = vmul.f32 %v3666, 2.0
    %v3675 = vmul.f32 %v3671, 2.0
    %v3676 = vsub.f32 %v3674, %v3522
    %v3677 = vsub.f32 %v3675, %v3523
    %v3678 = vld [vmem:[#allocation14] sm:$0xff]
    %v3679 = vld [vmem:[#allocation14 + $0x8] sm:$0xff]
    %s3680 = scalar_lea.vmem [#allocation14], 16
    %v3681 = vld [vmem:[%s3680] sm:$0xff]
    %v3682 = vld [vmem:[%s3680 + $0x8] sm:$0xff]
    %3683 = vmatprep.subr.mxu0 0.0
    %3684 = vmatpush1.msra.mxu0 %v3681
    %3685 = vmatprep.subr.mxu0 0.0
    %3686 = vmatpush1.msra.mxu0 %v3682
    %3687 = vmatprep.subr.mxu0 0.0
    %3688 = vmatpush1.msra.mxu0 0.0
    %3689 = vmatprep.subr.mxu0 0.0
    %3690 = vmatpush1.msra.mxu0 0.0
    %3691 = vmatprep.subr.mxu0 0.0
    %3692 = vmatpush1.msra.mxu0 0.0
    %3693 = vmatprep.subr.mxu0 0.0
    %3694 = vmatpush1.msra.mxu0 0.0
    %3695 = vmatprep.subr.mxu0 0.0
    %3696 = vmatpush1.msra.mxu0 0.0
    %3697 = vmatprep.subr.mxu0 0.0
    %3698 = vmatpush1.msra.mxu0 0.0
    %3699 = vmatprep.subr.mxu0 0.0
    %3700 = vmatpush1.msra.mxu0 0.0
    %3701 = vmatprep.subr.mxu0 0.0
    %3702 = vmatpush1.msra.mxu0 0.0
    %3703 = vmatprep.subr.mxu0 0.0
    %3704 = vmatpush1.msra.mxu0 0.0
    %3705 = vmatprep.subr.mxu0 0.0
    %3706 = vmatpush1.msra.mxu0 0.0
    %3707 = vmatprep.subr.mxu0 0.0
    %3708 = vmatpush1.msra.mxu0 0.0
    %3709 = vmatprep.subr.mxu0 0.0
    %3710 = vmatpush1.msra.mxu0 0.0
    %3711 = vmatprep.subr.mxu0 0.0
    %3712 = vmatpush1.msra.mxu0 0.0
    %3713 = vmatprep.subr.mxu0 0.0
    %3714 = vmatpush1.msra.mxu0 0.0
    %3715 = vmatprep.subr.mxu0 0.0
    %3716 = vmatpush1.msra.mxu0 0.0
    %3717 = vmatprep.subr.mxu0 0.0
    %3718 = vmatpush1.msra.mxu0 0.0
    %3719 = vmatprep.subr.mxu0 0.0
    %3720 = vmatpush1.msra.mxu0 0.0
    %3721 = vmatprep.subr.mxu0 0.0
    %3722 = vmatpush1.msra.mxu0 0.0
    %3723 = vmatprep.subr.mxu0 0.0
    %3724 = vmatpush1.msra.mxu0 0.0
    %3725 = vmatprep.subr.mxu0 0.0
    %3726 = vmatpush1.msra.mxu0 0.0
    %3727 = vmatprep.subr.mxu0 0.0
    %3728 = vmatpush1.msra.mxu0 0.0
    %3729 = vmatprep.subr.mxu0 0.0
    %3730 = vmatpush1.msra.mxu0 0.0
    %3731 = vmatprep.subr.mxu0 0.0
    %3732 = vmatpush1.msra.mxu0 0.0
    %3733 = vmatprep.subr.mxu0 0.0
    %3734 = vmatpush1.msra.mxu0 0.0
    %3735 = vmatprep.subr.mxu0 0.0
    %3736 = vmatpush1.msra.mxu0 0.0
    %3737 = vmatprep.subr.mxu0 0.0
    %3738 = vmatpush1.msra.mxu0 0.0
    %3739 = vmatprep.subr.mxu0 0.0
    %3740 = vmatpush1.msra.mxu0 0.0
    %3741 = vmatprep.subr.mxu0 0.0
    %3742 = vmatpush1.msra.mxu0 0.0
    %3743 = vmatprep.subr.mxu0 0.0
    %3744 = vmatpush1.msra.mxu0 0.0
    %3745 = vmatprep.subr.mxu0 0.0
    %3746 = vmatpush1.msra.mxu0 0.0
    %3747 = vmatprep.mubr.f32.mxu0 0.0
    %3748 = vmatmul.mubr.f32.gmra.mrb[0].mxu0 %v2506
    %v3749 = vpop.f32.mrb[0].mxu0
    %v3750 = vadd.f32 0.0, %v3749
    %v3751 = vpop.f32.mrb[0].mxu0
    %3752 = vmatprep.mubr.f32.mxu0 0.0
    %3753 = vmatmul.mubr.f32.gmra.mrb[0].mxu0 %v2509
    %v3754 = vpop.f32.mrb[0].mxu0
    %v3755 = vadd.f32 0.0, %v3754
    %v3756 = vpop.f32.mrb[0].mxu0
    %3757 = vdwg.mxu0
    %3758 = vmatprep.subr.mxu0 0.0
    %3759 = vmatpush1.msra.mxu0 %v3678
    %3760 = vmatprep.subr.mxu0 0.0
    %3761 = vmatpush1.msra.mxu0 %v3679
    %3762 = vmatprep.subr.mxu0 0.0
    %3763 = vmatpush1.msra.mxu0 0.0
    %3764 = vmatprep.subr.mxu0 0.0
    %3765 = vmatpush1.msra.mxu0 0.0
    %3766 = vmatprep.subr.mxu0 0.0
    %3767 = vmatpush1.msra.mxu0 0.0
    %3768 = vmatprep.subr.mxu0 0.0
    %3769 = vmatpush1.msra.mxu0 0.0
    %3770 = vmatprep.subr.mxu0 0.0
    %3771 = vmatpush1.msra.mxu0 0.0
    %3772 = vmatprep.subr.mxu0 0.0
    %3773 = vmatpush1.msra.mxu0 0.0
    %3774 = vmatprep.subr.mxu0 0.0
    %3775 = vmatpush1.msra.mxu0 0.0
    %3776 = vmatprep.subr.mxu0 0.0
    %3777 = vmatpush1.msra.mxu0 0.0
    %3778 = vmatprep.subr.mxu0 0.0
    %3779 = vmatpush1.msra.mxu0 0.0
    %3780 = vmatprep.subr.mxu0 0.0
    %3781 = vmatpush1.msra.mxu0 0.0
    %3782 = vmatprep.subr.mxu0 0.0
    %3783 = vmatpush1.msra.mxu0 0.0
    %3784 = vmatprep.subr.mxu0 0.0
    %3785 = vmatpush1.msra.mxu0 0.0
    %3786 = vmatprep.subr.mxu0 0.0
    %3787 = vmatpush1.msra.mxu0 0.0
    %3788 = vmatprep.subr.mxu0 0.0
    %3789 = vmatpush1.msra.mxu0 0.0
    %3790 = vmatprep.subr.mxu0 0.0
    %3791 = vmatpush1.msra.mxu0 0.0
    %3792 = vmatprep.subr.mxu0 0.0
    %3793 = vmatpush1.msra.mxu0 0.0
    %3794 = vmatprep.subr.mxu0 0.0
    %3795 = vmatpush1.msra.mxu0 0.0
    %3796 = vmatprep.subr.mxu0 0.0
    %3797 = vmatpush1.msra.mxu0 0.0
    %3798 = vmatprep.subr.mxu0 0.0
    %3799 = vmatpush1.msra.mxu0 0.0
    %3800 = vmatprep.subr.mxu0 0.0
    %3801 = vmatpush1.msra.mxu0 0.0
    %3802 = vmatprep.subr.mxu0 0.0
    %3803 = vmatpush1.msra.mxu0 0.0
    %3804 = vmatprep.subr.mxu0 0.0
    %3805 = vmatpush1.msra.mxu0 0.0
    %3806 = vmatprep.subr.mxu0 0.0
    %3807 = vmatpush1.msra.mxu0 0.0
    %3808 = vmatprep.subr.mxu0 0.0
    %3809 = vmatpush1.msra.mxu0 0.0
    %3810 = vmatprep.subr.mxu0 0.0
    %3811 = vmatpush1.msra.mxu0 0.0
    %3812 = vmatprep.subr.mxu0 0.0
    %3813 = vmatpush1.msra.mxu0 0.0
    %3814 = vmatprep.subr.mxu0 0.0
    %3815 = vmatpush1.msra.mxu0 0.0
    %3816 = vmatprep.subr.mxu0 0.0
    %3817 = vmatpush1.msra.mxu0 0.0
    %3818 = vmatprep.subr.mxu0 0.0
    %3819 = vmatpush1.msra.mxu0 0.0
    %3820 = vmatprep.subr.mxu0 0.0
    %3821 = vmatpush1.msra.mxu0 0.0
    %3822 = vmatprep.mubr.f32.mxu0 0.0
    %3823 = vmatmul.mubr.f32.gmra.mrb[0].mxu0 %v2587
    %v3824 = vpop.f32.mrb[0].mxu0
    %v3825 = vadd.f32 %v3750, %v3824
    %v3826 = vpop.f32.mrb[0].mxu0
    %3827 = vmatprep.mubr.f32.mxu0 0.0
    %3828 = vmatmul.mubr.f32.gmra.mrb[0].mxu0 %v2590
    %v3829 = vpop.f32.mrb[0].mxu0
    %v3830 = vadd.f32 %v3755, %v3829
    %v3831 = vpop.f32.mrb[0].mxu0
    %3832 = vdwg.mxu0
    %s3833 = scalar_lea.vmem [#allocation14], 32
    %v3834 = vld [vmem:[%s3833] sm:$0xff]
    %v3835 = vld [vmem:[%s3833 + $0x8] sm:$0xff]
    %3836 = vmatprep.subr.mxu0 0.0
    %3837 = vmatpush1.msra.mxu0 %v3834
    %3838 = vmatprep.subr.mxu0 0.0
    %3839 = vmatpush1.msra.mxu0 %v3835
    %3840 = vmatprep.subr.mxu0 0.0
    %3841 = vmatpush1.msra.mxu0 0.0
    %3842 = vmatprep.subr.mxu0 0.0
    %3843 = vmatpush1.msra.mxu0 0.0
    %3844 = vmatprep.subr.mxu0 0.0
    %3845 = vmatpush1.msra.mxu0 0.0
    %3846 = vmatprep.subr.mxu0 0.0
    %3847 = vmatpush1.msra.mxu0 0.0
    %3848 = vmatprep.subr.mxu0 0.0
    %3849 = vmatpush1.msra.mxu0 0.0
    %3850 = vmatprep.subr.mxu0 0.0
    %3851 = vmatpush1.msra.mxu0 0.0
    %3852 = vmatprep.subr.mxu0 0.0
    %3853 = vmatpush1.msra.mxu0 0.0
    %3854 = vmatprep.subr.mxu0 0.0
    %3855 = vmatpush1.msra.mxu0 0.0
    %3856 = vmatprep.subr.mxu0 0.0
    %3857 = vmatpush1.msra.mxu0 0.0
    %3858 = vmatprep.subr.mxu0 0.0
    %3859 = vmatpush1.msra.mxu0 0.0
    %3860 = vmatprep.subr.mxu0 0.0
    %3861 = vmatpush1.msra.mxu0 0.0
    %3862 = vmatprep.subr.mxu0 0.0
    %3863 = vmatpush1.msra.mxu0 0.0
    %3864 = vmatprep.subr.mxu0 0.0
    %3865 = vmatpush1.msra.mxu0 0.0
    %3866 = vmatprep.subr.mxu0 0.0
    %3867 = vmatpush1.msra.mxu0 0.0
    %3868 = vmatprep.subr.mxu0 0.0
    %3869 = vmatpush1.msra.mxu0 0.0
    %3870 = vmatprep.subr.mxu0 0.0
    %3871 = vmatpush1.msra.mxu0 0.0
    %3872 = vmatprep.subr.mxu0 0.0
    %3873 = vmatpush1.msra.mxu0 0.0
    %3874 = vmatprep.subr.mxu0 0.0
    %3875 = vmatpush1.msra.mxu0 0.0
    %3876 = vmatprep.subr.mxu0 0.0
    %3877 = vmatpush1.msra.mxu0 0.0
    %3878 = vmatprep.subr.mxu0 0.0
    %3879 = vmatpush1.msra.mxu0 0.0
    %3880 = vmatprep.subr.mxu0 0.0
    %3881 = vmatpush1.msra.mxu0 0.0
    %3882 = vmatprep.subr.mxu0 0.0
    %3883 = vmatpush1.msra.mxu0 0.0
    %3884 = vmatprep.subr.mxu0 0.0
    %3885 = vmatpush1.msra.mxu0 0.0
    %3886 = vmatprep.subr.mxu0 0.0
    %3887 = vmatpush1.msra.mxu0 0.0
    %3888 = vmatprep.subr.mxu0 0.0
    %3889 = vmatpush1.msra.mxu0 0.0
    %3890 = vmatprep.subr.mxu0 0.0
    %3891 = vmatpush1.msra.mxu0 0.0
    %3892 = vmatprep.subr.mxu0 0.0
    %3893 = vmatpush1.msra.mxu0 0.0
    %3894 = vmatprep.subr.mxu0 0.0
    %3895 = vmatpush1.msra.mxu0 0.0
    %3896 = vmatprep.subr.mxu0 0.0
    %3897 = vmatpush1.msra.mxu0 0.0
    %3898 = vmatprep.subr.mxu0 0.0
    %3899 = vmatpush1.msra.mxu0 0.0
    %3900 = vmatprep.mubr.f32.mxu0 0.0
    %3901 = vmatmul.mubr.f32.gmra.mrb[0].mxu0 %v2671
    %v3902 = vpop.f32.mrb[0].mxu0
    %v3903 = vadd.f32 0.0, %v3902
    %v3904 = vpop.f32.mrb[0].mxu0
    %3905 = vmatprep.mubr.f32.mxu0 0.0
    %3906 = vmatmul.mubr.f32.gmra.mrb[0].mxu0 %v2674
    %v3907 = vpop.f32.mrb[0].mxu0
    %v3908 = vadd.f32 0.0, %v3907
    %v3909 = vpop.f32.mrb[0].mxu0
    %3910 = vdwg.mxu0
    %v3911 = vadd.f32 %v3825, %v3903
    %v3912 = vadd.f32 %v3830, %v3908
    %v3913 = vld [vmem:[#allocation19] sm:$0xff]
    %v3914 = vld [vmem:[#allocation19 + $0x8] sm:$0xff]
    %s3915 = scalar_lea.vmem [#allocation19], 16
    %v3916 = vld [vmem:[%s3915] sm:$0xff]
    %v3917 = vld [vmem:[%s3915 + $0x8] sm:$0xff]
    %v3919 = vsel %vm266, %v3591, 0
    %v3922 = vsel %vm266, %v3596, 0
    %3924 = vmatprep.subr.mxu0 0.0
    %3925 = vmatpush1.msra.mxu0 %v3916
    %3926 = vmatprep.subr.mxu0 0.0
    %3927 = vmatpush1.msra.mxu0 %v3917
    %3928 = vmatprep.subr.mxu0 0.0
    %3929 = vmatpush1.msra.mxu0 0.0
    %3930 = vmatprep.subr.mxu0 0.0
    %3931 = vmatpush1.msra.mxu0 0.0
    %3932 = vmatprep.subr.mxu0 0.0
    %3933 = vmatpush1.msra.mxu0 0.0
    %3934 = vmatprep.subr.mxu0 0.0
    %3935 = vmatpush1.msra.mxu0 0.0
    %3936 = vmatprep.subr.mxu0 0.0
    %3937 = vmatpush1.msra.mxu0 0.0
    %3938 = vmatprep.subr.mxu0 0.0
    %3939 = vmatpush1.msra.mxu0 0.0
    %3940 = vmatprep.subr.mxu0 0.0
    %3941 = vmatpush1.msra.mxu0 0.0
    %3942 = vmatprep.subr.mxu0 0.0
    %3943 = vmatpush1.msra.mxu0 0.0
    %3944 = vmatprep.subr.mxu0 0.0
    %3945 = vmatpush1.msra.mxu0 0.0
    %3946 = vmatprep.subr.mxu0 0.0
    %3947 = vmatpush1.msra.mxu0 0.0
    %3948 = vmatprep.subr.mxu0 0.0
    %3949 = vmatpush1.msra.mxu0 0.0
    %3950 = vmatprep.subr.mxu0 0.0
    %3951 = vmatpush1.msra.mxu0 0.0
    %3952 = vmatprep.subr.mxu0 0.0
    %3953 = vmatpush1.msra.mxu0 0.0
    %3954 = vmatprep.subr.mxu0 0.0
    %3955 = vmatpush1.msra.mxu0 0.0
    %3956 = vmatprep.subr.mxu0 0.0
    %3957 = vmatpush1.msra.mxu0 0.0
    %3958 = vmatprep.subr.mxu0 0.0
    %3959 = vmatpush1.msra.mxu0 0.0
    %3960 = vmatprep.subr.mxu0 0.0
    %3961 = vmatpush1.msra.mxu0 0.0
    %3962 = vmatprep.subr.mxu0 0.0
    %3963 = vmatpush1.msra.mxu0 0.0
    %3964 = vmatprep.subr.mxu0 0.0
    %3965 = vmatpush1.msra.mxu0 0.0
    %3966 = vmatprep.subr.mxu0 0.0
    %3967 = vmatpush1.msra.mxu0 0.0
    %3968 = vmatprep.subr.mxu0 0.0
    %3969 = vmatpush1.msra.mxu0 0.0
    %3970 = vmatprep.subr.mxu0 0.0
    %3971 = vmatpush1.msra.mxu0 0.0
    %3972 = vmatprep.subr.mxu0 0.0
    %3973 = vmatpush1.msra.mxu0 0.0
    %3974 = vmatprep.subr.mxu0 0.0
    %3975 = vmatpush1.msra.mxu0 0.0
    %3976 = vmatprep.subr.mxu0 0.0
    %3977 = vmatpush1.msra.mxu0 0.0
    %3978 = vmatprep.subr.mxu0 0.0
    %3979 = vmatpush1.msra.mxu0 0.0
    %3980 = vmatprep.subr.mxu0 0.0
    %3981 = vmatpush1.msra.mxu0 0.0
    %3982 = vmatprep.subr.mxu0 0.0
    %3983 = vmatpush1.msra.mxu0 0.0
    %3984 = vmatprep.subr.mxu0 0.0
    %3985 = vmatpush1.msra.mxu0 0.0
    %3986 = vmatprep.subr.mxu0 0.0
    %3987 = vmatpush1.msra.mxu0 0.0
    %3988 = vmatprep.mubr.f32.mxu0 0.0
    %3989 = vmatmul.mubr.f32.gmra.mrb[0].mxu0 %v3919
    %v3990 = vpop.f32.mrb[0].mxu0
    %v3991 = vadd.f32 0.0, %v3990
    %v3992 = vpop.f32.mrb[0].mxu0
    %3993 = vmatprep.mubr.f32.mxu0 0.0
    %3994 = vmatmul.mubr.f32.gmra.mrb[0].mxu0 %v3922
    %v3995 = vpop.f32.mrb[0].mxu0
    %v3996 = vadd.f32 0.0, %v3995
    %v3997 = vpop.f32.mrb[0].mxu0
    %3998 = vdwg.mxu0
    %v4000 = vsel %vm266, %v3522, 0
    %v4003 = vsel %vm266, %v3523, 0
    %4005 = vmatprep.subr.mxu0 0.0
    %4006 = vmatpush1.msra.mxu0 %v3913
    %4007 = vmatprep.subr.mxu0 0.0
    %4008 = vmatpush1.msra.mxu0 %v3914
    %4009 = vmatprep.subr.mxu0 0.0
    %4010 = vmatpush1.msra.mxu0 0.0
    %4011 = vmatprep.subr.mxu0 0.0
    %4012 = vmatpush1.msra.mxu0 0.0
    %4013 = vmatprep.subr.mxu0 0.0
    %4014 = vmatpush1.msra.mxu0 0.0
    %4015 = vmatprep.subr.mxu0 0.0
    %4016 = vmatpush1.msra.mxu0 0.0
    %4017 = vmatprep.subr.mxu0 0.0
    %4018 = vmatpush1.msra.mxu0 0.0
    %4019 = vmatprep.subr.mxu0 0.0
    %4020 = vmatpush1.msra.mxu0 0.0
    %4021 = vmatprep.subr.mxu0 0.0
    %4022 = vmatpush1.msra.mxu0 0.0
    %4023 = vmatprep.subr.mxu0 0.0
    %4024 = vmatpush1.msra.mxu0 0.0
    %4025 = vmatprep.subr.mxu0 0.0
    %4026 = vmatpush1.msra.mxu0 0.0
    %4027 = vmatprep.subr.mxu0 0.0
    %4028 = vmatpush1.msra.mxu0 0.0
    %4029 = vmatprep.subr.mxu0 0.0
    %4030 = vmatpush1.msra.mxu0 0.0
    %4031 = vmatprep.subr.mxu0 0.0
    %4032 = vmatpush1.msra.mxu0 0.0
    %4033 = vmatprep.subr.mxu0 0.0
    %4034 = vmatpush1.msra.mxu0 0.0
    %4035 = vmatprep.subr.mxu0 0.0
    %4036 = vmatpush1.msra.mxu0 0.0
    %4037 = vmatprep.subr.mxu0 0.0
    %4038 = vmatpush1.msra.mxu0 0.0
    %4039 = vmatprep.subr.mxu0 0.0
    %4040 = vmatpush1.msra.mxu0 0.0
    %4041 = vmatprep.subr.mxu0 0.0
    %4042 = vmatpush1.msra.mxu0 0.0
    %4043 = vmatprep.subr.mxu0 0.0
    %4044 = vmatpush1.msra.mxu0 0.0
    %4045 = vmatprep.subr.mxu0 0.0
    %4046 = vmatpush1.msra.mxu0 0.0
    %4047 = vmatprep.subr.mxu0 0.0
    %4048 = vmatpush1.msra.mxu0 0.0
    %4049 = vmatprep.subr.mxu0 0.0
    %4050 = vmatpush1.msra.mxu0 0.0
    %4051 = vmatprep.subr.mxu0 0.0
    %4052 = vmatpush1.msra.mxu0 0.0
    %4053 = vmatprep.subr.mxu0 0.0
    %4054 = vmatpush1.msra.mxu0 0.0
    %4055 = vmatprep.subr.mxu0 0.0
    %4056 = vmatpush1.msra.mxu0 0.0
    %4057 = vmatprep.subr.mxu0 0.0
    %4058 = vmatpush1.msra.mxu0 0.0
    %4059 = vmatprep.subr.mxu0 0.0
    %4060 = vmatpush1.msra.mxu0 0.0
    %4061 = vmatprep.subr.mxu0 0.0
    %4062 = vmatpush1.msra.mxu0 0.0
    %4063 = vmatprep.subr.mxu0 0.0
    %4064 = vmatpush1.msra.mxu0 0.0
    %4065 = vmatprep.subr.mxu0 0.0
    %4066 = vmatpush1.msra.mxu0 0.0
    %4067 = vmatprep.subr.mxu0 0.0
    %4068 = vmatpush1.msra.mxu0 0.0
    %4069 = vmatprep.mubr.f32.mxu0 0.0
    %4070 = vmatmul.mubr.f32.gmra.mrb[0].mxu0 %v4000
    %v4071 = vpop.f32.mrb[0].mxu0
    %v4072 = vadd.f32 %v3991, %v4071
    %v4073 = vpop.f32.mrb[0].mxu0
    %4074 = vmatprep.mubr.f32.mxu0 0.0
    %4075 = vmatmul.mubr.f32.gmra.mrb[0].mxu0 %v4003
    %v4076 = vpop.f32.mrb[0].mxu0
    %v4077 = vadd.f32 %v3996, %v4076
    %v4078 = vpop.f32.mrb[0].mxu0
    %4079 = vdwg.mxu0
    %s4080 = scalar_lea.vmem [#allocation19], 32
    %v4081 = vld [vmem:[%s4080] sm:$0xff]
    %v4082 = vld [vmem:[%s4080 + $0x8] sm:$0xff]
    %v4084 = vsel %vm266, %v3676, 0
    %v4087 = vsel %vm266, %v3677, 0
    %4089 = vmatprep.subr.mxu0 0.0
    %4090 = vmatpush1.msra.mxu0 %v4081
    %4091 = vmatprep.subr.mxu0 0.0
    %4092 = vmatpush1.msra.mxu0 %v4082
    %4093 = vmatprep.subr.mxu0 0.0
    %4094 = vmatpush1.msra.mxu0 0.0
    %4095 = vmatprep.subr.mxu0 0.0
    %4096 = vmatpush1.msra.mxu0 0.0
    %4097 = vmatprep.subr.mxu0 0.0
    %4098 = vmatpush1.msra.mxu0 0.0
    %4099 = vmatprep.subr.mxu0 0.0
    %4100 = vmatpush1.msra.mxu0 0.0
    %4101 = vmatprep.subr.mxu0 0.0
    %4102 = vmatpush1.msra.mxu0 0.0
    %4103 = vmatprep.subr.mxu0 0.0
    %4104 = vmatpush1.msra.mxu0 0.0
    %4105 = vmatprep.subr.mxu0 0.0
    %4106 = vmatpush1.msra.mxu0 0.0
    %4107 = vmatprep.subr.mxu0 0.0
    %4108 = vmatpush1.msra.mxu0 0.0
    %4109 = vmatprep.subr.mxu0 0.0
    %4110 = vmatpush1.msra.mxu0 0.0
    %4111 = vmatprep.subr.mxu0 0.0
    %4112 = vmatpush1.msra.mxu0 0.0
    %4113 = vmatprep.subr.mxu0 0.0
    %4114 = vmatpush1.msra.mxu0 0.0
    %4115 = vmatprep.subr.mxu0 0.0
    %4116 = vmatpush1.msra.mxu0 0.0
    %4117 = vmatprep.subr.mxu0 0.0
    %4118 = vmatpush1.msra.mxu0 0.0
    %4119 = vmatprep.subr.mxu0 0.0
    %4120 = vmatpush1.msra.mxu0 0.0
    %4121 = vmatprep.subr.mxu0 0.0
    %4122 = vmatpush1.msra.mxu0 0.0
    %4123 = vmatprep.subr.mxu0 0.0
    %4124 = vmatpush1.msra.mxu0 0.0
    %4125 = vmatprep.subr.mxu0 0.0
    %4126 = vmatpush1.msra.mxu0 0.0
    %4127 = vmatprep.subr.mxu0 0.0
    %4128 = vmatpush1.msra.mxu0 0.0
    %4129 = vmatprep.subr.mxu0 0.0
    %4130 = vmatpush1.msra.mxu0 0.0
    %4131 = vmatprep.subr.mxu0 0.0
    %4132 = vmatpush1.msra.mxu0 0.0
    %4133 = vmatprep.subr.mxu0 0.0
    %4134 = vmatpush1.msra.mxu0 0.0
    %4135 = vmatprep.subr.mxu0 0.0
    %4136 = vmatpush1.msra.mxu0 0.0
    %4137 = vmatprep.subr.mxu0 0.0
    %4138 = vmatpush1.msra.mxu0 0.0
    %4139 = vmatprep.subr.mxu0 0.0
    %4140 = vmatpush1.msra.mxu0 0.0
    %4141 = vmatprep.subr.mxu0 0.0
    %4142 = vmatpush1.msra.mxu0 0.0
    %4143 = vmatprep.subr.mxu0 0.0
    %4144 = vmatpush1.msra.mxu0 0.0
    %4145 = vmatprep.subr.mxu0 0.0
    %4146 = vmatpush1.msra.mxu0 0.0
    %4147 = vmatprep.subr.mxu0 0.0
    %4148 = vmatpush1.msra.mxu0 0.0
    %4149 = vmatprep.subr.mxu0 0.0
    %4150 = vmatpush1.msra.mxu0 0.0
    %4151 = vmatprep.subr.mxu0 0.0
    %4152 = vmatpush1.msra.mxu0 0.0
    %4153 = vmatprep.mubr.f32.mxu0 0.0
    %4154 = vmatmul.mubr.f32.gmra.mrb[0].mxu0 %v4084
    %v4155 = vpop.f32.mrb[0].mxu0
    %v4156 = vadd.f32 0.0, %v4155
    %v4157 = vpop.f32.mrb[0].mxu0
    %4158 = vmatprep.mubr.f32.mxu0 0.0
    %4159 = vmatmul.mubr.f32.gmra.mrb[0].mxu0 %v4087
    %v4160 = vpop.f32.mrb[0].mxu0
    %v4161 = vadd.f32 0.0, %v4160
    %v4162 = vpop.f32.mrb[0].mxu0
    %4163 = vdwg.mxu0
    %v4164 = vadd.f32 %v4072, %v4156
    %v4165 = vadd.f32 %v4077, %v4161
    %v4166 = vadd.f32 %v3911, %v4164
    %v4167 = vadd.f32 %v3912, %v4165
    %v4168 = vld [vmem:[#allocation23] sm:$0x1]
    %v4170 = vlaneseq
    %v4171 = vshrl.u32 %v4170, 7
    %v4172 = vsub.s32 0, %v4171
    %v4173 = vrot.slane %v4168, %v4172
    %v4175 = vadd.f32 %v4166, %v4173
    %v4176 = vadd.f32 %v4167, %v4173
    %v4177 = vtanh.pop %v4175
    %v4178 = vtanh.pop %v4176
    %v4179 = vmul.f32 %v3519, %v2190
    %v4180 = vmul.f32 %v3521, %v2191
    %v4181 = vsub.f32 1.0, %v3519
    %v4182 = vsub.f32 1.0, %v3521
    %v4183 = vmul.f32 %v4181, %v4177
    %v4184 = vmul.f32 %v4182, %v4178
    %v4185 = vadd.f32 %v4179, %v4183
    %v4186 = vadd.f32 %v4180, %v4184
    %s4187 = scalar_lea.vmem %s24, 16
    %4188 = vst.msk [vmem:[%s4187] sm:$0xff] %vm266, %v4185
    %4189 = vst.msk [vmem:[%s4187 + $0x8] sm:$0xff] %vm266, %v4186
    %v4190 = vld [vmem:[%s21] sm:$0x1]
    %v4192 = vlaneseq
    %v4193 = vshrl.u32 %v4192, 7
    %v4194 = vsub.s32 0, %v4193
    %v4195 = vrot.slane %v4190, %v4194
    %v4197 = vmul.f32 %v4185, %v4195
    %v4198 = vmul.f32 %v4186, %v4195
    %v4199 = vsel %vm266, %v4197, 0.0
    %4200 = vadd.xlane.f32.xlu0 %v4199
    %v4201 = vpop.xlane.xlu0 %4200
    %v4202 = vsel %vm266, %v4198, 0.0
    %4203 = vadd.xlane.f32.xlu0 %v4202
    %v4204 = vpop.xlane.xlu0 %4203
    %v4205 = vld [vmem:[#allocation2] sm:$0x1]
    %v4207 = vlaneseq
    %v4208 = vshrl.u32 %v4207, 7
    %v4209 = vsub.s32 0, %v4208
    %v4210 = vrot.slane %v4205, %v4209
    %v4212 = vadd.f32 %v4201, %v4210
    %v4213 = vadd.f32 %v4204, %v4210
    %vm4214 = vcmask 7168
    %4215 = vst.msk [vmem:[%s23] sm:$0xff] %vm4214, %v4212
    %4216 = vst.msk [vmem:[%s23 + $0x8] sm:$0xff] %vm4214, %v4213
    // Predicated region
    $region150: #{decoder_forward.1} parent=1 // pred_check
      _
    $region151: #{decoder_forward.1} parent=1 // pred_check_branch
      %4218 = sbr.rel (0) target = $region153
    $region152: #{decoder_forward.1} parent=1 // pred_region
      _
    $region153: #{decoder_forward.1} parent=1 // pred_fallthru
      _
    // Predicated region
    $region154: #{decoder_forward.1} parent=1 // pred_check
      _
    $region155: #{decoder_forward.1} parent=1 // pred_check_branch
      %4220 = sbr.rel (0) target = $region157
    $region156: #{decoder_forward.1} parent=1 // pred_region
      _
    $region157: #{decoder_forward.1} parent=1 // pred_fallthru
      _
    // Predicated region
    $region158: #{decoder_forward.1} parent=1 // pred_check
      _
    $region159: #{decoder_forward.1} parent=1 // pred_check_branch
      %4222 = sbr.rel (0) target = $region161
    $region160: #{decoder_forward.1} parent=1 // pred_region
      _
    $region161: #{decoder_forward.1} parent=1 // pred_fallthru
      _
    // Predicated region
    $region162: #{decoder_forward.1} parent=1 // pred_check
      _
    $region163: #{decoder_forward.1} parent=1 // pred_check_branch
      %4224 = sbr.rel (0) target = $region165
    $region164: #{decoder_forward.1} parent=1 // pred_region
      _
    $region165: #{decoder_forward.1} parent=1 // pred_fallthru
      _
    %4225 = vsyncpa [#allocation4], 1
    %4226 = vsyncpa [#allocation6], 1
    %4227 = vsyncpa [#allocation9], 1
    %4228 = vsyncpa [#allocation12], 1
    %4229 = vsyncpa [#allocation15], 1
    %4230 = vsyncpa [#allocation18], 1
    %4231 = vsyncpa [#allocation21], 1
    %4232 = vsyncpa [#allocation24], 1

</llo_original>
